<compile_context>
chip_gen: v6e
topology: v6e:2x2x1
jax: 0.10.0
libtpu: 0.0.40
codegen_flags: <defaults>
</compile_context>

<pallas_src>
import functools

import jax
import jax.numpy as jnp
from jax.experimental import pallas as pl
from jax.experimental.pallas import tpu as pltpu


# ---------------------------------------------------------------------------
# Fused kernel: in-proj + multi-head attention + out-proj for one Lq tile
# (all batch elements, all heads).
# ---------------------------------------------------------------------------
def _fused_mha_kernel(q_ref, k_ref, v_ref, mask_ref,
                      w_in_ref, b_in_ref, w_o_ref, b_o_ref,
                      o_ref, *, nhead, batch):
    # q_ref:    (lq_blk, B, E)   Lq tile of pos-embedded queries
    # k_ref:    (Lk, B, E)       pos-embedded keys   (VMEM resident)
    # v_ref:    (Lk, B, E)       values              (VMEM resident)
    # mask_ref: (B, Lk)          additive key-padding mask
    # w_in_ref: (3*nhead, E, hd) head-major [q|k|v] in-proj (q pre-scaled)
    # b_in_ref: (3*nhead, 1, hd) head-major in-proj biases  (q pre-scaled)
    # w_o_ref:  (nhead, hd, E)   head-major out-proj
    # b_o_ref:  (1, E)
    # o_ref:    (lq_blk, B, E)
    lq, _, E = o_ref.shape

    q_all = q_ref[...]
    k_all = k_ref[...]
    v_all = v_ref[...]
    m_all = mask_ref[...]
    b_out = b_o_ref[...]

    outs = []
    for b in range(batch):                       # static unroll, B is small
        q_b = q_all[:, b, :]                     # (lq, E)
        k_b = k_all[:, b, :]                     # (Lk, E)
        v_b = v_all[:, b, :]                     # (Lk, E)
        m_b = m_all[b:b + 1, :]                  # (1, Lk) broadcast over rows

        acc = jnp.zeros((lq, E), jnp.float32)
        for h in range(nhead):                   # static unroll over heads
            qh = (jnp.dot(q_b, w_in_ref[h],
                          preferred_element_type=jnp.float32)
                  + b_in_ref[h])                 # (lq, hd), scale pre-folded
            kh = (jnp.dot(k_b, w_in_ref[nhead + h],
                          preferred_element_type=jnp.float32)
                  + b_in_ref[nhead + h])         # (Lk, hd)
            vh = (jnp.dot(v_b, w_in_ref[2 * nhead + h],
                          preferred_element_type=jnp.float32)
                  + b_in_ref[2 * nhead + h])     # (Lk, hd)

            s = jnp.dot(qh, kh.T, preferred_element_type=jnp.float32) + m_b
            s = s - jnp.max(s, axis=-1, keepdims=True)
            p = jnp.exp(s)
            p = p * pl.reciprocal(jnp.sum(p, axis=-1, keepdims=True),
                                  approx=False)  # exact: restores 1e-4 parity

            hv = jnp.dot(p, vh, preferred_element_type=jnp.float32)   # (lq, hd)
            # per-head out-projection accumulation (no head concat)
            acc = acc + jnp.dot(hv, w_o_ref[h],
                                preferred_element_type=jnp.float32)   # (lq, E)
        outs.append(acc + b_out)

    o_ref[...] = jnp.stack(outs, axis=1)         # (lq, B, E), single dense store


# ---------------------------------------------------------------------------
# Host-side packing helpers + wrapper
# ---------------------------------------------------------------------------
def _split_heads_t(w, nhead):
    """PyTorch (out,in) weight (E,E) -> head-major right-multiply (nhead, E, hd)."""
    E = w.shape[0]
    hd = E // nhead
    return jnp.transpose(w.reshape(nhead, hd, E), (0, 2, 1))


def _pick_lq_block(Lq, max_block=512):
    """Prefer >=2 parallel grid steps (v7x has 2 TCs) with blocks <= max_block."""
    if Lq <= 2:
        return max(Lq, 1)
    target = min(max_block, (Lq + 1) // 2)
    for cand in range(target, max(target // 2, 0), -1):
        if Lq % cand == 0:
            return cand
    return Lq                                    # no nice divisor: one big step


def query_fusion_forward(params, tgt, memory, memory_key_padding_mask=None,
                         pos=None, query_pos=None, nhead=4, lq_block=None):
    """QueryFusionModule.forward (dropout=0, eval mode).

    tgt: (Lq, B, E)   memory: (Lk, B, E)   (batch_first=False, like the module)
    memory_key_padding_mask: (B, Lk) bool, True = masked out (or None)
    pos: (Lk, B, E) or None, query_pos: (Lq, B, E) or None
    returns tgt2: (Lq, B, E)
    """
    Lq, B, E = tgt.shape
    Lk = memory.shape[0]
    hd = E // nhead
    scale = 1.0 / float(hd) ** 0.5

    # positional embeddings; layout stays (L, B, E) — no HBM transposes.
    q_in = (tgt if query_pos is None else tgt + query_pos).astype(jnp.float32)
    k_in = (memory if pos is None else memory + pos).astype(jnp.float32)
    v_in = memory.astype(jnp.float32)

    # additive key-padding mask.
    # TODO(synk): fully-masked key rows give a uniform softmax here instead of
    # PyTorch's NaN behavior for an all-masked row.
    if memory_key_padding_mask is None:
        mask_add = jnp.zeros((B, Lk), jnp.float32)
    else:
        mask_add = jnp.where(memory_key_padding_mask, -1e30, 0.0)
        mask_add = mask_add.astype(jnp.float32).reshape(B, Lk)

    # Head-major weight packing (once per call, outside the kernel):
    #   * in-proj (3*nhead, E, hd): per-head q/k/v via full-E contraction,
    #     1/sqrt(hd) folded into the q weights/bias.
    #   * out-proj (nhead, hd, E): per-head accumulation, no concat.
    w_in = jnp.concatenate([
        _split_heads_t(params["w_q"] * scale, nhead),
        _split_heads_t(params["w_k"], nhead),
        _split_heads_t(params["w_v"], nhead),
    ], axis=0).astype(jnp.float32)                               # (3*nhead, E, hd)
    b_in = jnp.concatenate([
        (params["b_q"] * scale).reshape(nhead, 1, hd),
        params["b_k"].reshape(nhead, 1, hd),
        params["b_v"].reshape(nhead, 1, hd),
    ], axis=0).astype(jnp.float32)                               # (3*nhead, 1, hd)
    w_o = params["w_o"].T.reshape(nhead, hd, E).astype(jnp.float32)  # (nhead, hd, E)
    b_o = params["b_o"].reshape(1, E).astype(jnp.float32)

    if lq_block is None:
        lq_block = _pick_lq_block(Lq)
    grid = (Lq // lq_block,)

    kernel = functools.partial(_fused_mha_kernel, nhead=nhead, batch=B)

    out = pl.pallas_call(
        kernel,
        out_shape=jax.ShapeDtypeStruct((Lq, B, E), jnp.float32),
        grid=grid,
        in_specs=[
            pl.BlockSpec((lq_block, B, E), lambda i: (i, 0, 0)),     # q tile
            pl.BlockSpec((Lk, B, E), lambda i: (0, 0, 0)),           # k (resident)
            pl.BlockSpec((Lk, B, E), lambda i: (0, 0, 0)),           # v (resident)
            pl.BlockSpec((B, Lk), lambda i: (0, 0)),                 # additive mask
            pl.BlockSpec((3 * nhead, E, hd), lambda i: (0, 0, 0)),   # in-proj W
            pl.BlockSpec((3 * nhead, 1, hd), lambda i: (0, 0, 0)),   # in-proj b
            pl.BlockSpec((nhead, hd, E), lambda i: (0, 0, 0)),       # out-proj W
            pl.BlockSpec((1, E), lambda i: (0, 0)),                  # out-proj b
        ],
        out_specs=pl.BlockSpec((lq_block, B, E), lambda i: (i, 0, 0)),
        compiler_params=pltpu.CompilerParams(
            dimension_semantics=("parallel",),
            vmem_limit_bytes=32 * 1024 * 1024),
    )(q_in, k_in, v_in, mask_add, w_in, b_in, w_o, b_o)

    return out                                                   # (Lq, B, E)


# ---------------------------------------------------------------------------
# pure-JAX reference for sanity checking
# ---------------------------------------------------------------------------
def _reference(params, tgt, memory, mask, pos, query_pos, nhead):
    Lq, B, E = tgt.shape
    Lk = memory.shape[0]
    hd = E // nhead
    q_in = tgt if query_pos is None else tgt + query_pos
    k_in = memory if pos is None else memory + pos
    q = q_in @ params["w_q"].T + params["b_q"]
    k = k_in @ params["w_k"].T + params["b_k"]
    v = memory @ params["w_v"].T + params["b_v"]
    qh = q.reshape(Lq, B, nhead, hd).transpose(1, 2, 0, 3)
    kh = k.reshape(Lk, B, nhead, hd).transpose(1, 2, 0, 3)
    vh = v.reshape(Lk, B, nhead, hd).transpose(1, 2, 0, 3)
    s = jnp.einsum("bhqd,bhkd->bhqk", qh, kh) / jnp.sqrt(float(hd))
    if mask is not None:
        s = jnp.where(mask[:, None, None, :], -1e30, s)
    p = jax.nn.softmax(s, axis=-1)
    o = jnp.einsum("bhqk,bhkd->bhqd", p, vh).transpose(2, 0, 1, 3).reshape(Lq, B, E)
    return o @ params["w_o"].T + params["b_o"]


if __name__ == "__main__":
    d_model, nhead = 32, 4
    Lq, Lk, B = 8, 16, 2

    key = jax.random.PRNGKey(0)
    ks = jax.random.split(key, 12)
    sc = 0.1
    params = {
        "w_q": sc * jax.random.normal(ks[0], (d_model, d_model), jnp.float32),
        "w_k": sc * jax.random.normal(ks[1], (d_model, d_model), jnp.float32),
        "w_v": sc * jax.random.normal(ks[2], (d_model, d_model), jnp.float32),
        "b_q": sc * jax.random.normal(ks[3], (d_model,), jnp.float32),
        "b_k": sc * jax.random.normal(ks[4], (d_model,), jnp.float32),
        "b_v": sc * jax.random.normal(ks[5], (d_model,), jnp.float32),
        "w_o": sc * jax.random.normal(ks[6], (d_model, d_model), jnp.float32),
        "b_o": sc * jax.random.normal(ks[7], (d_model,), jnp.float32),
    }

    tgt = jax.random.normal(ks[8], (Lq, B, d_model), jnp.float32)
    memory = jax.random.normal(ks[9], (Lk, B, d_model), jnp.float32)
    query_pos = jax.random.normal(ks[10], (Lq, B, d_model), jnp.float32)
    pos = jax.random.normal(ks[11], (Lk, B, d_model), jnp.float32)
    # mask out the last 3 memory positions of batch element 1
    mask = jnp.zeros((B, Lk), bool).at[1, -3:].set(True)

    out = query_fusion_forward(params, tgt, memory, mask, pos, query_pos,
                               nhead=nhead)
    out = jax.block_until_ready(out)

    ref = _reference(params, tgt, memory, mask, pos, query_pos, nhead)
    assert out.shape == (Lq, B, d_model)
    assert jnp.max(jnp.abs(out - ref)) < 1e-4, "mismatch vs reference"

    print("KERNEL_OK")
</pallas_src>

<mosaic_0001>
module attributes {stable_mosaic.version = 11 : i64} {
  func.func @_fused_mha_kernel(%arg0: i32, %arg1: memref<4x2x32xf32, #tpu.memory_space<vmem>>, %arg2: memref<16x2x32xf32, #tpu.memory_space<vmem>>, %arg3: memref<16x2x32xf32, #tpu.memory_space<vmem>>, %arg4: memref<2x16xf32, #tpu.memory_space<vmem>>, %arg5: memref<12x32x8xf32, #tpu.memory_space<vmem>>, %arg6: memref<12x1x8xf32, #tpu.memory_space<vmem>>, %arg7: memref<4x8x32xf32, #tpu.memory_space<vmem>>, %arg8: memref<1x32xf32, #tpu.memory_space<vmem>>, %arg9: memref<4x2x32xf32, #tpu.memory_space<vmem>>) attributes {dimension_semantics = [#tpu.dimension_semantics<parallel>], iteration_bounds = array<i64: 2>, scalar_prefetch = 0 : i64, scratch_operands = 0 : i64, tpu.core_type = #tpu.core_type<tc>, window_params = [{transform_indices = @transform_0, window_bounds = array<i64: 4, 2, 32>}, {pipeline_mode = #tpu.pipeline_mode<synchronous>, transform_indices = @transform_1, window_bounds = array<i64: 16, 2, 32>}, {pipeline_mode = #tpu.pipeline_mode<synchronous>, transform_indices = @transform_2, window_bounds = array<i64: 16, 2, 32>}, {pipeline_mode = #tpu.pipeline_mode<synchronous>, transform_indices = @transform_3, window_bounds = array<i64: 2, 16>}, {pipeline_mode = #tpu.pipeline_mode<synchronous>, transform_indices = @transform_4, window_bounds = array<i64: 12, 32, 8>}, {pipeline_mode = #tpu.pipeline_mode<synchronous>, transform_indices = @transform_5, window_bounds = array<i64: 12, 1, 8>}, {pipeline_mode = #tpu.pipeline_mode<synchronous>, transform_indices = @transform_6, window_bounds = array<i64: 4, 8, 32>}, {pipeline_mode = #tpu.pipeline_mode<synchronous>, transform_indices = @transform_7, window_bounds = array<i64: 1, 32>}, {transform_indices = @transform_8, window_bounds = array<i64: 4, 2, 32>}]} {
    %c0 = arith.constant 0 : index
    %c0_0 = arith.constant 0 : index
    %c0_1 = arith.constant 0 : index
    %0 = vector.load %arg1[%c0, %c0_0, %c0_1] : memref<4x2x32xf32, #tpu.memory_space<vmem>>, vector<4x2x32xf32>
    %c0_2 = arith.constant 0 : index
    %c0_3 = arith.constant 0 : index
    %c0_4 = arith.constant 0 : index
    %1 = vector.load %arg2[%c0_2, %c0_3, %c0_4] : memref<16x2x32xf32, #tpu.memory_space<vmem>>, vector<16x2x32xf32>
    %c0_5 = arith.constant 0 : index
    %c0_6 = arith.constant 0 : index
    %c0_7 = arith.constant 0 : index
    %2 = vector.load %arg3[%c0_5, %c0_6, %c0_7] : memref<16x2x32xf32, #tpu.memory_space<vmem>>, vector<16x2x32xf32>
    %c0_8 = arith.constant 0 : index
    %c0_9 = arith.constant 0 : index
    %3 = vector.load %arg4[%c0_8, %c0_9] : memref<2x16xf32, #tpu.memory_space<vmem>>, vector<2x16xf32>
    %c0_10 = arith.constant 0 : index
    %c0_11 = arith.constant 0 : index
    %4 = vector.load %arg8[%c0_10, %c0_11] : memref<1x32xf32, #tpu.memory_space<vmem>>, vector<1x32xf32>
    %5 = vector.extract_strided_slice %0 {offsets = [0, 0, 0], sizes = [4, 1, 32], strides = [1, 1, 1]} : vector<4x2x32xf32> to vector<4x1x32xf32>
    %6 = vector.shape_cast %5 : vector<4x1x32xf32> to vector<4x32xf32>
    %7 = vector.extract_strided_slice %1 {offsets = [0, 0, 0], sizes = [16, 1, 32], strides = [1, 1, 1]} : vector<16x2x32xf32> to vector<16x1x32xf32>
    %8 = vector.shape_cast %7 : vector<16x1x32xf32> to vector<16x32xf32>
    %9 = vector.extract_strided_slice %2 {offsets = [0, 0, 0], sizes = [16, 1, 32], strides = [1, 1, 1]} : vector<16x2x32xf32> to vector<16x1x32xf32>
    %10 = vector.shape_cast %9 : vector<16x1x32xf32> to vector<16x32xf32>
    %11 = vector.extract_strided_slice %3 {offsets = [0, 0], sizes = [1, 16], strides = [1, 1]} : vector<2x16xf32> to vector<1x16xf32>
    %cst = arith.constant 0.000000e+00 : f32
    %12 = vector.broadcast %cst : f32 to vector<4x32xf32>
    %c0_12 = arith.constant 0 : index
    %c0_13 = arith.constant 0 : index
    %c0_14 = arith.constant 0 : index
    %13 = vector.load %arg5[%c0_12, %c0_13, %c0_14] : memref<12x32x8xf32, #tpu.memory_space<vmem>>, vector<1x32x8xf32>
    %14 = vector.shape_cast %13 : vector<1x32x8xf32> to vector<32x8xf32>
    %cst_15 = arith.constant dense<0.000000e+00> : vector<4x8xf32>
    %15 = tpu.matmul %6, %14, %cst_15 {dimension_numbers = #tpu.dot_dimension_numbers<[1], [0], [0], [1], [0, 0, 1, 1], [], []>} : vector<4x32xf32>, vector<32x8xf32>, vector<4x8xf32> -> vector<4x8xf32>
    %c0_16 = arith.constant 0 : index
    %c0_17 = arith.constant 0 : index
    %c0_18 = arith.constant 0 : index
    %16 = vector.load %arg6[%c0_16, %c0_17, %c0_18] : memref<12x1x8xf32, #tpu.memory_space<vmem>>, vector<1x1x8xf32>
    %17 = vector.shape_cast %16 : vector<1x1x8xf32> to vector<1x8xf32>
    %18 = vector.broadcast %17 : vector<1x8xf32> to vector<4x8xf32>
    %19 = arith.addf %15, %18 : vector<4x8xf32>
    %c4 = arith.constant 4 : index
    %c0_19 = arith.constant 0 : index
    %c0_20 = arith.constant 0 : index
    %20 = vector.load %arg5[%c4, %c0_19, %c0_20] : memref<12x32x8xf32, #tpu.memory_space<vmem>>, vector<1x32x8xf32>
    %21 = vector.shape_cast %20 : vector<1x32x8xf32> to vector<32x8xf32>
    %cst_21 = arith.constant dense<0.000000e+00> : vector<16x8xf32>
    %22 = tpu.matmul %8, %21, %cst_21 {dimension_numbers = #tpu.dot_dimension_numbers<[1], [0], [0], [1], [0, 0, 1, 1], [], []>} : vector<16x32xf32>, vector<32x8xf32>, vector<16x8xf32> -> vector<16x8xf32>
    %c4_22 = arith.constant 4 : index
    %c0_23 = arith.constant 0 : index
    %c0_24 = arith.constant 0 : index
    %23 = vector.load %arg6[%c4_22, %c0_23, %c0_24] : memref<12x1x8xf32, #tpu.memory_space<vmem>>, vector<1x1x8xf32>
    %24 = vector.shape_cast %23 : vector<1x1x8xf32> to vector<1x8xf32>
    %25 = vector.broadcast %24 : vector<1x8xf32> to vector<16x8xf32>
    %26 = arith.addf %22, %25 : vector<16x8xf32>
    %c8 = arith.constant 8 : index
    %c0_25 = arith.constant 0 : index
    %c0_26 = arith.constant 0 : index
    %27 = vector.load %arg5[%c8, %c0_25, %c0_26] : memref<12x32x8xf32, #tpu.memory_space<vmem>>, vector<1x32x8xf32>
    %28 = vector.shape_cast %27 : vector<1x32x8xf32> to vector<32x8xf32>
    %cst_27 = arith.constant dense<0.000000e+00> : vector<16x8xf32>
    %29 = tpu.matmul %10, %28, %cst_27 {dimension_numbers = #tpu.dot_dimension_numbers<[1], [0], [0], [1], [0, 0, 1, 1], [], []>} : vector<16x32xf32>, vector<32x8xf32>, vector<16x8xf32> -> vector<16x8xf32>
    %c8_28 = arith.constant 8 : index
    %c0_29 = arith.constant 0 : index
    %c0_30 = arith.constant 0 : index
    %30 = vector.load %arg6[%c8_28, %c0_29, %c0_30] : memref<12x1x8xf32, #tpu.memory_space<vmem>>, vector<1x1x8xf32>
    %31 = vector.shape_cast %30 : vector<1x1x8xf32> to vector<1x8xf32>
    %32 = vector.broadcast %31 : vector<1x8xf32> to vector<16x8xf32>
    %33 = arith.addf %29, %32 : vector<16x8xf32>
    %34 = tpu.transpose %26, [1, 0] : vector<16x8xf32> -> vector<8x16xf32>
    %cst_31 = arith.constant dense<0.000000e+00> : vector<4x16xf32>
    %35 = tpu.matmul %19, %34, %cst_31 {dimension_numbers = #tpu.dot_dimension_numbers<[1], [0], [0], [1], [0, 0, 1, 1], [], []>} : vector<4x8xf32>, vector<8x16xf32>, vector<4x16xf32> -> vector<4x16xf32>
    %36 = vector.broadcast %11 : vector<1x16xf32> to vector<4x16xf32>
    %37 = arith.addf %35, %36 : vector<4x16xf32>
    %cst_32 = arith.constant dense<0xFF800000> : vector<4xf32>
    %38 = vector.multi_reduction <maximumf>, %37, %cst_32 [1] : vector<4x16xf32> to vector<4xf32>
    %39 = vector.shape_cast %38 : vector<4xf32> to vector<4x1xf32>
    %40 = vector.broadcast %39 : vector<4x1xf32> to vector<4x16xf32>
    %41 = arith.subf %37, %40 : vector<4x16xf32>
    %42 = math.exp %41 : vector<4x16xf32>
    %cst_33 = arith.constant dense<0.000000e+00> : vector<4xf32>
    %43 = vector.multi_reduction <add>, %42, %cst_33 [1] : vector<4x16xf32> to vector<4xf32>
    %44 = vector.shape_cast %43 : vector<4xf32> to vector<4x1xf32>
    %45 = tpu.reciprocal %44 : vector<4x1xf32> -> vector<4x1xf32>
    %46 = vector.broadcast %45 : vector<4x1xf32> to vector<4x16xf32>
    %47 = arith.mulf %42, %46 : vector<4x16xf32>
    %cst_34 = arith.constant dense<0.000000e+00> : vector<4x8xf32>
    %48 = tpu.matmul %47, %33, %cst_34 {dimension_numbers = #tpu.dot_dimension_numbers<[1], [0], [0], [1], [0, 0, 1, 1], [], []>} : vector<4x16xf32>, vector<16x8xf32>, vector<4x8xf32> -> vector<4x8xf32>
    %c0_35 = arith.constant 0 : index
    %c0_36 = arith.constant 0 : index
    %c0_37 = arith.constant 0 : index
    %49 = vector.load %arg7[%c0_35, %c0_36, %c0_37] : memref<4x8x32xf32, #tpu.memory_space<vmem>>, vector<1x8x32xf32>
    %50 = vector.shape_cast %49 : vector<1x8x32xf32> to vector<8x32xf32>
    %cst_38 = arith.constant dense<0.000000e+00> : vector<4x32xf32>
    %51 = tpu.matmul %48, %50, %cst_38 {dimension_numbers = #tpu.dot_dimension_numbers<[1], [0], [0], [1], [0, 0, 1, 1], [], []>} : vector<4x8xf32>, vector<8x32xf32>, vector<4x32xf32> -> vector<4x32xf32>
    %52 = arith.addf %12, %51 : vector<4x32xf32>
    %c1 = arith.constant 1 : index
    %c0_39 = arith.constant 0 : index
    %c0_40 = arith.constant 0 : index
    %53 = vector.load %arg5[%c1, %c0_39, %c0_40] : memref<12x32x8xf32, #tpu.memory_space<vmem>>, vector<1x32x8xf32>
    %54 = vector.shape_cast %53 : vector<1x32x8xf32> to vector<32x8xf32>
    %cst_41 = arith.constant dense<0.000000e+00> : vector<4x8xf32>
    %55 = tpu.matmul %6, %54, %cst_41 {dimension_numbers = #tpu.dot_dimension_numbers<[1], [0], [0], [1], [0, 0, 1, 1], [], []>} : vector<4x32xf32>, vector<32x8xf32>, vector<4x8xf32> -> vector<4x8xf32>
    %c1_42 = arith.constant 1 : index
    %c0_43 = arith.constant 0 : index
    %c0_44 = arith.constant 0 : index
    %56 = vector.load %arg6[%c1_42, %c0_43, %c0_44] : memref<12x1x8xf32, #tpu.memory_space<vmem>>, vector<1x1x8xf32>
    %57 = vector.shape_cast %56 : vector<1x1x8xf32> to vector<1x8xf32>
    %58 = vector.broadcast %57 : vector<1x8xf32> to vector<4x8xf32>
    %59 = arith.addf %55, %58 : vector<4x8xf32>
    %c5 = arith.constant 5 : index
    %c0_45 = arith.constant 0 : index
    %c0_46 = arith.constant 0 : index
    %60 = vector.load %arg5[%c5, %c0_45, %c0_46] : memref<12x32x8xf32, #tpu.memory_space<vmem>>, vector<1x32x8xf32>
    %61 = vector.shape_cast %60 : vector<1x32x8xf32> to vector<32x8xf32>
    %cst_47 = arith.constant dense<0.000000e+00> : vector<16x8xf32>
    %62 = tpu.matmul %8, %61, %cst_47 {dimension_numbers = #tpu.dot_dimension_numbers<[1], [0], [0], [1], [0, 0, 1, 1], [], []>} : vector<16x32xf32>, vector<32x8xf32>, vector<16x8xf32> -> vector<16x8xf32>
    %c5_48 = arith.constant 5 : index
    %c0_49 = arith.constant 0 : index
    %c0_50 = arith.constant 0 : index
    %63 = vector.load %arg6[%c5_48, %c0_49, %c0_50] : memref<12x1x8xf32, #tpu.memory_space<vmem>>, vector<1x1x8xf32>
    %64 = vector.shape_cast %63 : vector<1x1x8xf32> to vector<1x8xf32>
    %65 = vector.broadcast %64 : vector<1x8xf32> to vector<16x8xf32>
    %66 = arith.addf %62, %65 : vector<16x8xf32>
    %c9 = arith.constant 9 : index
    %c0_51 = arith.constant 0 : index
    %c0_52 = arith.constant 0 : index
    %67 = vector.load %arg5[%c9, %c0_51, %c0_52] : memref<12x32x8xf32, #tpu.memory_space<vmem>>, vector<1x32x8xf32>
    %68 = vector.shape_cast %67 : vector<1x32x8xf32> to vector<32x8xf32>
    %cst_53 = arith.constant dense<0.000000e+00> : vector<16x8xf32>
    %69 = tpu.matmul %10, %68, %cst_53 {dimension_numbers = #tpu.dot_dimension_numbers<[1], [0], [0], [1], [0, 0, 1, 1], [], []>} : vector<16x32xf32>, vector<32x8xf32>, vector<16x8xf32> -> vector<16x8xf32>
    %c9_54 = arith.constant 9 : index
    %c0_55 = arith.constant 0 : index
    %c0_56 = arith.constant 0 : index
    %70 = vector.load %arg6[%c9_54, %c0_55, %c0_56] : memref<12x1x8xf32, #tpu.memory_space<vmem>>, vector<1x1x8xf32>
    %71 = vector.shape_cast %70 : vector<1x1x8xf32> to vector<1x8xf32>
    %72 = vector.broadcast %71 : vector<1x8xf32> to vector<16x8xf32>
    %73 = arith.addf %69, %72 : vector<16x8xf32>
    %74 = tpu.transpose %66, [1, 0] : vector<16x8xf32> -> vector<8x16xf32>
    %cst_57 = arith.constant dense<0.000000e+00> : vector<4x16xf32>
    %75 = tpu.matmul %59, %74, %cst_57 {dimension_numbers = #tpu.dot_dimension_numbers<[1], [0], [0], [1], [0, 0, 1, 1], [], []>} : vector<4x8xf32>, vector<8x16xf32>, vector<4x16xf32> -> vector<4x16xf32>
    %76 = vector.broadcast %11 : vector<1x16xf32> to vector<4x16xf32>
    %77 = arith.addf %75, %76 : vector<4x16xf32>
    %cst_58 = arith.constant dense<0xFF800000> : vector<4xf32>
    %78 = vector.multi_reduction <maximumf>, %77, %cst_58 [1] : vector<4x16xf32> to vector<4xf32>
    %79 = vector.shape_cast %78 : vector<4xf32> to vector<4x1xf32>
    %80 = vector.broadcast %79 : vector<4x1xf32> to vector<4x16xf32>
    %81 = arith.subf %77, %80 : vector<4x16xf32>
    %82 = math.exp %81 : vector<4x16xf32>
    %cst_59 = arith.constant dense<0.000000e+00> : vector<4xf32>
    %83 = vector.multi_reduction <add>, %82, %cst_59 [1] : vector<4x16xf32> to vector<4xf32>
    %84 = vector.shape_cast %83 : vector<4xf32> to vector<4x1xf32>
    %85 = tpu.reciprocal %84 : vector<4x1xf32> -> vector<4x1xf32>
    %86 = vector.broadcast %85 : vector<4x1xf32> to vector<4x16xf32>
    %87 = arith.mulf %82, %86 : vector<4x16xf32>
    %cst_60 = arith.constant dense<0.000000e+00> : vector<4x8xf32>
    %88 = tpu.matmul %87, %73, %cst_60 {dimension_numbers = #tpu.dot_dimension_numbers<[1], [0], [0], [1], [0, 0, 1, 1], [], []>} : vector<4x16xf32>, vector<16x8xf32>, vector<4x8xf32> -> vector<4x8xf32>
    %c1_61 = arith.constant 1 : index
    %c0_62 = arith.constant 0 : index
    %c0_63 = arith.constant 0 : index
    %89 = vector.load %arg7[%c1_61, %c0_62, %c0_63] : memref<4x8x32xf32, #tpu.memory_space<vmem>>, vector<1x8x32xf32>
    %90 = vector.shape_cast %89 : vector<1x8x32xf32> to vector<8x32xf32>
    %cst_64 = arith.constant dense<0.000000e+00> : vector<4x32xf32>
    %91 = tpu.matmul %88, %90, %cst_64 {dimension_numbers = #tpu.dot_dimension_numbers<[1], [0], [0], [1], [0, 0, 1, 1], [], []>} : vector<4x8xf32>, vector<8x32xf32>, vector<4x32xf32> -> vector<4x32xf32>
    %92 = arith.addf %52, %91 : vector<4x32xf32>
    %c2 = arith.constant 2 : index
    %c0_65 = arith.constant 0 : index
    %c0_66 = arith.constant 0 : index
    %93 = vector.load %arg5[%c2, %c0_65, %c0_66] : memref<12x32x8xf32, #tpu.memory_space<vmem>>, vector<1x32x8xf32>
    %94 = vector.shape_cast %93 : vector<1x32x8xf32> to vector<32x8xf32>
    %cst_67 = arith.constant dense<0.000000e+00> : vector<4x8xf32>
    %95 = tpu.matmul %6, %94, %cst_67 {dimension_numbers = #tpu.dot_dimension_numbers<[1], [0], [0], [1], [0, 0, 1, 1], [], []>} : vector<4x32xf32>, vector<32x8xf32>, vector<4x8xf32> -> vector<4x8xf32>
    %c2_68 = arith.constant 2 : index
    %c0_69 = arith.constant 0 : index
    %c0_70 = arith.constant 0 : index
    %96 = vector.load %arg6[%c2_68, %c0_69, %c0_70] : memref<12x1x8xf32, #tpu.memory_space<vmem>>, vector<1x1x8xf32>
    %97 = vector.shape_cast %96 : vector<1x1x8xf32> to vector<1x8xf32>
    %98 = vector.broadcast %97 : vector<1x8xf32> to vector<4x8xf32>
    %99 = arith.addf %95, %98 : vector<4x8xf32>
    %c6 = arith.constant 6 : index
    %c0_71 = arith.constant 0 : index
    %c0_72 = arith.constant 0 : index
    %100 = vector.load %arg5[%c6, %c0_71, %c0_72] : memref<12x32x8xf32, #tpu.memory_space<vmem>>, vector<1x32x8xf32>
    %101 = vector.shape_cast %100 : vector<1x32x8xf32> to vector<32x8xf32>
    %cst_73 = arith.constant dense<0.000000e+00> : vector<16x8xf32>
    %102 = tpu.matmul %8, %101, %cst_73 {dimension_numbers = #tpu.dot_dimension_numbers<[1], [0], [0], [1], [0, 0, 1, 1], [], []>} : vector<16x32xf32>, vector<32x8xf32>, vector<16x8xf32> -> vector<16x8xf32>
    %c6_74 = arith.constant 6 : index
    %c0_75 = arith.constant 0 : index
    %c0_76 = arith.constant 0 : index
    %103 = vector.load %arg6[%c6_74, %c0_75, %c0_76] : memref<12x1x8xf32, #tpu.memory_space<vmem>>, vector<1x1x8xf32>
    %104 = vector.shape_cast %103 : vector<1x1x8xf32> to vector<1x8xf32>
    %105 = vector.broadcast %104 : vector<1x8xf32> to vector<16x8xf32>
    %106 = arith.addf %102, %105 : vector<16x8xf32>
    %c10 = arith.constant 10 : index
    %c0_77 = arith.constant 0 : index
    %c0_78 = arith.constant 0 : index
    %107 = vector.load %arg5[%c10, %c0_77, %c0_78] : memref<12x32x8xf32, #tpu.memory_space<vmem>>, vector<1x32x8xf32>
    %108 = vector.shape_cast %107 : vector<1x32x8xf32> to vector<32x8xf32>
    %cst_79 = arith.constant dense<0.000000e+00> : vector<16x8xf32>
    %109 = tpu.matmul %10, %108, %cst_79 {dimension_numbers = #tpu.dot_dimension_numbers<[1], [0], [0], [1], [0, 0, 1, 1], [], []>} : vector<16x32xf32>, vector<32x8xf32>, vector<16x8xf32> -> vector<16x8xf32>
    %c10_80 = arith.constant 10 : index
    %c0_81 = arith.constant 0 : index
    %c0_82 = arith.constant 0 : index
    %110 = vector.load %arg6[%c10_80, %c0_81, %c0_82] : memref<12x1x8xf32, #tpu.memory_space<vmem>>, vector<1x1x8xf32>
    %111 = vector.shape_cast %110 : vector<1x1x8xf32> to vector<1x8xf32>
    %112 = vector.broadcast %111 : vector<1x8xf32> to vector<16x8xf32>
    %113 = arith.addf %109, %112 : vector<16x8xf32>
    %114 = tpu.transpose %106, [1, 0] : vector<16x8xf32> -> vector<8x16xf32>
    %cst_83 = arith.constant dense<0.000000e+00> : vector<4x16xf32>
    %115 = tpu.matmul %99, %114, %cst_83 {dimension_numbers = #tpu.dot_dimension_numbers<[1], [0], [0], [1], [0, 0, 1, 1], [], []>} : vector<4x8xf32>, vector<8x16xf32>, vector<4x16xf32> -> vector<4x16xf32>
    %116 = vector.broadcast %11 : vector<1x16xf32> to vector<4x16xf32>
    %117 = arith.addf %115, %116 : vector<4x16xf32>
    %cst_84 = arith.constant dense<0xFF800000> : vector<4xf32>
    %118 = vector.multi_reduction <maximumf>, %117, %cst_84 [1] : vector<4x16xf32> to vector<4xf32>
    %119 = vector.shape_cast %118 : vector<4xf32> to vector<4x1xf32>
    %120 = vector.broadcast %119 : vector<4x1xf32> to vector<4x16xf32>
    %121 = arith.subf %117, %120 : vector<4x16xf32>
    %122 = math.exp %121 : vector<4x16xf32>
    %cst_85 = arith.constant dense<0.000000e+00> : vector<4xf32>
    %123 = vector.multi_reduction <add>, %122, %cst_85 [1] : vector<4x16xf32> to vector<4xf32>
    %124 = vector.shape_cast %123 : vector<4xf32> to vector<4x1xf32>
    %125 = tpu.reciprocal %124 : vector<4x1xf32> -> vector<4x1xf32>
    %126 = vector.broadcast %125 : vector<4x1xf32> to vector<4x16xf32>
    %127 = arith.mulf %122, %126 : vector<4x16xf32>
    %cst_86 = arith.constant dense<0.000000e+00> : vector<4x8xf32>
    %128 = tpu.matmul %127, %113, %cst_86 {dimension_numbers = #tpu.dot_dimension_numbers<[1], [0], [0], [1], [0, 0, 1, 1], [], []>} : vector<4x16xf32>, vector<16x8xf32>, vector<4x8xf32> -> vector<4x8xf32>
    %c2_87 = arith.constant 2 : index
    %c0_88 = arith.constant 0 : index
    %c0_89 = arith.constant 0 : index
    %129 = vector.load %arg7[%c2_87, %c0_88, %c0_89] : memref<4x8x32xf32, #tpu.memory_space<vmem>>, vector<1x8x32xf32>
    %130 = vector.shape_cast %129 : vector<1x8x32xf32> to vector<8x32xf32>
    %cst_90 = arith.constant dense<0.000000e+00> : vector<4x32xf32>
    %131 = tpu.matmul %128, %130, %cst_90 {dimension_numbers = #tpu.dot_dimension_numbers<[1], [0], [0], [1], [0, 0, 1, 1], [], []>} : vector<4x8xf32>, vector<8x32xf32>, vector<4x32xf32> -> vector<4x32xf32>
    %132 = arith.addf %92, %131 : vector<4x32xf32>
    %c3 = arith.constant 3 : index
    %c0_91 = arith.constant 0 : index
    %c0_92 = arith.constant 0 : index
    %133 = vector.load %arg5[%c3, %c0_91, %c0_92] : memref<12x32x8xf32, #tpu.memory_space<vmem>>, vector<1x32x8xf32>
    %134 = vector.shape_cast %133 : vector<1x32x8xf32> to vector<32x8xf32>
    %cst_93 = arith.constant dense<0.000000e+00> : vector<4x8xf32>
    %135 = tpu.matmul %6, %134, %cst_93 {dimension_numbers = #tpu.dot_dimension_numbers<[1], [0], [0], [1], [0, 0, 1, 1], [], []>} : vector<4x32xf32>, vector<32x8xf32>, vector<4x8xf32> -> vector<4x8xf32>
    %c3_94 = arith.constant 3 : index
    %c0_95 = arith.constant 0 : index
    %c0_96 = arith.constant 0 : index
    %136 = vector.load %arg6[%c3_94, %c0_95, %c0_96] : memref<12x1x8xf32, #tpu.memory_space<vmem>>, vector<1x1x8xf32>
    %137 = vector.shape_cast %136 : vector<1x1x8xf32> to vector<1x8xf32>
    %138 = vector.broadcast %137 : vector<1x8xf32> to vector<4x8xf32>
    %139 = arith.addf %135, %138 : vector<4x8xf32>
    %c7 = arith.constant 7 : index
    %c0_97 = arith.constant 0 : index
    %c0_98 = arith.constant 0 : index
    %140 = vector.load %arg5[%c7, %c0_97, %c0_98] : memref<12x32x8xf32, #tpu.memory_space<vmem>>, vector<1x32x8xf32>
    %141 = vector.shape_cast %140 : vector<1x32x8xf32> to vector<32x8xf32>
    %cst_99 = arith.constant dense<0.000000e+00> : vector<16x8xf32>
    %142 = tpu.matmul %8, %141, %cst_99 {dimension_numbers = #tpu.dot_dimension_numbers<[1], [0], [0], [1], [0, 0, 1, 1], [], []>} : vector<16x32xf32>, vector<32x8xf32>, vector<16x8xf32> -> vector<16x8xf32>
    %c7_100 = arith.constant 7 : index
    %c0_101 = arith.constant 0 : index
    %c0_102 = arith.constant 0 : index
    %143 = vector.load %arg6[%c7_100, %c0_101, %c0_102] : memref<12x1x8xf32, #tpu.memory_space<vmem>>, vector<1x1x8xf32>
    %144 = vector.shape_cast %143 : vector<1x1x8xf32> to vector<1x8xf32>
    %145 = vector.broadcast %144 : vector<1x8xf32> to vector<16x8xf32>
    %146 = arith.addf %142, %145 : vector<16x8xf32>
    %c11 = arith.constant 11 : index
    %c0_103 = arith.constant 0 : index
    %c0_104 = arith.constant 0 : index
    %147 = vector.load %arg5[%c11, %c0_103, %c0_104] : memref<12x32x8xf32, #tpu.memory_space<vmem>>, vector<1x32x8xf32>
    %148 = vector.shape_cast %147 : vector<1x32x8xf32> to vector<32x8xf32>
    %cst_105 = arith.constant dense<0.000000e+00> : vector<16x8xf32>
    %149 = tpu.matmul %10, %148, %cst_105 {dimension_numbers = #tpu.dot_dimension_numbers<[1], [0], [0], [1], [0, 0, 1, 1], [], []>} : vector<16x32xf32>, vector<32x8xf32>, vector<16x8xf32> -> vector<16x8xf32>
    %c11_106 = arith.constant 11 : index
    %c0_107 = arith.constant 0 : index
    %c0_108 = arith.constant 0 : index
    %150 = vector.load %arg6[%c11_106, %c0_107, %c0_108] : memref<12x1x8xf32, #tpu.memory_space<vmem>>, vector<1x1x8xf32>
    %151 = vector.shape_cast %150 : vector<1x1x8xf32> to vector<1x8xf32>
    %152 = vector.broadcast %151 : vector<1x8xf32> to vector<16x8xf32>
    %153 = arith.addf %149, %152 : vector<16x8xf32>
    %154 = tpu.transpose %146, [1, 0] : vector<16x8xf32> -> vector<8x16xf32>
    %cst_109 = arith.constant dense<0.000000e+00> : vector<4x16xf32>
    %155 = tpu.matmul %139, %154, %cst_109 {dimension_numbers = #tpu.dot_dimension_numbers<[1], [0], [0], [1], [0, 0, 1, 1], [], []>} : vector<4x8xf32>, vector<8x16xf32>, vector<4x16xf32> -> vector<4x16xf32>
    %156 = vector.broadcast %11 : vector<1x16xf32> to vector<4x16xf32>
    %157 = arith.addf %155, %156 : vector<4x16xf32>
    %cst_110 = arith.constant dense<0xFF800000> : vector<4xf32>
    %158 = vector.multi_reduction <maximumf>, %157, %cst_110 [1] : vector<4x16xf32> to vector<4xf32>
    %159 = vector.shape_cast %158 : vector<4xf32> to vector<4x1xf32>
    %160 = vector.broadcast %159 : vector<4x1xf32> to vector<4x16xf32>
    %161 = arith.subf %157, %160 : vector<4x16xf32>
    %162 = math.exp %161 : vector<4x16xf32>
    %cst_111 = arith.constant dense<0.000000e+00> : vector<4xf32>
    %163 = vector.multi_reduction <add>, %162, %cst_111 [1] : vector<4x16xf32> to vector<4xf32>
    %164 = vector.shape_cast %163 : vector<4xf32> to vector<4x1xf32>
    %165 = tpu.reciprocal %164 : vector<4x1xf32> -> vector<4x1xf32>
    %166 = vector.broadcast %165 : vector<4x1xf32> to vector<4x16xf32>
    %167 = arith.mulf %162, %166 : vector<4x16xf32>
    %cst_112 = arith.constant dense<0.000000e+00> : vector<4x8xf32>
    %168 = tpu.matmul %167, %153, %cst_112 {dimension_numbers = #tpu.dot_dimension_numbers<[1], [0], [0], [1], [0, 0, 1, 1], [], []>} : vector<4x16xf32>, vector<16x8xf32>, vector<4x8xf32> -> vector<4x8xf32>
    %c3_113 = arith.constant 3 : index
    %c0_114 = arith.constant 0 : index
    %c0_115 = arith.constant 0 : index
    %169 = vector.load %arg7[%c3_113, %c0_114, %c0_115] : memref<4x8x32xf32, #tpu.memory_space<vmem>>, vector<1x8x32xf32>
    %170 = vector.shape_cast %169 : vector<1x8x32xf32> to vector<8x32xf32>
    %cst_116 = arith.constant dense<0.000000e+00> : vector<4x32xf32>
    %171 = tpu.matmul %168, %170, %cst_116 {dimension_numbers = #tpu.dot_dimension_numbers<[1], [0], [0], [1], [0, 0, 1, 1], [], []>} : vector<4x8xf32>, vector<8x32xf32>, vector<4x32xf32> -> vector<4x32xf32>
    %172 = arith.addf %132, %171 : vector<4x32xf32>
    %173 = vector.broadcast %4 : vector<1x32xf32> to vector<4x32xf32>
    %174 = arith.addf %172, %173 : vector<4x32xf32>
    %175 = vector.extract_strided_slice %0 {offsets = [0, 1, 0], sizes = [4, 1, 32], strides = [1, 1, 1]} : vector<4x2x32xf32> to vector<4x1x32xf32>
    %176 = vector.shape_cast %175 : vector<4x1x32xf32> to vector<4x32xf32>
    %177 = vector.extract_strided_slice %1 {offsets = [0, 1, 0], sizes = [16, 1, 32], strides = [1, 1, 1]} : vector<16x2x32xf32> to vector<16x1x32xf32>
    %178 = vector.shape_cast %177 : vector<16x1x32xf32> to vector<16x32xf32>
    %179 = vector.extract_strided_slice %2 {offsets = [0, 1, 0], sizes = [16, 1, 32], strides = [1, 1, 1]} : vector<16x2x32xf32> to vector<16x1x32xf32>
    %180 = vector.shape_cast %179 : vector<16x1x32xf32> to vector<16x32xf32>
    %181 = vector.extract_strided_slice %3 {offsets = [1, 0], sizes = [1, 16], strides = [1, 1]} : vector<2x16xf32> to vector<1x16xf32>
    %cst_117 = arith.constant 0.000000e+00 : f32
    %182 = vector.broadcast %cst_117 : f32 to vector<4x32xf32>
    %c0_118 = arith.constant 0 : index
    %c0_119 = arith.constant 0 : index
    %c0_120 = arith.constant 0 : index
    %183 = vector.load %arg5[%c0_118, %c0_119, %c0_120] : memref<12x32x8xf32, #tpu.memory_space<vmem>>, vector<1x32x8xf32>
    %184 = vector.shape_cast %183 : vector<1x32x8xf32> to vector<32x8xf32>
    %cst_121 = arith.constant dense<0.000000e+00> : vector<4x8xf32>
    %185 = tpu.matmul %176, %184, %cst_121 {dimension_numbers = #tpu.dot_dimension_numbers<[1], [0], [0], [1], [0, 0, 1, 1], [], []>} : vector<4x32xf32>, vector<32x8xf32>, vector<4x8xf32> -> vector<4x8xf32>
    %c0_122 = arith.constant 0 : index
    %c0_123 = arith.constant 0 : index
    %c0_124 = arith.constant 0 : index
    %186 = vector.load %arg6[%c0_122, %c0_123, %c0_124] : memref<12x1x8xf32, #tpu.memory_space<vmem>>, vector<1x1x8xf32>
    %187 = vector.shape_cast %186 : vector<1x1x8xf32> to vector<1x8xf32>
    %188 = vector.broadcast %187 : vector<1x8xf32> to vector<4x8xf32>
    %189 = arith.addf %185, %188 : vector<4x8xf32>
    %c4_125 = arith.constant 4 : index
    %c0_126 = arith.constant 0 : index
    %c0_127 = arith.constant 0 : index
    %190 = vector.load %arg5[%c4_125, %c0_126, %c0_127] : memref<12x32x8xf32, #tpu.memory_space<vmem>>, vector<1x32x8xf32>
    %191 = vector.shape_cast %190 : vector<1x32x8xf32> to vector<32x8xf32>
    %cst_128 = arith.constant dense<0.000000e+00> : vector<16x8xf32>
    %192 = tpu.matmul %178, %191, %cst_128 {dimension_numbers = #tpu.dot_dimension_numbers<[1], [0], [0], [1], [0, 0, 1, 1], [], []>} : vector<16x32xf32>, vector<32x8xf32>, vector<16x8xf32> -> vector<16x8xf32>
    %c4_129 = arith.constant 4 : index
    %c0_130 = arith.constant 0 : index
    %c0_131 = arith.constant 0 : index
    %193 = vector.load %arg6[%c4_129, %c0_130, %c0_131] : memref<12x1x8xf32, #tpu.memory_space<vmem>>, vector<1x1x8xf32>
    %194 = vector.shape_cast %193 : vector<1x1x8xf32> to vector<1x8xf32>
    %195 = vector.broadcast %194 : vector<1x8xf32> to vector<16x8xf32>
    %196 = arith.addf %192, %195 : vector<16x8xf32>
    %c8_132 = arith.constant 8 : index
    %c0_133 = arith.constant 0 : index
    %c0_134 = arith.constant 0 : index
    %197 = vector.load %arg5[%c8_132, %c0_133, %c0_134] : memref<12x32x8xf32, #tpu.memory_space<vmem>>, vector<1x32x8xf32>
    %198 = vector.shape_cast %197 : vector<1x32x8xf32> to vector<32x8xf32>
    %cst_135 = arith.constant dense<0.000000e+00> : vector<16x8xf32>
    %199 = tpu.matmul %180, %198, %cst_135 {dimension_numbers = #tpu.dot_dimension_numbers<[1], [0], [0], [1], [0, 0, 1, 1], [], []>} : vector<16x32xf32>, vector<32x8xf32>, vector<16x8xf32> -> vector<16x8xf32>
    %c8_136 = arith.constant 8 : index
    %c0_137 = arith.constant 0 : index
    %c0_138 = arith.constant 0 : index
    %200 = vector.load %arg6[%c8_136, %c0_137, %c0_138] : memref<12x1x8xf32, #tpu.memory_space<vmem>>, vector<1x1x8xf32>
    %201 = vector.shape_cast %200 : vector<1x1x8xf32> to vector<1x8xf32>
    %202 = vector.broadcast %201 : vector<1x8xf32> to vector<16x8xf32>
    %203 = arith.addf %199, %202 : vector<16x8xf32>
    %204 = tpu.transpose %196, [1, 0] : vector<16x8xf32> -> vector<8x16xf32>
    %cst_139 = arith.constant dense<0.000000e+00> : vector<4x16xf32>
    %205 = tpu.matmul %189, %204, %cst_139 {dimension_numbers = #tpu.dot_dimension_numbers<[1], [0], [0], [1], [0, 0, 1, 1], [], []>} : vector<4x8xf32>, vector<8x16xf32>, vector<4x16xf32> -> vector<4x16xf32>
    %206 = vector.broadcast %181 : vector<1x16xf32> to vector<4x16xf32>
    %207 = arith.addf %205, %206 : vector<4x16xf32>
    %cst_140 = arith.constant dense<0xFF800000> : vector<4xf32>
    %208 = vector.multi_reduction <maximumf>, %207, %cst_140 [1] : vector<4x16xf32> to vector<4xf32>
    %209 = vector.shape_cast %208 : vector<4xf32> to vector<4x1xf32>
    %210 = vector.broadcast %209 : vector<4x1xf32> to vector<4x16xf32>
    %211 = arith.subf %207, %210 : vector<4x16xf32>
    %212 = math.exp %211 : vector<4x16xf32>
    %cst_141 = arith.constant dense<0.000000e+00> : vector<4xf32>
    %213 = vector.multi_reduction <add>, %212, %cst_141 [1] : vector<4x16xf32> to vector<4xf32>
    %214 = vector.shape_cast %213 : vector<4xf32> to vector<4x1xf32>
    %215 = tpu.reciprocal %214 : vector<4x1xf32> -> vector<4x1xf32>
    %216 = vector.broadcast %215 : vector<4x1xf32> to vector<4x16xf32>
    %217 = arith.mulf %212, %216 : vector<4x16xf32>
    %cst_142 = arith.constant dense<0.000000e+00> : vector<4x8xf32>
    %218 = tpu.matmul %217, %203, %cst_142 {dimension_numbers = #tpu.dot_dimension_numbers<[1], [0], [0], [1], [0, 0, 1, 1], [], []>} : vector<4x16xf32>, vector<16x8xf32>, vector<4x8xf32> -> vector<4x8xf32>
    %c0_143 = arith.constant 0 : index
    %c0_144 = arith.constant 0 : index
    %c0_145 = arith.constant 0 : index
    %219 = vector.load %arg7[%c0_143, %c0_144, %c0_145] : memref<4x8x32xf32, #tpu.memory_space<vmem>>, vector<1x8x32xf32>
    %220 = vector.shape_cast %219 : vector<1x8x32xf32> to vector<8x32xf32>
    %cst_146 = arith.constant dense<0.000000e+00> : vector<4x32xf32>
    %221 = tpu.matmul %218, %220, %cst_146 {dimension_numbers = #tpu.dot_dimension_numbers<[1], [0], [0], [1], [0, 0, 1, 1], [], []>} : vector<4x8xf32>, vector<8x32xf32>, vector<4x32xf32> -> vector<4x32xf32>
    %222 = arith.addf %182, %221 : vector<4x32xf32>
    %c1_147 = arith.constant 1 : index
    %c0_148 = arith.constant 0 : index
    %c0_149 = arith.constant 0 : index
    %223 = vector.load %arg5[%c1_147, %c0_148, %c0_149] : memref<12x32x8xf32, #tpu.memory_space<vmem>>, vector<1x32x8xf32>
    %224 = vector.shape_cast %223 : vector<1x32x8xf32> to vector<32x8xf32>
    %cst_150 = arith.constant dense<0.000000e+00> : vector<4x8xf32>
    %225 = tpu.matmul %176, %224, %cst_150 {dimension_numbers = #tpu.dot_dimension_numbers<[1], [0], [0], [1], [0, 0, 1, 1], [], []>} : vector<4x32xf32>, vector<32x8xf32>, vector<4x8xf32> -> vector<4x8xf32>
    %c1_151 = arith.constant 1 : index
    %c0_152 = arith.constant 0 : index
    %c0_153 = arith.constant 0 : index
    %226 = vector.load %arg6[%c1_151, %c0_152, %c0_153] : memref<12x1x8xf32, #tpu.memory_space<vmem>>, vector<1x1x8xf32>
    %227 = vector.shape_cast %226 : vector<1x1x8xf32> to vector<1x8xf32>
    %228 = vector.broadcast %227 : vector<1x8xf32> to vector<4x8xf32>
    %229 = arith.addf %225, %228 : vector<4x8xf32>
    %c5_154 = arith.constant 5 : index
    %c0_155 = arith.constant 0 : index
    %c0_156 = arith.constant 0 : index
    %230 = vector.load %arg5[%c5_154, %c0_155, %c0_156] : memref<12x32x8xf32, #tpu.memory_space<vmem>>, vector<1x32x8xf32>
    %231 = vector.shape_cast %230 : vector<1x32x8xf32> to vector<32x8xf32>
    %cst_157 = arith.constant dense<0.000000e+00> : vector<16x8xf32>
    %232 = tpu.matmul %178, %231, %cst_157 {dimension_numbers = #tpu.dot_dimension_numbers<[1], [0], [0], [1], [0, 0, 1, 1], [], []>} : vector<16x32xf32>, vector<32x8xf32>, vector<16x8xf32> -> vector<16x8xf32>
    %c5_158 = arith.constant 5 : index
    %c0_159 = arith.constant 0 : index
    %c0_160 = arith.constant 0 : index
    %233 = vector.load %arg6[%c5_158, %c0_159, %c0_160] : memref<12x1x8xf32, #tpu.memory_space<vmem>>, vector<1x1x8xf32>
    %234 = vector.shape_cast %233 : vector<1x1x8xf32> to vector<1x8xf32>
    %235 = vector.broadcast %234 : vector<1x8xf32> to vector<16x8xf32>
    %236 = arith.addf %232, %235 : vector<16x8xf32>
    %c9_161 = arith.constant 9 : index
    %c0_162 = arith.constant 0 : index
    %c0_163 = arith.constant 0 : index
    %237 = vector.load %arg5[%c9_161, %c0_162, %c0_163] : memref<12x32x8xf32, #tpu.memory_space<vmem>>, vector<1x32x8xf32>
    %238 = vector.shape_cast %237 : vector<1x32x8xf32> to vector<32x8xf32>
    %cst_164 = arith.constant dense<0.000000e+00> : vector<16x8xf32>
    %239 = tpu.matmul %180, %238, %cst_164 {dimension_numbers = #tpu.dot_dimension_numbers<[1], [0], [0], [1], [0, 0, 1, 1], [], []>} : vector<16x32xf32>, vector<32x8xf32>, vector<16x8xf32> -> vector<16x8xf32>
    %c9_165 = arith.constant 9 : index
    %c0_166 = arith.constant 0 : index
    %c0_167 = arith.constant 0 : index
    %240 = vector.load %arg6[%c9_165, %c0_166, %c0_167] : memref<12x1x8xf32, #tpu.memory_space<vmem>>, vector<1x1x8xf32>
    %241 = vector.shape_cast %240 : vector<1x1x8xf32> to vector<1x8xf32>
    %242 = vector.broadcast %241 : vector<1x8xf32> to vector<16x8xf32>
    %243 = arith.addf %239, %242 : vector<16x8xf32>
    %244 = tpu.transpose %236, [1, 0] : vector<16x8xf32> -> vector<8x16xf32>
    %cst_168 = arith.constant dense<0.000000e+00> : vector<4x16xf32>
    %245 = tpu.matmul %229, %244, %cst_168 {dimension_numbers = #tpu.dot_dimension_numbers<[1], [0], [0], [1], [0, 0, 1, 1], [], []>} : vector<4x8xf32>, vector<8x16xf32>, vector<4x16xf32> -> vector<4x16xf32>
    %246 = vector.broadcast %181 : vector<1x16xf32> to vector<4x16xf32>
    %247 = arith.addf %245, %246 : vector<4x16xf32>
    %cst_169 = arith.constant dense<0xFF800000> : vector<4xf32>
    %248 = vector.multi_reduction <maximumf>, %247, %cst_169 [1] : vector<4x16xf32> to vector<4xf32>
    %249 = vector.shape_cast %248 : vector<4xf32> to vector<4x1xf32>
    %250 = vector.broadcast %249 : vector<4x1xf32> to vector<4x16xf32>
    %251 = arith.subf %247, %250 : vector<4x16xf32>
    %252 = math.exp %251 : vector<4x16xf32>
    %cst_170 = arith.constant dense<0.000000e+00> : vector<4xf32>
    %253 = vector.multi_reduction <add>, %252, %cst_170 [1] : vector<4x16xf32> to vector<4xf32>
    %254 = vector.shape_cast %253 : vector<4xf32> to vector<4x1xf32>
    %255 = tpu.reciprocal %254 : vector<4x1xf32> -> vector<4x1xf32>
    %256 = vector.broadcast %255 : vector<4x1xf32> to vector<4x16xf32>
    %257 = arith.mulf %252, %256 : vector<4x16xf32>
    %cst_171 = arith.constant dense<0.000000e+00> : vector<4x8xf32>
    %258 = tpu.matmul %257, %243, %cst_171 {dimension_numbers = #tpu.dot_dimension_numbers<[1], [0], [0], [1], [0, 0, 1, 1], [], []>} : vector<4x16xf32>, vector<16x8xf32>, vector<4x8xf32> -> vector<4x8xf32>
    %c1_172 = arith.constant 1 : index
    %c0_173 = arith.constant 0 : index
    %c0_174 = arith.constant 0 : index
    %259 = vector.load %arg7[%c1_172, %c0_173, %c0_174] : memref<4x8x32xf32, #tpu.memory_space<vmem>>, vector<1x8x32xf32>
    %260 = vector.shape_cast %259 : vector<1x8x32xf32> to vector<8x32xf32>
    %cst_175 = arith.constant dense<0.000000e+00> : vector<4x32xf32>
    %261 = tpu.matmul %258, %260, %cst_175 {dimension_numbers = #tpu.dot_dimension_numbers<[1], [0], [0], [1], [0, 0, 1, 1], [], []>} : vector<4x8xf32>, vector<8x32xf32>, vector<4x32xf32> -> vector<4x32xf32>
    %262 = arith.addf %222, %261 : vector<4x32xf32>
    %c2_176 = arith.constant 2 : index
    %c0_177 = arith.constant 0 : index
    %c0_178 = arith.constant 0 : index
    %263 = vector.load %arg5[%c2_176, %c0_177, %c0_178] : memref<12x32x8xf32, #tpu.memory_space<vmem>>, vector<1x32x8xf32>
    %264 = vector.shape_cast %263 : vector<1x32x8xf32> to vector<32x8xf32>
    %cst_179 = arith.constant dense<0.000000e+00> : vector<4x8xf32>
    %265 = tpu.matmul %176, %264, %cst_179 {dimension_numbers = #tpu.dot_dimension_numbers<[1], [0], [0], [1], [0, 0, 1, 1], [], []>} : vector<4x32xf32>, vector<32x8xf32>, vector<4x8xf32> -> vector<4x8xf32>
    %c2_180 = arith.constant 2 : index
    %c0_181 = arith.constant 0 : index
    %c0_182 = arith.constant 0 : index
    %266 = vector.load %arg6[%c2_180, %c0_181, %c0_182] : memref<12x1x8xf32, #tpu.memory_space<vmem>>, vector<1x1x8xf32>
    %267 = vector.shape_cast %266 : vector<1x1x8xf32> to vector<1x8xf32>
    %268 = vector.broadcast %267 : vector<1x8xf32> to vector<4x8xf32>
    %269 = arith.addf %265, %268 : vector<4x8xf32>
    %c6_183 = arith.constant 6 : index
    %c0_184 = arith.constant 0 : index
    %c0_185 = arith.constant 0 : index
    %270 = vector.load %arg5[%c6_183, %c0_184, %c0_185] : memref<12x32x8xf32, #tpu.memory_space<vmem>>, vector<1x32x8xf32>
    %271 = vector.shape_cast %270 : vector<1x32x8xf32> to vector<32x8xf32>
    %cst_186 = arith.constant dense<0.000000e+00> : vector<16x8xf32>
    %272 = tpu.matmul %178, %271, %cst_186 {dimension_numbers = #tpu.dot_dimension_numbers<[1], [0], [0], [1], [0, 0, 1, 1], [], []>} : vector<16x32xf32>, vector<32x8xf32>, vector<16x8xf32> -> vector<16x8xf32>
    %c6_187 = arith.constant 6 : index
    %c0_188 = arith.constant 0 : index
    %c0_189 = arith.constant 0 : index
    %273 = vector.load %arg6[%c6_187, %c0_188, %c0_189] : memref<12x1x8xf32, #tpu.memory_space<vmem>>, vector<1x1x8xf32>
    %274 = vector.shape_cast %273 : vector<1x1x8xf32> to vector<1x8xf32>
    %275 = vector.broadcast %274 : vector<1x8xf32> to vector<16x8xf32>
    %276 = arith.addf %272, %275 : vector<16x8xf32>
    %c10_190 = arith.constant 10 : index
    %c0_191 = arith.constant 0 : index
    %c0_192 = arith.constant 0 : index
    %277 = vector.load %arg5[%c10_190, %c0_191, %c0_192] : memref<12x32x8xf32, #tpu.memory_space<vmem>>, vector<1x32x8xf32>
    %278 = vector.shape_cast %277 : vector<1x32x8xf32> to vector<32x8xf32>
    %cst_193 = arith.constant dense<0.000000e+00> : vector<16x8xf32>
    %279 = tpu.matmul %180, %278, %cst_193 {dimension_numbers = #tpu.dot_dimension_numbers<[1], [0], [0], [1], [0, 0, 1, 1], [], []>} : vector<16x32xf32>, vector<32x8xf32>, vector<16x8xf32> -> vector<16x8xf32>
    %c10_194 = arith.constant 10 : index
    %c0_195 = arith.constant 0 : index
    %c0_196 = arith.constant 0 : index
    %280 = vector.load %arg6[%c10_194, %c0_195, %c0_196] : memref<12x1x8xf32, #tpu.memory_space<vmem>>, vector<1x1x8xf32>
    %281 = vector.shape_cast %280 : vector<1x1x8xf32> to vector<1x8xf32>
    %282 = vector.broadcast %281 : vector<1x8xf32> to vector<16x8xf32>
    %283 = arith.addf %279, %282 : vector<16x8xf32>
    %284 = tpu.transpose %276, [1, 0] : vector<16x8xf32> -> vector<8x16xf32>
    %cst_197 = arith.constant dense<0.000000e+00> : vector<4x16xf32>
    %285 = tpu.matmul %269, %284, %cst_197 {dimension_numbers = #tpu.dot_dimension_numbers<[1], [0], [0], [1], [0, 0, 1, 1], [], []>} : vector<4x8xf32>, vector<8x16xf32>, vector<4x16xf32> -> vector<4x16xf32>
    %286 = vector.broadcast %181 : vector<1x16xf32> to vector<4x16xf32>
    %287 = arith.addf %285, %286 : vector<4x16xf32>
    %cst_198 = arith.constant dense<0xFF800000> : vector<4xf32>
    %288 = vector.multi_reduction <maximumf>, %287, %cst_198 [1] : vector<4x16xf32> to vector<4xf32>
    %289 = vector.shape_cast %288 : vector<4xf32> to vector<4x1xf32>
    %290 = vector.broadcast %289 : vector<4x1xf32> to vector<4x16xf32>
    %291 = arith.subf %287, %290 : vector<4x16xf32>
    %292 = math.exp %291 : vector<4x16xf32>
    %cst_199 = arith.constant dense<0.000000e+00> : vector<4xf32>
    %293 = vector.multi_reduction <add>, %292, %cst_199 [1] : vector<4x16xf32> to vector<4xf32>
    %294 = vector.shape_cast %293 : vector<4xf32> to vector<4x1xf32>
    %295 = tpu.reciprocal %294 : vector<4x1xf32> -> vector<4x1xf32>
    %296 = vector.broadcast %295 : vector<4x1xf32> to vector<4x16xf32>
    %297 = arith.mulf %292, %296 : vector<4x16xf32>
    %cst_200 = arith.constant dense<0.000000e+00> : vector<4x8xf32>
    %298 = tpu.matmul %297, %283, %cst_200 {dimension_numbers = #tpu.dot_dimension_numbers<[1], [0], [0], [1], [0, 0, 1, 1], [], []>} : vector<4x16xf32>, vector<16x8xf32>, vector<4x8xf32> -> vector<4x8xf32>
    %c2_201 = arith.constant 2 : index
    %c0_202 = arith.constant 0 : index
    %c0_203 = arith.constant 0 : index
    %299 = vector.load %arg7[%c2_201, %c0_202, %c0_203] : memref<4x8x32xf32, #tpu.memory_space<vmem>>, vector<1x8x32xf32>
    %300 = vector.shape_cast %299 : vector<1x8x32xf32> to vector<8x32xf32>
    %cst_204 = arith.constant dense<0.000000e+00> : vector<4x32xf32>
    %301 = tpu.matmul %298, %300, %cst_204 {dimension_numbers = #tpu.dot_dimension_numbers<[1], [0], [0], [1], [0, 0, 1, 1], [], []>} : vector<4x8xf32>, vector<8x32xf32>, vector<4x32xf32> -> vector<4x32xf32>
    %302 = arith.addf %262, %301 : vector<4x32xf32>
    %c3_205 = arith.constant 3 : index
    %c0_206 = arith.constant 0 : index
    %c0_207 = arith.constant 0 : index
    %303 = vector.load %arg5[%c3_205, %c0_206, %c0_207] : memref<12x32x8xf32, #tpu.memory_space<vmem>>, vector<1x32x8xf32>
    %304 = vector.shape_cast %303 : vector<1x32x8xf32> to vector<32x8xf32>
    %cst_208 = arith.constant dense<0.000000e+00> : vector<4x8xf32>
    %305 = tpu.matmul %176, %304, %cst_208 {dimension_numbers = #tpu.dot_dimension_numbers<[1], [0], [0], [1], [0, 0, 1, 1], [], []>} : vector<4x32xf32>, vector<32x8xf32>, vector<4x8xf32> -> vector<4x8xf32>
    %c3_209 = arith.constant 3 : index
    %c0_210 = arith.constant 0 : index
    %c0_211 = arith.constant 0 : index
    %306 = vector.load %arg6[%c3_209, %c0_210, %c0_211] : memref<12x1x8xf32, #tpu.memory_space<vmem>>, vector<1x1x8xf32>
    %307 = vector.shape_cast %306 : vector<1x1x8xf32> to vector<1x8xf32>
    %308 = vector.broadcast %307 : vector<1x8xf32> to vector<4x8xf32>
    %309 = arith.addf %305, %308 : vector<4x8xf32>
    %c7_212 = arith.constant 7 : index
    %c0_213 = arith.constant 0 : index
    %c0_214 = arith.constant 0 : index
    %310 = vector.load %arg5[%c7_212, %c0_213, %c0_214] : memref<12x32x8xf32, #tpu.memory_space<vmem>>, vector<1x32x8xf32>
    %311 = vector.shape_cast %310 : vector<1x32x8xf32> to vector<32x8xf32>
    %cst_215 = arith.constant dense<0.000000e+00> : vector<16x8xf32>
    %312 = tpu.matmul %178, %311, %cst_215 {dimension_numbers = #tpu.dot_dimension_numbers<[1], [0], [0], [1], [0, 0, 1, 1], [], []>} : vector<16x32xf32>, vector<32x8xf32>, vector<16x8xf32> -> vector<16x8xf32>
    %c7_216 = arith.constant 7 : index
    %c0_217 = arith.constant 0 : index
    %c0_218 = arith.constant 0 : index
    %313 = vector.load %arg6[%c7_216, %c0_217, %c0_218] : memref<12x1x8xf32, #tpu.memory_space<vmem>>, vector<1x1x8xf32>
    %314 = vector.shape_cast %313 : vector<1x1x8xf32> to vector<1x8xf32>
    %315 = vector.broadcast %314 : vector<1x8xf32> to vector<16x8xf32>
    %316 = arith.addf %312, %315 : vector<16x8xf32>
    %c11_219 = arith.constant 11 : index
    %c0_220 = arith.constant 0 : index
    %c0_221 = arith.constant 0 : index
    %317 = vector.load %arg5[%c11_219, %c0_220, %c0_221] : memref<12x32x8xf32, #tpu.memory_space<vmem>>, vector<1x32x8xf32>
    %318 = vector.shape_cast %317 : vector<1x32x8xf32> to vector<32x8xf32>
    %cst_222 = arith.constant dense<0.000000e+00> : vector<16x8xf32>
    %319 = tpu.matmul %180, %318, %cst_222 {dimension_numbers = #tpu.dot_dimension_numbers<[1], [0], [0], [1], [0, 0, 1, 1], [], []>} : vector<16x32xf32>, vector<32x8xf32>, vector<16x8xf32> -> vector<16x8xf32>
    %c11_223 = arith.constant 11 : index
    %c0_224 = arith.constant 0 : index
    %c0_225 = arith.constant 0 : index
    %320 = vector.load %arg6[%c11_223, %c0_224, %c0_225] : memref<12x1x8xf32, #tpu.memory_space<vmem>>, vector<1x1x8xf32>
    %321 = vector.shape_cast %320 : vector<1x1x8xf32> to vector<1x8xf32>
    %322 = vector.broadcast %321 : vector<1x8xf32> to vector<16x8xf32>
    %323 = arith.addf %319, %322 : vector<16x8xf32>
    %324 = tpu.transpose %316, [1, 0] : vector<16x8xf32> -> vector<8x16xf32>
    %cst_226 = arith.constant dense<0.000000e+00> : vector<4x16xf32>
    %325 = tpu.matmul %309, %324, %cst_226 {dimension_numbers = #tpu.dot_dimension_numbers<[1], [0], [0], [1], [0, 0, 1, 1], [], []>} : vector<4x8xf32>, vector<8x16xf32>, vector<4x16xf32> -> vector<4x16xf32>
    %326 = vector.broadcast %181 : vector<1x16xf32> to vector<4x16xf32>
    %327 = arith.addf %325, %326 : vector<4x16xf32>
    %cst_227 = arith.constant dense<0xFF800000> : vector<4xf32>
    %328 = vector.multi_reduction <maximumf>, %327, %cst_227 [1] : vector<4x16xf32> to vector<4xf32>
    %329 = vector.shape_cast %328 : vector<4xf32> to vector<4x1xf32>
    %330 = vector.broadcast %329 : vector<4x1xf32> to vector<4x16xf32>
    %331 = arith.subf %327, %330 : vector<4x16xf32>
    %332 = math.exp %331 : vector<4x16xf32>
    %cst_228 = arith.constant dense<0.000000e+00> : vector<4xf32>
    %333 = vector.multi_reduction <add>, %332, %cst_228 [1] : vector<4x16xf32> to vector<4xf32>
    %334 = vector.shape_cast %333 : vector<4xf32> to vector<4x1xf32>
    %335 = tpu.reciprocal %334 : vector<4x1xf32> -> vector<4x1xf32>
    %336 = vector.broadcast %335 : vector<4x1xf32> to vector<4x16xf32>
    %337 = arith.mulf %332, %336 : vector<4x16xf32>
    %cst_229 = arith.constant dense<0.000000e+00> : vector<4x8xf32>
    %338 = tpu.matmul %337, %323, %cst_229 {dimension_numbers = #tpu.dot_dimension_numbers<[1], [0], [0], [1], [0, 0, 1, 1], [], []>} : vector<4x16xf32>, vector<16x8xf32>, vector<4x8xf32> -> vector<4x8xf32>
    %c3_230 = arith.constant 3 : index
    %c0_231 = arith.constant 0 : index
    %c0_232 = arith.constant 0 : index
    %339 = vector.load %arg7[%c3_230, %c0_231, %c0_232] : memref<4x8x32xf32, #tpu.memory_space<vmem>>, vector<1x8x32xf32>
    %340 = vector.shape_cast %339 : vector<1x8x32xf32> to vector<8x32xf32>
    %cst_233 = arith.constant dense<0.000000e+00> : vector<4x32xf32>
    %341 = tpu.matmul %338, %340, %cst_233 {dimension_numbers = #tpu.dot_dimension_numbers<[1], [0], [0], [1], [0, 0, 1, 1], [], []>} : vector<4x8xf32>, vector<8x32xf32>, vector<4x32xf32> -> vector<4x32xf32>
    %342 = arith.addf %302, %341 : vector<4x32xf32>
    %343 = vector.broadcast %4 : vector<1x32xf32> to vector<4x32xf32>
    %344 = arith.addf %342, %343 : vector<4x32xf32>
    %345 = vector.shape_cast %174 : vector<4x32xf32> to vector<4x1x32xf32>
    %346 = vector.shape_cast %344 : vector<4x32xf32> to vector<4x1x32xf32>
    %347 = tpu.concatenate %345, %346 in 1 : vector<4x1x32xf32>, vector<4x1x32xf32> -> vector<4x2x32xf32>
    %c0_234 = arith.constant 0 : index
    %c0_235 = arith.constant 0 : index
    %c0_236 = arith.constant 0 : index
    %348 = vector.load %arg9[%c0_234, %c0_235, %c0_236] : memref<4x2x32xf32, #tpu.memory_space<vmem>>, vector<4x2x32xf32>
    tpu.vector_store %arg9[%c0_234, %c0_235, %c0_236], %347 {strides = array<i32>} : memref<4x2x32xf32, #tpu.memory_space<vmem>>, vector<4x2x32xf32>,
    return
  }
  func.func @transform_0(%arg0: i32) -> (i32, i32, i32) {
    %c0_i32 = arith.constant 0 : i32
    %c0_i32_0 = arith.constant 0 : i32
    %c0_i32_1 = arith.constant 0 : i32
    return %arg0, %c0_i32, %c0_i32_0 : i32, i32, i32
  }
  func.func @transform_1(%arg0: i32) -> (i32, i32, i32) {
    %c0_i32 = arith.constant 0 : i32
    %c0_i32_0 = arith.constant 0 : i32
    %c0_i32_1 = arith.constant 0 : i32
    %c0_i32_2 = arith.constant 0 : i32
    return %c0_i32, %c0_i32_0, %c0_i32_1 : i32, i32, i32
  }
  func.func @transform_2(%arg0: i32) -> (i32, i32, i32) {
    %c0_i32 = arith.constant 0 : i32
    %c0_i32_0 = arith.constant 0 : i32
    %c0_i32_1 = arith.constant 0 : i32
    %c0_i32_2 = arith.constant 0 : i32
    return %c0_i32, %c0_i32_0, %c0_i32_1 : i32, i32, i32
  }
  func.func @transform_3(%arg0: i32) -> (i32, i32) {
    %c0_i32 = arith.constant 0 : i32
    %c0_i32_0 = arith.constant 0 : i32
    %c0_i32_1 = arith.constant 0 : i32
    return %c0_i32, %c0_i32_0 : i32, i32
  }
  func.func @transform_4(%arg0: i32) -> (i32, i32, i32) {
    %c0_i32 = arith.constant 0 : i32
    %c0_i32_0 = arith.constant 0 : i32
    %c0_i32_1 = arith.constant 0 : i32
    %c0_i32_2 = arith.constant 0 : i32
    return %c0_i32, %c0_i32_0, %c0_i32_1 : i32, i32, i32
  }
  func.func @transform_5(%arg0: i32) -> (i32, i32, i32) {
    %c0_i32 = arith.constant 0 : i32
    %c0_i32_0 = arith.constant 0 : i32
    %c0_i32_1 = arith.constant 0 : i32
    %c0_i32_2 = arith.constant 0 : i32
    return %c0_i32, %c0_i32_0, %c0_i32_1 : i32, i32, i32
  }
  func.func @transform_6(%arg0: i32) -> (i32, i32, i32) {
    %c0_i32 = arith.constant 0 : i32
    %c0_i32_0 = arith.constant 0 : i32
    %c0_i32_1 = arith.constant 0 : i32
    %c0_i32_2 = arith.constant 0 : i32
    return %c0_i32, %c0_i32_0, %c0_i32_1 : i32, i32, i32
  }
  func.func @transform_7(%arg0: i32) -> (i32, i32) {
    %c0_i32 = arith.constant 0 : i32
    %c0_i32_0 = arith.constant 0 : i32
    %c0_i32_1 = arith.constant 0 : i32
    return %c0_i32, %c0_i32_0 : i32, i32
  }
  func.func @transform_8(%arg0: i32) -> (i32, i32, i32) {
    %c0_i32 = arith.constant 0 : i32
    %c0_i32_0 = arith.constant 0 : i32
    %c0_i32_1 = arith.constant 0 : i32
    return %arg0, %c0_i32, %c0_i32_0 : i32, i32, i32
  }
}

</mosaic_0001>

<llo_original>
// kernel: tpu_custom_call.1
$region0: #{tpu_custom_call.1}
  #allocation0 [shape = 'u32[]', space=smem, size = 0x4, offset = 0x4, fixed_abs, tag = 'smem constant byte address 0x4 - core index']
  #allocation1 [shape = 'u32[144,128]{1,0:T(1,128)}', space=vmem, size = 0x12000, scoped, tag = 'internal scratch']
  %s0 = inlined_call_operand.vmem [shape: f32[8,2,32], index: 0, kind: input, shape index: {}]
  %s1 = inlined_call_operand.vmem [shape: f32[16,2,32], index: 1, kind: input, shape index: {}]
  %s2 = inlined_call_operand.vmem [shape: f32[16,2,32], index: 2, kind: input, shape index: {}]
  %s3 = inlined_call_operand.vmem [shape: f32[2,16], index: 3, kind: input, shape index: {}]
  %s4 = inlined_call_operand.vmem [shape: f32[12,32,8], index: 4, kind: input, shape index: {}]
  %s5 = inlined_call_operand.vmem [shape: f32[12,1,8], index: 5, kind: input, shape index: {}]
  %s6 = inlined_call_operand.vmem [shape: f32[4,8,32], index: 6, kind: input, shape index: {}]
  %s7 = inlined_call_operand.vmem [shape: f32[1,32], index: 7, kind: input, shape index: {}]
  %s8 = inlined_call_operand.hbm [shape: f32[8,2,32], index: 8, kind: output, shape index: {}]
  %s9 = sld [smem:[#allocation0]]
  $region65: #{tpu_custom_call.1} parent=0
    _
  %s11 = ssub.s32 1, %s9
  %s12 = scalar_select 0, %s11, %s9
  $region1: #{tpu_custom_call.1} parent=0
    #allocation2 [shape = 'u8[8192]{0}', space=vmem, size = 0x2000, scoped, tag = 'output window, operand 0']
    #allocation3 [shape = 's32[2]{0}', space=sflag, size = 0x8, scoped, tag = 'scoped memory for tpu_custom_call.1']
    %13 = vsyncpa [#allocation3], 0
    %s14 = scalar_lea.sflag [#allocation3], 1
    %15 = vsyncpa %s14, 0
    loop: start=0, step=1, limit=4
    $region2: #{tpu_custom_call.1} parent=1 // loop_pre_header
      _
    $region3: #{tpu_custom_call.1} parent=1 // loop_header
      %s17 = sphi 0, %s21
      %p18 = scmp.ge.s32.totalorder %s17, 4
      %s27 = sphi 0, %s29
      %s30 = sphi 0, %s27
      %s31 = sphi 0, %s30
      %s47 = sphi 0, %s31
      %s51 = sphi 0, %s51
      %s53 = sphi 0, %s51
      %s54 = sphi 0, %s53
      %s68 = sphi 0, %s54
      %s72 = sphi 0, %s72
      %s74 = sphi 0, %s72
      %s75 = sphi 0, %s74
      %s89 = sphi 0, %s75
      %s93 = sphi 0, %s93
      %s95 = sphi 0, %s93
      %s96 = sphi 0, %s95
      %s110 = sphi 0, %s96
      %s114 = sphi 0, %s114
      %s116 = sphi 0, %s114
      %s117 = sphi 0, %s116
      %s131 = sphi 0, %s117
      %s135 = sphi 0, %s135
      %s137 = sphi 0, %s135
      %s138 = sphi 0, %s137
      %s152 = sphi 0, %s138
      %s156 = sphi 0, %s156
      %s158 = sphi 0, %s156
      %s159 = sphi 0, %s158
      %s173 = sphi 0, %s159
      %s177 = sphi 0, %s177
      %s179 = sphi 0, %s177
      %s180 = sphi 0, %s179
      %s194 = sphi 0, %s180
      %s200 = sphi 0, %s202
      %s203 = sphi 0, %s200
      %s204 = sphi 0, %s203
      %s220 = sphi 0, %s204
    $region4: #{tpu_custom_call.1} parent=1 // loop_header_branch
      %20 = sbr.rel (%p18) target = $region8
    $region5: #{tpu_custom_call.1} parent=1 // loop_body
      %s22 = ssub.s32 %s17, 1
      %s23 = ssub.s32 %s17, 2
      %s24 = sadd.s32 %s17, 1
      %s25 = ssub.s32 %s17, %s24
      %p26 = scmp.eq.s32.totalorder %s25, 0
      %s28 = sadd.s32 %s27, 1
      %s29 = scalar_select %p26, %s27, %s28
      %p32 = pneg %p26
      %p33 = scmp.eq.s32.totalorder %s17, 1
      %p34 = por %p32, %p33
      %p35 = scmp.ne.s32.totalorder %s27, %s30
      %p36 = scmp.eq.s32.totalorder %s17, 0
      %p37 = por %p35, %p36
      %p38 = scmp.ne.s32.totalorder %s27, %s30
      %p39 = scmp.eq.s32.totalorder %s22, 1
      %p40 = por %p38, %p39
      %p41 = scmp.ne.s32.totalorder %s30, %s31
      %p42 = scmp.eq.s32.totalorder %s22, 0
      %p43 = por %p41, %p42
      %p44 = scmp.ne.s32.totalorder %s30, %s31
      %p45 = scmp.eq.s32.totalorder %s23, 1
      %p46 = por %p44, %p45
      %p48 = scmp.ne.s32.totalorder %s31, %s47
      %p49 = scmp.eq.s32.totalorder %s23, 0
      %p50 = por %p48, %p49
      %s52 = sadd.s32 %s51, 1
      %p55 = scmp.eq.s32.totalorder %s17, 1
      %p56 = scmp.ne.s32.totalorder %s51, %s53
      %p57 = scmp.eq.s32.totalorder %s17, 0
      %p58 = por %p56, %p57
      %p59 = scmp.ne.s32.totalorder %s51, %s53
      %p60 = scmp.eq.s32.totalorder %s22, 1
      %p61 = por %p59, %p60
      %p62 = scmp.ne.s32.totalorder %s53, %s54
      %p63 = scmp.eq.s32.totalorder %s22, 0
      %p64 = por %p62, %p63
      %p65 = scmp.ne.s32.totalorder %s53, %s54
      %p66 = scmp.eq.s32.totalorder %s23, 1
      %p67 = por %p65, %p66
      %p69 = scmp.ne.s32.totalorder %s54, %s68
      %p70 = scmp.eq.s32.totalorder %s23, 0
      %p71 = por %p69, %p70
      %s73 = sadd.s32 %s72, 1
      %p76 = scmp.eq.s32.totalorder %s17, 1
      %p77 = scmp.ne.s32.totalorder %s72, %s74
      %p78 = scmp.eq.s32.totalorder %s17, 0
      %p79 = por %p77, %p78
      %p80 = scmp.ne.s32.totalorder %s72, %s74
      %p81 = scmp.eq.s32.totalorder %s22, 1
      %p82 = por %p80, %p81
      %p83 = scmp.ne.s32.totalorder %s74, %s75
      %p84 = scmp.eq.s32.totalorder %s22, 0
      %p85 = por %p83, %p84
      %p86 = scmp.ne.s32.totalorder %s74, %s75
      %p87 = scmp.eq.s32.totalorder %s23, 1
      %p88 = por %p86, %p87
      %p90 = scmp.ne.s32.totalorder %s75, %s89
      %p91 = scmp.eq.s32.totalorder %s23, 0
      %p92 = por %p90, %p91
      %s94 = sadd.s32 %s93, 1
      %p97 = scmp.eq.s32.totalorder %s17, 1
      %p98 = scmp.ne.s32.totalorder %s93, %s95
      %p99 = scmp.eq.s32.totalorder %s17, 0
      %p100 = por %p98, %p99
      %p101 = scmp.ne.s32.totalorder %s93, %s95
      %p102 = scmp.eq.s32.totalorder %s22, 1
      %p103 = por %p101, %p102
      %p104 = scmp.ne.s32.totalorder %s95, %s96
      %p105 = scmp.eq.s32.totalorder %s22, 0
      %p106 = por %p104, %p105
      %p107 = scmp.ne.s32.totalorder %s95, %s96
      %p108 = scmp.eq.s32.totalorder %s23, 1
      %p109 = por %p107, %p108
      %p111 = scmp.ne.s32.totalorder %s96, %s110
      %p112 = scmp.eq.s32.totalorder %s23, 0
      %p113 = por %p111, %p112
      %s115 = sadd.s32 %s114, 1
      %p118 = scmp.eq.s32.totalorder %s17, 1
      %p119 = scmp.ne.s32.totalorder %s114, %s116
      %p120 = scmp.eq.s32.totalorder %s17, 0
      %p121 = por %p119, %p120
      %p122 = scmp.ne.s32.totalorder %s114, %s116
      %p123 = scmp.eq.s32.totalorder %s22, 1
      %p124 = por %p122, %p123
      %p125 = scmp.ne.s32.totalorder %s116, %s117
      %p126 = scmp.eq.s32.totalorder %s22, 0
      %p127 = por %p125, %p126
      %p128 = scmp.ne.s32.totalorder %s116, %s117
      %p129 = scmp.eq.s32.totalorder %s23, 1
      %p130 = por %p128, %p129
      %p132 = scmp.ne.s32.totalorder %s117, %s131
      %p133 = scmp.eq.s32.totalorder %s23, 0
      %p134 = por %p132, %p133
      %s136 = sadd.s32 %s135, 1
      %p139 = scmp.eq.s32.totalorder %s17, 1
      %p140 = scmp.ne.s32.totalorder %s135, %s137
      %p141 = scmp.eq.s32.totalorder %s17, 0
      %p142 = por %p140, %p141
      %p143 = scmp.ne.s32.totalorder %s135, %s137
      %p144 = scmp.eq.s32.totalorder %s22, 1
      %p145 = por %p143, %p144
      %p146 = scmp.ne.s32.totalorder %s137, %s138
      %p147 = scmp.eq.s32.totalorder %s22, 0
      %p148 = por %p146, %p147
      %p149 = scmp.ne.s32.totalorder %s137, %s138
      %p150 = scmp.eq.s32.totalorder %s23, 1
      %p151 = por %p149, %p150
      %p153 = scmp.ne.s32.totalorder %s138, %s152
      %p154 = scmp.eq.s32.totalorder %s23, 0
      %p155 = por %p153, %p154
      %s157 = sadd.s32 %s156, 1
      %p160 = scmp.eq.s32.totalorder %s17, 1
      %p161 = scmp.ne.s32.totalorder %s156, %s158
      %p162 = scmp.eq.s32.totalorder %s17, 0
      %p163 = por %p161, %p162
      %p164 = scmp.ne.s32.totalorder %s156, %s158
      %p165 = scmp.eq.s32.totalorder %s22, 1
      %p166 = por %p164, %p165
      %p167 = scmp.ne.s32.totalorder %s158, %s159
      %p168 = scmp.eq.s32.totalorder %s22, 0
      %p169 = por %p167, %p168
      %p170 = scmp.ne.s32.totalorder %s158, %s159
      %p171 = scmp.eq.s32.totalorder %s23, 1
      %p172 = por %p170, %p171
      %p174 = scmp.ne.s32.totalorder %s159, %s173
      %p175 = scmp.eq.s32.totalorder %s23, 0
      %p176 = por %p174, %p175
      %s178 = sadd.s32 %s177, 1
      %p181 = scmp.eq.s32.totalorder %s17, 1
      %p182 = scmp.ne.s32.totalorder %s177, %s179
      %p183 = scmp.eq.s32.totalorder %s17, 0
      %p184 = por %p182, %p183
      %p185 = scmp.ne.s32.totalorder %s177, %s179
      %p186 = scmp.eq.s32.totalorder %s22, 1
      %p187 = por %p185, %p186
      %p188 = scmp.ne.s32.totalorder %s179, %s180
      %p189 = scmp.eq.s32.totalorder %s22, 0
      %p190 = por %p188, %p189
      %p191 = scmp.ne.s32.totalorder %s179, %s180
      %p192 = scmp.eq.s32.totalorder %s23, 1
      %p193 = por %p191, %p192
      %p195 = scmp.ne.s32.totalorder %s180, %s194
      %p196 = scmp.eq.s32.totalorder %s23, 0
      %p197 = por %p195, %p196
      %s198 = ssub.s32 %s17, %s24
      %p199 = scmp.eq.s32.totalorder %s198, 0
      %s201 = sadd.s32 %s200, 1
      %s202 = scalar_select %p199, %s200, %s201
      %p205 = pneg %p199
      %p206 = scmp.eq.s32.totalorder %s17, 1
      %p207 = por %p205, %p206
      %p208 = scmp.ne.s32.totalorder %s200, %s203
      %p209 = scmp.eq.s32.totalorder %s17, 0
      %p210 = por %p208, %p209
      %p211 = scmp.ne.s32.totalorder %s200, %s203
      %p212 = scmp.eq.s32.totalorder %s22, 1
      %p213 = por %p211, %p212
      %p214 = scmp.ne.s32.totalorder %s203, %s204
      %p215 = scmp.eq.s32.totalorder %s22, 0
      %p216 = por %p214, %p215
      %p217 = scmp.ne.s32.totalorder %s203, %s204
      %p218 = scmp.eq.s32.totalorder %s23, 1
      %p219 = por %p217, %p218
      %p221 = scmp.ne.s32.totalorder %s204, %s220
      %p222 = scmp.eq.s32.totalorder %s23, 0
      %p223 = por %p221, %p222
      %p224 = scmp.le.s32.totalorder 1, %s17
      %p225 = scmp.lt.s32.totalorder %s17, 3
      %p226 = pnand %p224, %p225
      %p227 = pneg %p226
      // Predicated region
      $region9: #{tpu_custom_call.1} parent=5 // pred_check
        _
      $region10: #{tpu_custom_call.1} parent=5 // pred_check_branch
        %229 = sbr.rel (%p226) target = $region12
      $region11: #{tpu_custom_call.1} parent=5 // pred_region
        %s230 = ssub.s32 %s17, 1
        // Predicated region
        $region13: #{tpu_custom_call.1} parent=11 // pred_check
          %p231 = pneg %p64
        $region14: #{tpu_custom_call.1} parent=11 // pred_check_branch
          %233 = sbr.rel (%p231) target = $region16
        $region15: #{tpu_custom_call.1} parent=11 // pred_region
          _
        $region16: #{tpu_custom_call.1} parent=11 // pred_fallthru
          _
        // Predicated region
        $region17: #{tpu_custom_call.1} parent=11 // pred_check
          %p234 = pneg %p85
        $region18: #{tpu_custom_call.1} parent=11 // pred_check_branch
          %236 = sbr.rel (%p234) target = $region20
        $region19: #{tpu_custom_call.1} parent=11 // pred_region
          _
        $region20: #{tpu_custom_call.1} parent=11 // pred_fallthru
          _
        // Predicated region
        $region21: #{tpu_custom_call.1} parent=11 // pred_check
          %p237 = pneg %p106
        $region22: #{tpu_custom_call.1} parent=11 // pred_check_branch
          %239 = sbr.rel (%p237) target = $region24
        $region23: #{tpu_custom_call.1} parent=11 // pred_region
          _
        $region24: #{tpu_custom_call.1} parent=11 // pred_fallthru
          _
        // Predicated region
        $region25: #{tpu_custom_call.1} parent=11 // pred_check
          %p240 = pneg %p127
        $region26: #{tpu_custom_call.1} parent=11 // pred_check_branch
          %242 = sbr.rel (%p240) target = $region28
        $region27: #{tpu_custom_call.1} parent=11 // pred_region
          _
        $region28: #{tpu_custom_call.1} parent=11 // pred_fallthru
          _
        // Predicated region
        $region29: #{tpu_custom_call.1} parent=11 // pred_check
          %p243 = pneg %p148
        $region30: #{tpu_custom_call.1} parent=11 // pred_check_branch
          %245 = sbr.rel (%p243) target = $region32
        $region31: #{tpu_custom_call.1} parent=11 // pred_region
          _
        $region32: #{tpu_custom_call.1} parent=11 // pred_fallthru
          _
        // Predicated region
        $region33: #{tpu_custom_call.1} parent=11 // pred_check
          %p246 = pneg %p169
        $region34: #{tpu_custom_call.1} parent=11 // pred_check_branch
          %248 = sbr.rel (%p246) target = $region36
        $region35: #{tpu_custom_call.1} parent=11 // pred_region
          _
        $region36: #{tpu_custom_call.1} parent=11 // pred_fallthru
          _
        // Predicated region
        $region37: #{tpu_custom_call.1} parent=11 // pred_check
          %p249 = pneg %p190
        $region38: #{tpu_custom_call.1} parent=11 // pred_check_branch
          %251 = sbr.rel (%p249) target = $region40
        $region39: #{tpu_custom_call.1} parent=11 // pred_region
          _
        $region40: #{tpu_custom_call.1} parent=11 // pred_fallthru
          _
      $region12: #{tpu_custom_call.1} parent=5 // pred_fallthru
        _
      %p252 = scmp.lt.s32.totalorder %s17, 2
      // Predicated region
      $region41: #{tpu_custom_call.1} parent=5 // pred_check
        %p253 = pneg %p252
      $region42: #{tpu_custom_call.1} parent=5 // pred_check_branch
        %255 = sbr.rel (%p253) target = $region44
      $region43: #{tpu_custom_call.1} parent=5 // pred_region
        // Predicated region
        $region45: #{tpu_custom_call.1} parent=43 // pred_check
          %p256 = pneg %p37
        $region46: #{tpu_custom_call.1} parent=43 // pred_check_branch
          %258 = sbr.rel (%p256) target = $region48
        $region47: #{tpu_custom_call.1} parent=43 // pred_region
          %s259 = smul.u32 4, %s17
          %p260 = scmp.lt.s32.totalorder %s259, 7
          %s261 = scalar_select %p260, %s259, 7
          %s262 = smul.addr %s261, 2
          %s263 = scalar_lea.vmem %s0, %s262
          %s264 = smul.u32 4, %s17
        $region48: #{tpu_custom_call.1} parent=43 // pred_fallthru
          _
      $region44: #{tpu_custom_call.1} parent=5 // pred_fallthru
        _
      %p265 = scmp.le.s32.totalorder 1, %s17
      %p266 = scmp.lt.s32.totalorder %s17, 3
      %p267 = pnand %p265, %p266
      %p268 = pneg %p267
      // Predicated region
      $region49: #{tpu_custom_call.1} parent=5 // pred_check
        _
      $region50: #{tpu_custom_call.1} parent=5 // pred_check_branch
        %270 = sbr.rel (%p267) target = $region52
      $region51: #{tpu_custom_call.1} parent=5 // pred_region
        %s271 = ssub.s32 %s17, 1
        %s272 = smul.u32 4, %s22
        %p273 = scmp.lt.s32.totalorder %s272, 7
        %s274 = scalar_select %p273, %s272, 7
        %s275 = smul.addr %s274, 2
        %s276 = scalar_lea.vmem %s0, %s275
        %p277 = pneg %p43
        %p278 = pneg %p40
        %p279 = pneg %p64
        %p280 = pneg %p61
        %p281 = pneg %p85
        %p282 = pneg %p82
        %p283 = pneg %p106
        %p284 = pneg %p103
        %p285 = pneg %p127
        %p286 = pneg %p124
        %p287 = pneg %p148
        %p288 = pneg %p145
        %p289 = pneg %p169
        %p290 = pneg %p166
        %p291 = pneg %p190
        %p292 = pneg %p187
        %p293 = pneg %p216
        %p294 = pneg %p213
        %s295 = sand.u32 %s203, 1
        %s296 = scalar_lea.sflag [#allocation3], %s295
        %s297 = sand.u32 %s203, 1
        %s298 = smul.addr %s297, 8
        %s299 = scalar_lea.vmem [#allocation2], %s298
        %s300 = smul.u32 4, %s22
        %p301 = scmp.lt.s32.totalorder %s300, 7
        %s302 = scalar_select %p301, %s300, 7
        %s303 = smul.addr %s302, 2
        %s304 = scalar_lea.vmem %s0, %s303
        %s305 = smul.u32 4, %s22
        %s306 = smul.u32 4, %s22
        %v307 = vld [vmem:[%s304] sm:$0x3]
        %v308 = vld [vmem:[%s304 + $0x2] sm:$0x3]
        %v309 = vld [vmem:[%s304 + $0x4] sm:$0x3]
        %v310 = vld [vmem:[%s304 + $0x6] sm:$0x3]
        %v311 = vld [vmem:[%s1] sm:$0x3]
        %v312 = vld [vmem:[%s1 + $0x2] sm:$0x3]
        %v313 = vld [vmem:[%s1 + $0x4] sm:$0x3]
        %v314 = vld [vmem:[%s1 + $0x6] sm:$0x3]
        %v315 = vld [vmem:[%s1 + $0x8] sm:$0x3]
        %v316 = vld [vmem:[%s1 + $0xa] sm:$0x3]
        %v317 = vld [vmem:[%s1 + $0xc] sm:$0x3]
        %v318 = vld [vmem:[%s1 + $0xe] sm:$0x3]
        %v319 = vld [vmem:[%s1 + $0x10] sm:$0x3]
        %v320 = vld [vmem:[%s1 + $0x12] sm:$0x3]
        %v321 = vld [vmem:[%s1 + $0x14] sm:$0x3]
        %v322 = vld [vmem:[%s1 + $0x16] sm:$0x3]
        %v323 = vld [vmem:[%s1 + $0x18] sm:$0x3]
        %v324 = vld [vmem:[%s1 + $0x1a] sm:$0x3]
        %v325 = vld [vmem:[%s1 + $0x1c] sm:$0x3]
        %v326 = vld [vmem:[%s1 + $0x1e] sm:$0x3]
        %v327 = vld [vmem:[%s2] sm:$0x3]
        %v328 = vld [vmem:[%s2 + $0x2] sm:$0x3]
        %v329 = vld [vmem:[%s2 + $0x4] sm:$0x3]
        %v330 = vld [vmem:[%s2 + $0x6] sm:$0x3]
        %v331 = vld [vmem:[%s2 + $0x8] sm:$0x3]
        %v332 = vld [vmem:[%s2 + $0xa] sm:$0x3]
        %v333 = vld [vmem:[%s2 + $0xc] sm:$0x3]
        %v334 = vld [vmem:[%s2 + $0xe] sm:$0x3]
        %v335 = vld [vmem:[%s2 + $0x10] sm:$0x3]
        %v336 = vld [vmem:[%s2 + $0x12] sm:$0x3]
        %v337 = vld [vmem:[%s2 + $0x14] sm:$0x3]
        %v338 = vld [vmem:[%s2 + $0x16] sm:$0x3]
        %v339 = vld [vmem:[%s2 + $0x18] sm:$0x3]
        %v340 = vld [vmem:[%s2 + $0x1a] sm:$0x3]
        %v341 = vld [vmem:[%s2 + $0x1c] sm:$0x3]
        %v342 = vld [vmem:[%s2 + $0x1e] sm:$0x3]
        %v343 = vld [vmem:[%s3] sm:$0x3]
        %v344 = vld [vmem:[%s7] sm:$0x1]
        %v345 = vld [vmem:[%s4] sm:$0xff]
        %v346 = vld [vmem:[%s4 + $0x8] sm:$0xff]
        %v347 = vld [vmem:[%s4 + $0x10] sm:$0xff]
        %v348 = vld [vmem:[%s4 + $0x18] sm:$0xff]
        %v349 = vld [vmem:[%s5] sm:$0x1]
        %v351 = vlaneseq
        %v352 = vshrl.u32 %v351, 7
        %v353 = vsub.s32 0, %v352
        %v354 = vrot.slane %v349, %v353
        %v360 = vrot.slane %v308, 7
        %vm361 = vcmask 1041409
        %v362 = vsel %vm361, %v360, %v307
        %v363 = vrot.slane %v309, 6
        %vm364 = vcmask 1042434
        %v365 = vsel %vm364, %v363, %v362
        %v366 = vrot.slane %v310, 5
        %vm367 = vcmask 1043459
        %v368 = vsel %vm367, %v366, %v365
        %vm369 = vcmask 261120
        %v370 = vsel %vm369, %v368, 0
        %372 = vmatprep.subr.mxu0 0.0
        %373 = vmatpush1.msra.mxu0 0.0
        %374 = vmatprep.subr.mxu0 0.0
        %375 = vmatpush1.msra.mxu0 0.0
        %376 = vmatprep.subr.mxu0 0.0
        %377 = vmatpush1.msra.mxu0 0.0
        %378 = vmatprep.subr.mxu0 0.0
        %379 = vmatpush1.msra.mxu0 0.0
        %380 = vmatprep.subr.mxu0 0.0
        %381 = vmatpush1.msra.mxu0 0.0
        %382 = vmatprep.subr.mxu0 0.0
        %383 = vmatpush1.msra.mxu0 0.0
        %384 = vmatprep.subr.mxu0 0.0
        %385 = vmatpush1.msra.mxu0 0.0
        %386 = vmatprep.subr.mxu0 0.0
        %387 = vmatpush1.msra.mxu0 0.0
        %388 = vmatprep.subr.mxu0 0.0
        %389 = vmatpush1.msra.mxu0 0.0
        %390 = vmatprep.subr.mxu0 0.0
        %391 = vmatpush1.msra.mxu0 0.0
        %392 = vmatprep.subr.mxu0 0.0
        %393 = vmatpush1.msra.mxu0 0.0
        %394 = vmatprep.subr.mxu0 0.0
        %395 = vmatpush1.msra.mxu0 0.0
        %396 = vmatprep.subr.mxu0 0.0
        %397 = vmatpush1.msra.mxu0 %v348
        %398 = vmatprep.subr.mxu0 0.0
        %399 = vmatpush1.msra.mxu0 %v347
        %400 = vmatprep.subr.mxu0 0.0
        %401 = vmatpush1.msra.mxu0 %v346
        %402 = vmatprep.subr.mxu0 0.0
        %403 = vmatpush1.msra.mxu0 %v345
        %404 = vmatprep.subr.mxu0 0.0
        %405 = vmatpush2.msra.mxu0 0.0
        %406 = vmatprep.subr.mxu0 0.0
        %407 = vmatpush2.msra.mxu0 0.0
        %408 = vmatprep.subr.mxu0 0.0
        %409 = vmatpush2.msra.mxu0 0.0
        %410 = vmatprep.subr.mxu0 0.0
        %411 = vmatpush2.msra.mxu0 0.0
        %412 = vmatprep.subr.mxu0 0.0
        %413 = vmatpush2.msra.mxu0 0.0
        %414 = vmatprep.subr.mxu0 0.0
        %415 = vmatpush2.msra.mxu0 0.0
        %416 = vmatprep.subr.mxu0 0.0
        %417 = vmatpush2.msra.mxu0 0.0
        %418 = vmatprep.subr.mxu0 0.0
        %419 = vmatpush2.msra.mxu0 0.0
        %420 = vmatprep.subr.mxu0 0.0
        %421 = vmatpush2.msra.mxu0 0.0
        %422 = vmatprep.subr.mxu0 0.0
        %423 = vmatpush2.msra.mxu0 0.0
        %424 = vmatprep.subr.mxu0 0.0
        %425 = vmatpush2.msra.mxu0 0.0
        %426 = vmatprep.subr.mxu0 0.0
        %427 = vmatpush2.msra.mxu0 0.0
        %428 = vmatprep.subr.mxu0 0.0
        %429 = vmatpush2.msra.mxu0 0.0
        %430 = vmatprep.subr.mxu0 0.0
        %431 = vmatpush2.msra.mxu0 0.0
        %432 = vmatprep.subr.mxu0 0.0
        %433 = vmatpush2.msra.mxu0 0.0
        %434 = vmatprep.subr.mxu0 0.0
        %435 = vmatpush2.msra.mxu0 0.0
        %436 = vmatprep.mubr.f32.mxu0 0.0
        %437 = vmatmul.mubr.f32.gmra.mxu0 %v370
        %v438 = vpop.f32.mrf.mxu0
        %v439 = vadd.f32 %v354, %v438
        %v440 = vpop.f32.mrf.mxu0
        %441 = vdwg.mxu0
        %s442 = scalar_lea.vmem %s4, 128
        %v443 = vld [vmem:[%s442] sm:$0xff]
        %v444 = vld [vmem:[%s442 + $0x8] sm:$0xff]
        %v445 = vld [vmem:[%s442 + $0x10] sm:$0xff]
        %v446 = vld [vmem:[%s442 + $0x18] sm:$0xff]
        %s447 = scalar_lea.vmem %s5, 4
        %v448 = vld [vmem:[%s447] sm:$0x1]
        %v450 = vlaneseq
        %v451 = vshrl.u32 %v450, 7
        %v452 = vsub.s32 0, %v451
        %v453 = vrot.slane %v448, %v452
        %v471 = vrot.slane %v312, 7
        %v472 = vsel %vm361, %v471, %v311
        %v473 = vrot.slane %v313, 6
        %v474 = vsel %vm364, %v473, %v472
        %v475 = vrot.slane %v314, 5
        %v476 = vsel %vm367, %v475, %v474
        %v477 = vrot.slane %v315, 4
        %vm478 = vcmask 1044484
        %v479 = vsel %vm478, %v477, %v476
        %v480 = vrot.slane %v316, 3
        %vm481 = vcmask 1045509
        %v482 = vsel %vm481, %v480, %v479
        %v483 = vrot.slane %v317, 2
        %vm484 = vcmask 1046534
        %v485 = vsel %vm484, %v483, %v482
        %v486 = vrot.slane %v318, 1
        %vm487 = vcmask 1047559
        %v488 = vsel %vm487, %v486, %v485
        %v489 = vrot.slane %v320, 7
        %v490 = vsel %vm361, %v489, %v319
        %v491 = vrot.slane %v321, 6
        %v492 = vsel %vm364, %v491, %v490
        %v493 = vrot.slane %v322, 5
        %v494 = vsel %vm367, %v493, %v492
        %v495 = vrot.slane %v323, 4
        %v496 = vsel %vm478, %v495, %v494
        %v497 = vrot.slane %v324, 3
        %v498 = vsel %vm481, %v497, %v496
        %v499 = vrot.slane %v325, 2
        %v500 = vsel %vm484, %v499, %v498
        %v501 = vrot.slane %v326, 1
        %v502 = vsel %vm487, %v501, %v500
        %v503 = vsel %vm369, %v488, 0
        %v505 = vsel %vm369, %v502, 0
        %507 = vmatprep.subr.mxu0 0.0
        %508 = vmatpush1.msra.mxu0 0.0
        %509 = vmatprep.subr.mxu0 0.0
        %510 = vmatpush1.msra.mxu0 0.0
        %511 = vmatprep.subr.mxu0 0.0
        %512 = vmatpush1.msra.mxu0 0.0
        %513 = vmatprep.subr.mxu0 0.0
        %514 = vmatpush1.msra.mxu0 0.0
        %515 = vmatprep.subr.mxu0 0.0
        %516 = vmatpush1.msra.mxu0 0.0
        %517 = vmatprep.subr.mxu0 0.0
        %518 = vmatpush1.msra.mxu0 0.0
        %519 = vmatprep.subr.mxu0 0.0
        %520 = vmatpush1.msra.mxu0 0.0
        %521 = vmatprep.subr.mxu0 0.0
        %522 = vmatpush1.msra.mxu0 0.0
        %523 = vmatprep.subr.mxu0 0.0
        %524 = vmatpush1.msra.mxu0 0.0
        %525 = vmatprep.subr.mxu0 0.0
        %526 = vmatpush1.msra.mxu0 0.0
        %527 = vmatprep.subr.mxu0 0.0
        %528 = vmatpush1.msra.mxu0 0.0
        %529 = vmatprep.subr.mxu0 0.0
        %530 = vmatpush1.msra.mxu0 0.0
        %531 = vmatprep.subr.mxu0 0.0
        %532 = vmatpush1.msra.mxu0 %v446
        %533 = vmatprep.subr.mxu0 0.0
        %534 = vmatpush1.msra.mxu0 %v445
        %535 = vmatprep.subr.mxu0 0.0
        %536 = vmatpush1.msra.mxu0 %v444
        %537 = vmatprep.subr.mxu0 0.0
        %538 = vmatpush1.msra.mxu0 %v443
        %539 = vmatprep.subr.mxu0 0.0
        %540 = vmatpush2.msra.mxu0 0.0
        %541 = vmatprep.subr.mxu0 0.0
        %542 = vmatpush2.msra.mxu0 0.0
        %543 = vmatprep.subr.mxu0 0.0
        %544 = vmatpush2.msra.mxu0 0.0
        %545 = vmatprep.subr.mxu0 0.0
        %546 = vmatpush2.msra.mxu0 0.0
        %547 = vmatprep.subr.mxu0 0.0
        %548 = vmatpush2.msra.mxu0 0.0
        %549 = vmatprep.subr.mxu0 0.0
        %550 = vmatpush2.msra.mxu0 0.0
        %551 = vmatprep.subr.mxu0 0.0
        %552 = vmatpush2.msra.mxu0 0.0
        %553 = vmatprep.subr.mxu0 0.0
        %554 = vmatpush2.msra.mxu0 0.0
        %555 = vmatprep.subr.mxu0 0.0
        %556 = vmatpush2.msra.mxu0 0.0
        %557 = vmatprep.subr.mxu0 0.0
        %558 = vmatpush2.msra.mxu0 0.0
        %559 = vmatprep.subr.mxu0 0.0
        %560 = vmatpush2.msra.mxu0 0.0
        %561 = vmatprep.subr.mxu0 0.0
        %562 = vmatpush2.msra.mxu0 0.0
        %563 = vmatprep.subr.mxu0 0.0
        %564 = vmatpush2.msra.mxu0 0.0
        %565 = vmatprep.subr.mxu0 0.0
        %566 = vmatpush2.msra.mxu0 0.0
        %567 = vmatprep.subr.mxu0 0.0
        %568 = vmatpush2.msra.mxu0 0.0
        %569 = vmatprep.subr.mxu0 0.0
        %570 = vmatpush2.msra.mxu0 0.0
        %571 = vmatprep.mubr.f32.mxu0 0.0
        %572 = vmatmul.mubr.f32.gmra.mxu0 %v503
        %v573 = vpop.f32.mrf.mxu0
        %v574 = vadd.f32 %v453, %v573
        %v575 = vpop.f32.mrf.mxu0
        %576 = vmatprep.mubr.f32.mxu0 0.0
        %577 = vmatmul.mubr.f32.gmra.mxu0 %v505
        %v578 = vpop.f32.mrf.mxu0
        %v579 = vadd.f32 %v453, %v578
        %v580 = vpop.f32.mrf.mxu0
        %581 = vdwg.mxu0
        %s582 = scalar_lea.vmem %s4, 256
        %v583 = vld [vmem:[%s582] sm:$0xff]
        %v584 = vld [vmem:[%s582 + $0x8] sm:$0xff]
        %v585 = vld [vmem:[%s582 + $0x10] sm:$0xff]
        %v586 = vld [vmem:[%s582 + $0x18] sm:$0xff]
        %s587 = scalar_lea.vmem %s5, 8
        %v588 = vld [vmem:[%s587] sm:$0x1]
        %v590 = vlaneseq
        %v591 = vshrl.u32 %v590, 7
        %v592 = vsub.s32 0, %v591
        %v593 = vrot.slane %v588, %v592
        %v611 = vrot.slane %v328, 7
        %v612 = vsel %vm361, %v611, %v327
        %v613 = vrot.slane %v329, 6
        %v614 = vsel %vm364, %v613, %v612
        %v615 = vrot.slane %v330, 5
        %v616 = vsel %vm367, %v615, %v614
        %v617 = vrot.slane %v331, 4
        %v618 = vsel %vm478, %v617, %v616
        %v619 = vrot.slane %v332, 3
        %v620 = vsel %vm481, %v619, %v618
        %v621 = vrot.slane %v333, 2
        %v622 = vsel %vm484, %v621, %v620
        %v623 = vrot.slane %v334, 1
        %v624 = vsel %vm487, %v623, %v622
        %v625 = vrot.slane %v336, 7
        %v626 = vsel %vm361, %v625, %v335
        %v627 = vrot.slane %v337, 6
        %v628 = vsel %vm364, %v627, %v626
        %v629 = vrot.slane %v338, 5
        %v630 = vsel %vm367, %v629, %v628
        %v631 = vrot.slane %v339, 4
        %v632 = vsel %vm478, %v631, %v630
        %v633 = vrot.slane %v340, 3
        %v634 = vsel %vm481, %v633, %v632
        %v635 = vrot.slane %v341, 2
        %v636 = vsel %vm484, %v635, %v634
        %v637 = vrot.slane %v342, 1
        %v638 = vsel %vm487, %v637, %v636
        %v639 = vsel %vm369, %v624, 0
        %v641 = vsel %vm369, %v638, 0
        %643 = vmatprep.subr.mxu0 0.0
        %644 = vmatpush1.msra.mxu0 0.0
        %645 = vmatprep.subr.mxu0 0.0
        %646 = vmatpush1.msra.mxu0 0.0
        %647 = vmatprep.subr.mxu0 0.0
        %648 = vmatpush1.msra.mxu0 0.0
        %649 = vmatprep.subr.mxu0 0.0
        %650 = vmatpush1.msra.mxu0 0.0
        %651 = vmatprep.subr.mxu0 0.0
        %652 = vmatpush1.msra.mxu0 0.0
        %653 = vmatprep.subr.mxu0 0.0
        %654 = vmatpush1.msra.mxu0 0.0
        %655 = vmatprep.subr.mxu0 0.0
        %656 = vmatpush1.msra.mxu0 0.0
        %657 = vmatprep.subr.mxu0 0.0
        %658 = vmatpush1.msra.mxu0 0.0
        %659 = vmatprep.subr.mxu0 0.0
        %660 = vmatpush1.msra.mxu0 0.0
        %661 = vmatprep.subr.mxu0 0.0
        %662 = vmatpush1.msra.mxu0 0.0
        %663 = vmatprep.subr.mxu0 0.0
        %664 = vmatpush1.msra.mxu0 0.0
        %665 = vmatprep.subr.mxu0 0.0
        %666 = vmatpush1.msra.mxu0 0.0
        %667 = vmatprep.subr.mxu0 0.0
        %668 = vmatpush1.msra.mxu0 %v586
        %669 = vmatprep.subr.mxu0 0.0
        %670 = vmatpush1.msra.mxu0 %v585
        %671 = vmatprep.subr.mxu0 0.0
        %672 = vmatpush1.msra.mxu0 %v584
        %673 = vmatprep.subr.mxu0 0.0
        %674 = vmatpush1.msra.mxu0 %v583
        %675 = vmatprep.subr.mxu0 0.0
        %676 = vmatpush2.msra.mxu0 0.0
        %677 = vmatprep.subr.mxu0 0.0
        %678 = vmatpush2.msra.mxu0 0.0
        %679 = vmatprep.subr.mxu0 0.0
        %680 = vmatpush2.msra.mxu0 0.0
        %681 = vmatprep.subr.mxu0 0.0
        %682 = vmatpush2.msra.mxu0 0.0
        %683 = vmatprep.subr.mxu0 0.0
        %684 = vmatpush2.msra.mxu0 0.0
        %685 = vmatprep.subr.mxu0 0.0
        %686 = vmatpush2.msra.mxu0 0.0
        %687 = vmatprep.subr.mxu0 0.0
        %688 = vmatpush2.msra.mxu0 0.0
        %689 = vmatprep.subr.mxu0 0.0
        %690 = vmatpush2.msra.mxu0 0.0
        %691 = vmatprep.subr.mxu0 0.0
        %692 = vmatpush2.msra.mxu0 0.0
        %693 = vmatprep.subr.mxu0 0.0
        %694 = vmatpush2.msra.mxu0 0.0
        %695 = vmatprep.subr.mxu0 0.0
        %696 = vmatpush2.msra.mxu0 0.0
        %697 = vmatprep.subr.mxu0 0.0
        %698 = vmatpush2.msra.mxu0 0.0
        %699 = vmatprep.subr.mxu0 0.0
        %700 = vmatpush2.msra.mxu0 0.0
        %701 = vmatprep.subr.mxu0 0.0
        %702 = vmatpush2.msra.mxu0 0.0
        %703 = vmatprep.subr.mxu0 0.0
        %704 = vmatpush2.msra.mxu0 0.0
        %705 = vmatprep.subr.mxu0 0.0
        %706 = vmatpush2.msra.mxu0 0.0
        %707 = vmatprep.mubr.f32.mxu0 0.0
        %708 = vmatmul.mubr.f32.gmra.mxu0 %v639
        %v709 = vpop.f32.mrf.mxu0
        %v710 = vadd.f32 %v593, %v709
        %v711 = vpop.f32.mrf.mxu0
        %712 = vmatprep.mubr.f32.mxu0 0.0
        %713 = vmatmul.mubr.f32.gmra.mxu0 %v641
        %v714 = vpop.f32.mrf.mxu0
        %v715 = vadd.f32 %v593, %v714
        %v716 = vpop.f32.mrf.mxu0
        %717 = vdwg.mxu0
        %v718 = vlaneseq
        %v719 = vshrl.u32 %v718, 7
        %v720 = vsub.s32 0, %v719
        %v721 = vrot.slane %v343, %v720
        %vm722 = vcmask 64512
        %v724 = vsel %vm722, %v439, 0
        %v727 = vsel %vm722, %v574, 0
        %v730 = vsel %vm722, %v579, 0
        %732 = vmatprep.subr.mxu0 0.0
        %733 = vmatpush1.xpose.msra.mxu0 0.0
        %734 = vmatprep.subr.mxu0 0.0
        %735 = vmatpush1.xpose.msra.mxu0 0.0
        %736 = vmatprep.subr.mxu0 0.0
        %737 = vmatpush1.xpose.msra.mxu0 0.0
        %738 = vmatprep.subr.mxu0 0.0
        %739 = vmatpush1.xpose.msra.mxu0 0.0
        %740 = vmatprep.subr.mxu0 0.0
        %741 = vmatpush1.xpose.msra.mxu0 0.0
        %742 = vmatprep.subr.mxu0 0.0
        %743 = vmatpush1.xpose.msra.mxu0 0.0
        %744 = vmatprep.subr.mxu0 0.0
        %745 = vmatpush1.xpose.msra.mxu0 0.0
        %746 = vmatprep.subr.mxu0 0.0
        %747 = vmatpush1.xpose.msra.mxu0 0.0
        %748 = vmatprep.subr.mxu0 0.0
        %749 = vmatpush1.xpose.msra.mxu0 0.0
        %750 = vmatprep.subr.mxu0 0.0
        %751 = vmatpush1.xpose.msra.mxu0 0.0
        %752 = vmatprep.subr.mxu0 0.0
        %753 = vmatpush1.xpose.msra.mxu0 0.0
        %754 = vmatprep.subr.mxu0 0.0
        %755 = vmatpush1.xpose.msra.mxu0 0.0
        %756 = vmatprep.subr.mxu0 0.0
        %757 = vmatpush1.xpose.msra.mxu0 0.0
        %758 = vmatprep.subr.mxu0 0.0
        %759 = vmatpush1.xpose.msra.mxu0 0.0
        %760 = vmatprep.subr.mxu0 0.0
        %761 = vmatpush1.xpose.msra.mxu0 %v730
        %762 = vmatprep.subr.mxu0 0.0
        %763 = vmatpush1.xpose.msra.mxu0 %v727
        %764 = vmatprep.subr.mxu0 0.0
        %765 = vmatpush2.xpose.msra.mxu0 0.0
        %766 = vmatprep.subr.mxu0 0.0
        %767 = vmatpush2.xpose.msra.mxu0 0.0
        %768 = vmatprep.subr.mxu0 0.0
        %769 = vmatpush2.xpose.msra.mxu0 0.0
        %770 = vmatprep.subr.mxu0 0.0
        %771 = vmatpush2.xpose.msra.mxu0 0.0
        %772 = vmatprep.subr.mxu0 0.0
        %773 = vmatpush2.xpose.msra.mxu0 0.0
        %774 = vmatprep.subr.mxu0 0.0
        %775 = vmatpush2.xpose.msra.mxu0 0.0
        %776 = vmatprep.subr.mxu0 0.0
        %777 = vmatpush2.xpose.msra.mxu0 0.0
        %778 = vmatprep.subr.mxu0 0.0
        %779 = vmatpush2.xpose.msra.mxu0 0.0
        %780 = vmatprep.subr.mxu0 0.0
        %781 = vmatpush2.xpose.msra.mxu0 0.0
        %782 = vmatprep.subr.mxu0 0.0
        %783 = vmatpush2.xpose.msra.mxu0 0.0
        %784 = vmatprep.subr.mxu0 0.0
        %785 = vmatpush2.xpose.msra.mxu0 0.0
        %786 = vmatprep.subr.mxu0 0.0
        %787 = vmatpush2.xpose.msra.mxu0 0.0
        %788 = vmatprep.subr.mxu0 0.0
        %789 = vmatpush2.xpose.msra.mxu0 0.0
        %790 = vmatprep.subr.mxu0 0.0
        %791 = vmatpush2.xpose.msra.mxu0 0.0
        %792 = vmatprep.subr.mxu0 0.0
        %793 = vmatpush2.xpose.msra.mxu0 0.0
        %794 = vmatprep.subr.mxu0 0.0
        %795 = vmatpush2.xpose.msra.mxu0 0.0
        %796 = vmatprep.mubr.f32.mxu0 0.0
        %797 = vmatmul.mubr.f32.gmra.mxu0 %v724
        %v798 = vpop.f32.mrf.mxu0
        %v799 = vadd.f32 %v721, %v798
        %v800 = vpop.f32.mrf.mxu0
        %801 = vdwg.mxu0
        %vm802 = vcmask 125952
        %v803 = vsel %vm802, %v799, -inf
        %804 = vmax.xlane.f32.xlu0 %v803
        %v805 = vpop.xlane.xlu0 %804
        %v806 = vsub.f32 %v799, %v805
        %v807 = vmul.f32 %v806, 1.442695
        %v808 = vpow.pop %v807
        %v809 = vsel %vm802, %v808, 0.0
        %810 = vadd.xlane.f32.xlu0 %v809
        %v811 = vpop.xlane.xlu0 %810
        %v812 = vrcp.pop %v811
        %v813 = vmul.f32 %v808, %v812
        %vm814 = vcmask 130048
        %v816 = vsel %vm814, %v813, 0
        %818 = vmatprep.subr.mxu0 0.0
        %819 = vmatpush1.msra.mxu0 0.0
        %820 = vmatprep.subr.mxu0 0.0
        %821 = vmatpush1.msra.mxu0 0.0
        %822 = vmatprep.subr.mxu0 0.0
        %823 = vmatpush1.msra.mxu0 0.0
        %824 = vmatprep.subr.mxu0 0.0
        %825 = vmatpush1.msra.mxu0 0.0
        %826 = vmatprep.subr.mxu0 0.0
        %827 = vmatpush1.msra.mxu0 0.0
        %828 = vmatprep.subr.mxu0 0.0
        %829 = vmatpush1.msra.mxu0 0.0
        %830 = vmatprep.subr.mxu0 0.0
        %831 = vmatpush1.msra.mxu0 0.0
        %832 = vmatprep.subr.mxu0 0.0
        %833 = vmatpush1.msra.mxu0 0.0
        %834 = vmatprep.subr.mxu0 0.0
        %835 = vmatpush1.msra.mxu0 0.0
        %836 = vmatprep.subr.mxu0 0.0
        %837 = vmatpush1.msra.mxu0 0.0
        %838 = vmatprep.subr.mxu0 0.0
        %839 = vmatpush1.msra.mxu0 0.0
        %840 = vmatprep.subr.mxu0 0.0
        %841 = vmatpush1.msra.mxu0 0.0
        %842 = vmatprep.subr.mxu0 0.0
        %843 = vmatpush1.msra.mxu0 0.0
        %844 = vmatprep.subr.mxu0 0.0
        %845 = vmatpush1.msra.mxu0 0.0
        %846 = vmatprep.subr.mxu0 0.0
        %847 = vmatpush1.msra.mxu0 %v715
        %848 = vmatprep.subr.mxu0 0.0
        %849 = vmatpush1.msra.mxu0 %v710
        %850 = vmatprep.subr.mxu0 0.0
        %851 = vmatpush2.msra.mxu0 0.0
        %852 = vmatprep.subr.mxu0 0.0
        %853 = vmatpush2.msra.mxu0 0.0
        %854 = vmatprep.subr.mxu0 0.0
        %855 = vmatpush2.msra.mxu0 0.0
        %856 = vmatprep.subr.mxu0 0.0
        %857 = vmatpush2.msra.mxu0 0.0
        %858 = vmatprep.subr.mxu0 0.0
        %859 = vmatpush2.msra.mxu0 0.0
        %860 = vmatprep.subr.mxu0 0.0
        %861 = vmatpush2.msra.mxu0 0.0
        %862 = vmatprep.subr.mxu0 0.0
        %863 = vmatpush2.msra.mxu0 0.0
        %864 = vmatprep.subr.mxu0 0.0
        %865 = vmatpush2.msra.mxu0 0.0
        %866 = vmatprep.subr.mxu0 0.0
        %867 = vmatpush2.msra.mxu0 0.0
        %868 = vmatprep.subr.mxu0 0.0
        %869 = vmatpush2.msra.mxu0 0.0
        %870 = vmatprep.subr.mxu0 0.0
        %871 = vmatpush2.msra.mxu0 0.0
        %872 = vmatprep.subr.mxu0 0.0
        %873 = vmatpush2.msra.mxu0 0.0
        %874 = vmatprep.subr.mxu0 0.0
        %875 = vmatpush2.msra.mxu0 0.0
        %876 = vmatprep.subr.mxu0 0.0
        %877 = vmatpush2.msra.mxu0 0.0
        %878 = vmatprep.subr.mxu0 0.0
        %879 = vmatpush2.msra.mxu0 0.0
        %880 = vmatprep.subr.mxu0 0.0
        %881 = vmatpush2.msra.mxu0 0.0
        %882 = vmatprep.mubr.f32.mxu0 0.0
        %883 = vmatmul.mubr.f32.gmra.mxu0 %v816
        %v884 = vpop.f32.mrf.mxu0
        %v885 = vadd.f32 0.0, %v884
        %v886 = vpop.f32.mrf.mxu0
        %887 = vdwg.mxu0
        %v888 = vld [vmem:[%s6] sm:$0xff]
        %s889 = scalar_lea.vmem %s4, 32
        %v890 = vld [vmem:[%s889] sm:$0xff]
        %v891 = vld [vmem:[%s889 + $0x8] sm:$0xff]
        %v892 = vld [vmem:[%s889 + $0x10] sm:$0xff]
        %v893 = vld [vmem:[%s889 + $0x18] sm:$0xff]
        %s894 = scalar_lea.vmem %s5, 1
        %v895 = vld [vmem:[%s894] sm:$0x1]
        %v897 = vlaneseq
        %v898 = vshrl.u32 %v897, 7
        %v899 = vsub.s32 0, %v898
        %v900 = vrot.slane %v895, %v899
        %902 = vmatprep.subr.mxu0 0.0
        %903 = vmatpush1.msra.mxu0 0.0
        %904 = vmatprep.subr.mxu0 0.0
        %905 = vmatpush1.msra.mxu0 0.0
        %906 = vmatprep.subr.mxu0 0.0
        %907 = vmatpush1.msra.mxu0 0.0
        %908 = vmatprep.subr.mxu0 0.0
        %909 = vmatpush1.msra.mxu0 0.0
        %910 = vmatprep.subr.mxu0 0.0
        %911 = vmatpush1.msra.mxu0 0.0
        %912 = vmatprep.subr.mxu0 0.0
        %913 = vmatpush1.msra.mxu0 0.0
        %914 = vmatprep.subr.mxu0 0.0
        %915 = vmatpush1.msra.mxu0 0.0
        %916 = vmatprep.subr.mxu0 0.0
        %917 = vmatpush1.msra.mxu0 0.0
        %918 = vmatprep.subr.mxu0 0.0
        %919 = vmatpush1.msra.mxu0 0.0
        %920 = vmatprep.subr.mxu0 0.0
        %921 = vmatpush1.msra.mxu0 0.0
        %922 = vmatprep.subr.mxu0 0.0
        %923 = vmatpush1.msra.mxu0 0.0
        %924 = vmatprep.subr.mxu0 0.0
        %925 = vmatpush1.msra.mxu0 0.0
        %926 = vmatprep.subr.mxu0 0.0
        %927 = vmatpush1.msra.mxu0 %v893
        %928 = vmatprep.subr.mxu0 0.0
        %929 = vmatpush1.msra.mxu0 %v892
        %930 = vmatprep.subr.mxu0 0.0
        %931 = vmatpush1.msra.mxu0 %v891
        %932 = vmatprep.subr.mxu0 0.0
        %933 = vmatpush1.msra.mxu0 %v890
        %934 = vmatprep.subr.mxu0 0.0
        %935 = vmatpush2.msra.mxu0 0.0
        %936 = vmatprep.subr.mxu0 0.0
        %937 = vmatpush2.msra.mxu0 0.0
        %938 = vmatprep.subr.mxu0 0.0
        %939 = vmatpush2.msra.mxu0 0.0
        %940 = vmatprep.subr.mxu0 0.0
        %941 = vmatpush2.msra.mxu0 0.0
        %942 = vmatprep.subr.mxu0 0.0
        %943 = vmatpush2.msra.mxu0 0.0
        %944 = vmatprep.subr.mxu0 0.0
        %945 = vmatpush2.msra.mxu0 0.0
        %946 = vmatprep.subr.mxu0 0.0
        %947 = vmatpush2.msra.mxu0 0.0
        %948 = vmatprep.subr.mxu0 0.0
        %949 = vmatpush2.msra.mxu0 0.0
        %950 = vmatprep.subr.mxu0 0.0
        %951 = vmatpush2.msra.mxu0 0.0
        %952 = vmatprep.subr.mxu0 0.0
        %953 = vmatpush2.msra.mxu0 0.0
        %954 = vmatprep.subr.mxu0 0.0
        %955 = vmatpush2.msra.mxu0 0.0
        %956 = vmatprep.subr.mxu0 0.0
        %957 = vmatpush2.msra.mxu0 0.0
        %958 = vmatprep.subr.mxu0 0.0
        %959 = vmatpush2.msra.mxu0 0.0
        %960 = vmatprep.subr.mxu0 0.0
        %961 = vmatpush2.msra.mxu0 0.0
        %962 = vmatprep.subr.mxu0 0.0
        %963 = vmatpush2.msra.mxu0 0.0
        %964 = vmatprep.subr.mxu0 0.0
        %965 = vmatpush2.msra.mxu0 0.0
        %966 = vmatprep.mubr.f32.mxu0 0.0
        %967 = vmatmul.mubr.f32.gmra.mxu0 %v370
        %v968 = vpop.f32.mrf.mxu0
        %v969 = vadd.f32 %v900, %v968
        %v970 = vpop.f32.mrf.mxu0
        %971 = vdwg.mxu0
        %s972 = scalar_lea.vmem %s4, 160
        %v973 = vld [vmem:[%s972] sm:$0xff]
        %v974 = vld [vmem:[%s972 + $0x8] sm:$0xff]
        %v975 = vld [vmem:[%s972 + $0x10] sm:$0xff]
        %v976 = vld [vmem:[%s972 + $0x18] sm:$0xff]
        %s977 = scalar_lea.vmem %s5, 5
        %v978 = vld [vmem:[%s977] sm:$0x1]
        %v980 = vlaneseq
        %v981 = vshrl.u32 %v980, 7
        %v982 = vsub.s32 0, %v981
        %v983 = vrot.slane %v978, %v982
        %985 = vmatprep.subr.mxu0 0.0
        %986 = vmatpush1.msra.mxu0 0.0
        %987 = vmatprep.subr.mxu0 0.0
        %988 = vmatpush1.msra.mxu0 0.0
        %989 = vmatprep.subr.mxu0 0.0
        %990 = vmatpush1.msra.mxu0 0.0
        %991 = vmatprep.subr.mxu0 0.0
        %992 = vmatpush1.msra.mxu0 0.0
        %993 = vmatprep.subr.mxu0 0.0
        %994 = vmatpush1.msra.mxu0 0.0
        %995 = vmatprep.subr.mxu0 0.0
        %996 = vmatpush1.msra.mxu0 0.0
        %997 = vmatprep.subr.mxu0 0.0
        %998 = vmatpush1.msra.mxu0 0.0
        %999 = vmatprep.subr.mxu0 0.0
        %1000 = vmatpush1.msra.mxu0 0.0
        %1001 = vmatprep.subr.mxu0 0.0
        %1002 = vmatpush1.msra.mxu0 0.0
        %1003 = vmatprep.subr.mxu0 0.0
        %1004 = vmatpush1.msra.mxu0 0.0
        %1005 = vmatprep.subr.mxu0 0.0
        %1006 = vmatpush1.msra.mxu0 0.0
        %1007 = vmatprep.subr.mxu0 0.0
        %1008 = vmatpush1.msra.mxu0 0.0
        %1009 = vmatprep.subr.mxu0 0.0
        %1010 = vmatpush1.msra.mxu0 %v976
        %1011 = vmatprep.subr.mxu0 0.0
        %1012 = vmatpush1.msra.mxu0 %v975
        %1013 = vmatprep.subr.mxu0 0.0
        %1014 = vmatpush1.msra.mxu0 %v974
        %1015 = vmatprep.subr.mxu0 0.0
        %1016 = vmatpush1.msra.mxu0 %v973
        %1017 = vmatprep.subr.mxu0 0.0
        %1018 = vmatpush2.msra.mxu0 0.0
        %1019 = vmatprep.subr.mxu0 0.0
        %1020 = vmatpush2.msra.mxu0 0.0
        %1021 = vmatprep.subr.mxu0 0.0
        %1022 = vmatpush2.msra.mxu0 0.0
        %1023 = vmatprep.subr.mxu0 0.0
        %1024 = vmatpush2.msra.mxu0 0.0
        %1025 = vmatprep.subr.mxu0 0.0
        %1026 = vmatpush2.msra.mxu0 0.0
        %1027 = vmatprep.subr.mxu0 0.0
        %1028 = vmatpush2.msra.mxu0 0.0
        %1029 = vmatprep.subr.mxu0 0.0
        %1030 = vmatpush2.msra.mxu0 0.0
        %1031 = vmatprep.subr.mxu0 0.0
        %1032 = vmatpush2.msra.mxu0 0.0
        %1033 = vmatprep.subr.mxu0 0.0
        %1034 = vmatpush2.msra.mxu0 0.0
        %1035 = vmatprep.subr.mxu0 0.0
        %1036 = vmatpush2.msra.mxu0 0.0
        %1037 = vmatprep.subr.mxu0 0.0
        %1038 = vmatpush2.msra.mxu0 0.0
        %1039 = vmatprep.subr.mxu0 0.0
        %1040 = vmatpush2.msra.mxu0 0.0
        %1041 = vmatprep.subr.mxu0 0.0
        %1042 = vmatpush2.msra.mxu0 0.0
        %1043 = vmatprep.subr.mxu0 0.0
        %1044 = vmatpush2.msra.mxu0 0.0
        %1045 = vmatprep.subr.mxu0 0.0
        %1046 = vmatpush2.msra.mxu0 0.0
        %1047 = vmatprep.subr.mxu0 0.0
        %1048 = vmatpush2.msra.mxu0 0.0
        %1049 = vmatprep.mubr.f32.mxu0 0.0
        %1050 = vmatmul.mubr.f32.gmra.mxu0 %v503
        %v1051 = vpop.f32.mrf.mxu0
        %v1052 = vadd.f32 %v983, %v1051
        %v1053 = vpop.f32.mrf.mxu0
        %1054 = vmatprep.mubr.f32.mxu0 0.0
        %1055 = vmatmul.mubr.f32.gmra.mxu0 %v505
        %v1056 = vpop.f32.mrf.mxu0
        %v1057 = vadd.f32 %v983, %v1056
        %v1058 = vpop.f32.mrf.mxu0
        %1059 = vdwg.mxu0
        %s1060 = scalar_lea.vmem %s4, 288
        %v1061 = vld [vmem:[%s1060] sm:$0xff]
        %v1062 = vld [vmem:[%s1060 + $0x8] sm:$0xff]
        %v1063 = vld [vmem:[%s1060 + $0x10] sm:$0xff]
        %v1064 = vld [vmem:[%s1060 + $0x18] sm:$0xff]
        %s1065 = scalar_lea.vmem %s5, 9
        %v1066 = vld [vmem:[%s1065] sm:$0x1]
        %v1068 = vlaneseq
        %v1069 = vshrl.u32 %v1068, 7
        %v1070 = vsub.s32 0, %v1069
        %v1071 = vrot.slane %v1066, %v1070
        %1073 = vmatprep.subr.mxu0 0.0
        %1074 = vmatpush1.msra.mxu0 0.0
        %1075 = vmatprep.subr.mxu0 0.0
        %1076 = vmatpush1.msra.mxu0 0.0
        %1077 = vmatprep.subr.mxu0 0.0
        %1078 = vmatpush1.msra.mxu0 0.0
        %1079 = vmatprep.subr.mxu0 0.0
        %1080 = vmatpush1.msra.mxu0 0.0
        %1081 = vmatprep.subr.mxu0 0.0
        %1082 = vmatpush1.msra.mxu0 0.0
        %1083 = vmatprep.subr.mxu0 0.0
        %1084 = vmatpush1.msra.mxu0 0.0
        %1085 = vmatprep.subr.mxu0 0.0
        %1086 = vmatpush1.msra.mxu0 0.0
        %1087 = vmatprep.subr.mxu0 0.0
        %1088 = vmatpush1.msra.mxu0 0.0
        %1089 = vmatprep.subr.mxu0 0.0
        %1090 = vmatpush1.msra.mxu0 0.0
        %1091 = vmatprep.subr.mxu0 0.0
        %1092 = vmatpush1.msra.mxu0 0.0
        %1093 = vmatprep.subr.mxu0 0.0
        %1094 = vmatpush1.msra.mxu0 0.0
        %1095 = vmatprep.subr.mxu0 0.0
        %1096 = vmatpush1.msra.mxu0 0.0
        %1097 = vmatprep.subr.mxu0 0.0
        %1098 = vmatpush1.msra.mxu0 %v1064
        %1099 = vmatprep.subr.mxu0 0.0
        %1100 = vmatpush1.msra.mxu0 %v1063
        %1101 = vmatprep.subr.mxu0 0.0
        %1102 = vmatpush1.msra.mxu0 %v1062
        %1103 = vmatprep.subr.mxu0 0.0
        %1104 = vmatpush1.msra.mxu0 %v1061
        %1105 = vmatprep.subr.mxu0 0.0
        %1106 = vmatpush2.msra.mxu0 0.0
        %1107 = vmatprep.subr.mxu0 0.0
        %1108 = vmatpush2.msra.mxu0 0.0
        %1109 = vmatprep.subr.mxu0 0.0
        %1110 = vmatpush2.msra.mxu0 0.0
        %1111 = vmatprep.subr.mxu0 0.0
        %1112 = vmatpush2.msra.mxu0 0.0
        %1113 = vmatprep.subr.mxu0 0.0
        %1114 = vmatpush2.msra.mxu0 0.0
        %1115 = vmatprep.subr.mxu0 0.0
        %1116 = vmatpush2.msra.mxu0 0.0
        %1117 = vmatprep.subr.mxu0 0.0
        %1118 = vmatpush2.msra.mxu0 0.0
        %1119 = vmatprep.subr.mxu0 0.0
        %1120 = vmatpush2.msra.mxu0 0.0
        %1121 = vmatprep.subr.mxu0 0.0
        %1122 = vmatpush2.msra.mxu0 0.0
        %1123 = vmatprep.subr.mxu0 0.0
        %1124 = vmatpush2.msra.mxu0 0.0
        %1125 = vmatprep.subr.mxu0 0.0
        %1126 = vmatpush2.msra.mxu0 0.0
        %1127 = vmatprep.subr.mxu0 0.0
        %1128 = vmatpush2.msra.mxu0 0.0
        %1129 = vmatprep.subr.mxu0 0.0
        %1130 = vmatpush2.msra.mxu0 0.0
        %1131 = vmatprep.subr.mxu0 0.0
        %1132 = vmatpush2.msra.mxu0 0.0
        %1133 = vmatprep.subr.mxu0 0.0
        %1134 = vmatpush2.msra.mxu0 0.0
        %1135 = vmatprep.subr.mxu0 0.0
        %1136 = vmatpush2.msra.mxu0 0.0
        %1137 = vmatprep.mubr.f32.mxu0 0.0
        %1138 = vmatmul.mubr.f32.gmra.mxu0 %v639
        %v1139 = vpop.f32.mrf.mxu0
        %v1140 = vadd.f32 %v1071, %v1139
        %v1141 = vpop.f32.mrf.mxu0
        %1142 = vmatprep.mubr.f32.mxu0 0.0
        %1143 = vmatmul.mubr.f32.gmra.mxu0 %v641
        %v1144 = vpop.f32.mrf.mxu0
        %v1145 = vadd.f32 %v1071, %v1144
        %v1146 = vpop.f32.mrf.mxu0
        %1147 = vdwg.mxu0
        %v1149 = vsel %vm722, %v969, 0
        %v1152 = vsel %vm722, %v1052, 0
        %v1155 = vsel %vm722, %v1057, 0
        %1157 = vmatprep.subr.mxu0 0.0
        %1158 = vmatpush1.xpose.msra.mxu0 0.0
        %1159 = vmatprep.subr.mxu0 0.0
        %1160 = vmatpush1.xpose.msra.mxu0 0.0
        %1161 = vmatprep.subr.mxu0 0.0
        %1162 = vmatpush1.xpose.msra.mxu0 0.0
        %1163 = vmatprep.subr.mxu0 0.0
        %1164 = vmatpush1.xpose.msra.mxu0 0.0
        %1165 = vmatprep.subr.mxu0 0.0
        %1166 = vmatpush1.xpose.msra.mxu0 0.0
        %1167 = vmatprep.subr.mxu0 0.0
        %1168 = vmatpush1.xpose.msra.mxu0 0.0
        %1169 = vmatprep.subr.mxu0 0.0
        %1170 = vmatpush1.xpose.msra.mxu0 0.0
        %1171 = vmatprep.subr.mxu0 0.0
        %1172 = vmatpush1.xpose.msra.mxu0 0.0
        %1173 = vmatprep.subr.mxu0 0.0
        %1174 = vmatpush1.xpose.msra.mxu0 0.0
        %1175 = vmatprep.subr.mxu0 0.0
        %1176 = vmatpush1.xpose.msra.mxu0 0.0
        %1177 = vmatprep.subr.mxu0 0.0
        %1178 = vmatpush1.xpose.msra.mxu0 0.0
        %1179 = vmatprep.subr.mxu0 0.0
        %1180 = vmatpush1.xpose.msra.mxu0 0.0
        %1181 = vmatprep.subr.mxu0 0.0
        %1182 = vmatpush1.xpose.msra.mxu0 0.0
        %1183 = vmatprep.subr.mxu0 0.0
        %1184 = vmatpush1.xpose.msra.mxu0 0.0
        %1185 = vmatprep.subr.mxu0 0.0
        %1186 = vmatpush1.xpose.msra.mxu0 %v1155
        %1187 = vmatprep.subr.mxu0 0.0
        %1188 = vmatpush1.xpose.msra.mxu0 %v1152
        %1189 = vmatprep.subr.mxu0 0.0
        %1190 = vmatpush2.xpose.msra.mxu0 0.0
        %1191 = vmatprep.subr.mxu0 0.0
        %1192 = vmatpush2.xpose.msra.mxu0 0.0
        %1193 = vmatprep.subr.mxu0 0.0
        %1194 = vmatpush2.xpose.msra.mxu0 0.0
        %1195 = vmatprep.subr.mxu0 0.0
        %1196 = vmatpush2.xpose.msra.mxu0 0.0
        %1197 = vmatprep.subr.mxu0 0.0
        %1198 = vmatpush2.xpose.msra.mxu0 0.0
        %1199 = vmatprep.subr.mxu0 0.0
        %1200 = vmatpush2.xpose.msra.mxu0 0.0
        %1201 = vmatprep.subr.mxu0 0.0
        %1202 = vmatpush2.xpose.msra.mxu0 0.0
        %1203 = vmatprep.subr.mxu0 0.0
        %1204 = vmatpush2.xpose.msra.mxu0 0.0
        %1205 = vmatprep.subr.mxu0 0.0
        %1206 = vmatpush2.xpose.msra.mxu0 0.0
        %1207 = vmatprep.subr.mxu0 0.0
        %1208 = vmatpush2.xpose.msra.mxu0 0.0
        %1209 = vmatprep.subr.mxu0 0.0
        %1210 = vmatpush2.xpose.msra.mxu0 0.0
        %1211 = vmatprep.subr.mxu0 0.0
        %1212 = vmatpush2.xpose.msra.mxu0 0.0
        %1213 = vmatprep.subr.mxu0 0.0
        %1214 = vmatpush2.xpose.msra.mxu0 0.0
        %1215 = vmatprep.subr.mxu0 0.0
        %1216 = vmatpush2.xpose.msra.mxu0 0.0
        %1217 = vmatprep.subr.mxu0 0.0
        %1218 = vmatpush2.xpose.msra.mxu0 0.0
        %1219 = vmatprep.subr.mxu0 0.0
        %1220 = vmatpush2.xpose.msra.mxu0 0.0
        %1221 = vmatprep.mubr.f32.mxu0 0.0
        %1222 = vmatmul.mubr.f32.gmra.mxu0 %v1149
        %v1223 = vpop.f32.mrf.mxu0
        %v1224 = vadd.f32 %v721, %v1223
        %v1225 = vpop.f32.mrf.mxu0
        %1226 = vdwg.mxu0
        %v1227 = vsel %vm802, %v1224, -inf
        %1228 = vmax.xlane.f32.xlu0 %v1227
        %v1229 = vpop.xlane.xlu0 %1228
        %v1230 = vsub.f32 %v1224, %v1229
        %v1231 = vmul.f32 %v1230, 1.442695
        %v1232 = vpow.pop %v1231
        %v1233 = vsel %vm802, %v1232, 0.0
        %1234 = vadd.xlane.f32.xlu0 %v1233
        %v1235 = vpop.xlane.xlu0 %1234
        %v1236 = vrcp.pop %v1235
        %v1237 = vmul.f32 %v1232, %v1236
        %v1239 = vsel %vm814, %v1237, 0
        %1241 = vmatprep.subr.mxu0 0.0
        %1242 = vmatpush1.msra.mxu0 0.0
        %1243 = vmatprep.subr.mxu0 0.0
        %1244 = vmatpush1.msra.mxu0 0.0
        %1245 = vmatprep.subr.mxu0 0.0
        %1246 = vmatpush1.msra.mxu0 0.0
        %1247 = vmatprep.subr.mxu0 0.0
        %1248 = vmatpush1.msra.mxu0 0.0
        %1249 = vmatprep.subr.mxu0 0.0
        %1250 = vmatpush1.msra.mxu0 0.0
        %1251 = vmatprep.subr.mxu0 0.0
        %1252 = vmatpush1.msra.mxu0 0.0
        %1253 = vmatprep.subr.mxu0 0.0
        %1254 = vmatpush1.msra.mxu0 0.0
        %1255 = vmatprep.subr.mxu0 0.0
        %1256 = vmatpush1.msra.mxu0 0.0
        %1257 = vmatprep.subr.mxu0 0.0
        %1258 = vmatpush1.msra.mxu0 0.0
        %1259 = vmatprep.subr.mxu0 0.0
        %1260 = vmatpush1.msra.mxu0 0.0
        %1261 = vmatprep.subr.mxu0 0.0
        %1262 = vmatpush1.msra.mxu0 0.0
        %1263 = vmatprep.subr.mxu0 0.0
        %1264 = vmatpush1.msra.mxu0 0.0
        %1265 = vmatprep.subr.mxu0 0.0
        %1266 = vmatpush1.msra.mxu0 0.0
        %1267 = vmatprep.subr.mxu0 0.0
        %1268 = vmatpush1.msra.mxu0 0.0
        %1269 = vmatprep.subr.mxu0 0.0
        %1270 = vmatpush1.msra.mxu0 %v1145
        %1271 = vmatprep.subr.mxu0 0.0
        %1272 = vmatpush1.msra.mxu0 %v1140
        %1273 = vmatprep.subr.mxu0 0.0
        %1274 = vmatpush2.msra.mxu0 0.0
        %1275 = vmatprep.subr.mxu0 0.0
        %1276 = vmatpush2.msra.mxu0 0.0
        %1277 = vmatprep.subr.mxu0 0.0
        %1278 = vmatpush2.msra.mxu0 0.0
        %1279 = vmatprep.subr.mxu0 0.0
        %1280 = vmatpush2.msra.mxu0 0.0
        %1281 = vmatprep.subr.mxu0 0.0
        %1282 = vmatpush2.msra.mxu0 0.0
        %1283 = vmatprep.subr.mxu0 0.0
        %1284 = vmatpush2.msra.mxu0 0.0
        %1285 = vmatprep.subr.mxu0 0.0
        %1286 = vmatpush2.msra.mxu0 0.0
        %1287 = vmatprep.subr.mxu0 0.0
        %1288 = vmatpush2.msra.mxu0 0.0
        %1289 = vmatprep.subr.mxu0 0.0
        %1290 = vmatpush2.msra.mxu0 0.0
        %1291 = vmatprep.subr.mxu0 0.0
        %1292 = vmatpush2.msra.mxu0 0.0
        %1293 = vmatprep.subr.mxu0 0.0
        %1294 = vmatpush2.msra.mxu0 0.0
        %1295 = vmatprep.subr.mxu0 0.0
        %1296 = vmatpush2.msra.mxu0 0.0
        %1297 = vmatprep.subr.mxu0 0.0
        %1298 = vmatpush2.msra.mxu0 0.0
        %1299 = vmatprep.subr.mxu0 0.0
        %1300 = vmatpush2.msra.mxu0 0.0
        %1301 = vmatprep.subr.mxu0 0.0
        %1302 = vmatpush2.msra.mxu0 0.0
        %1303 = vmatprep.subr.mxu0 0.0
        %1304 = vmatpush2.msra.mxu0 0.0
        %1305 = vmatprep.mubr.f32.mxu0 0.0
        %1306 = vmatmul.mubr.f32.gmra.mxu0 %v1239
        %v1307 = vpop.f32.mrf.mxu0
        %v1308 = vadd.f32 0.0, %v1307
        %v1309 = vpop.f32.mrf.mxu0
        %1310 = vdwg.mxu0
        %s1311 = scalar_lea.vmem %s6, 8
        %v1312 = vld [vmem:[%s1311] sm:$0xff]
        %v1314 = vsel %vm722, %v1308, 0
        %1316 = vmatprep.subr.mxu0 0.0
        %1317 = vmatpush1.msra.mxu0 0.0
        %1318 = vmatprep.subr.mxu0 0.0
        %1319 = vmatpush1.msra.mxu0 0.0
        %1320 = vmatprep.subr.mxu0 0.0
        %1321 = vmatpush1.msra.mxu0 0.0
        %1322 = vmatprep.subr.mxu0 0.0
        %1323 = vmatpush1.msra.mxu0 0.0
        %1324 = vmatprep.subr.mxu0 0.0
        %1325 = vmatpush1.msra.mxu0 0.0
        %1326 = vmatprep.subr.mxu0 0.0
        %1327 = vmatpush1.msra.mxu0 0.0
        %1328 = vmatprep.subr.mxu0 0.0
        %1329 = vmatpush1.msra.mxu0 0.0
        %1330 = vmatprep.subr.mxu0 0.0
        %1331 = vmatpush1.msra.mxu0 0.0
        %1332 = vmatprep.subr.mxu0 0.0
        %1333 = vmatpush1.msra.mxu0 0.0
        %1334 = vmatprep.subr.mxu0 0.0
        %1335 = vmatpush1.msra.mxu0 0.0
        %1336 = vmatprep.subr.mxu0 0.0
        %1337 = vmatpush1.msra.mxu0 0.0
        %1338 = vmatprep.subr.mxu0 0.0
        %1339 = vmatpush1.msra.mxu0 0.0
        %1340 = vmatprep.subr.mxu0 0.0
        %1341 = vmatpush1.msra.mxu0 0.0
        %1342 = vmatprep.subr.mxu0 0.0
        %1343 = vmatpush1.msra.mxu0 0.0
        %1344 = vmatprep.subr.mxu0 0.0
        %1345 = vmatpush1.msra.mxu0 0.0
        %1346 = vmatprep.subr.mxu0 0.0
        %1347 = vmatpush1.msra.mxu0 %v1312
        %1348 = vmatprep.subr.mxu0 0.0
        %1349 = vmatpush2.msra.mxu0 0.0
        %1350 = vmatprep.subr.mxu0 0.0
        %1351 = vmatpush2.msra.mxu0 0.0
        %1352 = vmatprep.subr.mxu0 0.0
        %1353 = vmatpush2.msra.mxu0 0.0
        %1354 = vmatprep.subr.mxu0 0.0
        %1355 = vmatpush2.msra.mxu0 0.0
        %1356 = vmatprep.subr.mxu0 0.0
        %1357 = vmatpush2.msra.mxu0 0.0
        %1358 = vmatprep.subr.mxu0 0.0
        %1359 = vmatpush2.msra.mxu0 0.0
        %1360 = vmatprep.subr.mxu0 0.0
        %1361 = vmatpush2.msra.mxu0 0.0
        %1362 = vmatprep.subr.mxu0 0.0
        %1363 = vmatpush2.msra.mxu0 0.0
        %1364 = vmatprep.subr.mxu0 0.0
        %1365 = vmatpush2.msra.mxu0 0.0
        %1366 = vmatprep.subr.mxu0 0.0
        %1367 = vmatpush2.msra.mxu0 0.0
        %1368 = vmatprep.subr.mxu0 0.0
        %1369 = vmatpush2.msra.mxu0 0.0
        %1370 = vmatprep.subr.mxu0 0.0
        %1371 = vmatpush2.msra.mxu0 0.0
        %1372 = vmatprep.subr.mxu0 0.0
        %1373 = vmatpush2.msra.mxu0 0.0
        %1374 = vmatprep.subr.mxu0 0.0
        %1375 = vmatpush2.msra.mxu0 0.0
        %1376 = vmatprep.subr.mxu0 0.0
        %1377 = vmatpush2.msra.mxu0 0.0
        %1378 = vmatprep.subr.mxu0 0.0
        %1379 = vmatpush2.msra.mxu0 0.0
        %1380 = vmatprep.mubr.f32.mxu0 0.0
        %1381 = vmatmul.mubr.f32.gmra.mxu0 %v1314
        %v1382 = vpop.f32.mrf.mxu0
        %v1383 = vadd.f32 0.0, %v1382
        %v1384 = vpop.f32.mrf.mxu0
        %1385 = vdwg.mxu0
        %v1387 = vsel %vm722, %v885, 0
        %1389 = vmatprep.subr.mxu0 0.0
        %1390 = vmatpush1.msra.mxu0 0.0
        %1391 = vmatprep.subr.mxu0 0.0
        %1392 = vmatpush1.msra.mxu0 0.0
        %1393 = vmatprep.subr.mxu0 0.0
        %1394 = vmatpush1.msra.mxu0 0.0
        %1395 = vmatprep.subr.mxu0 0.0
        %1396 = vmatpush1.msra.mxu0 0.0
        %1397 = vmatprep.subr.mxu0 0.0
        %1398 = vmatpush1.msra.mxu0 0.0
        %1399 = vmatprep.subr.mxu0 0.0
        %1400 = vmatpush1.msra.mxu0 0.0
        %1401 = vmatprep.subr.mxu0 0.0
        %1402 = vmatpush1.msra.mxu0 0.0
        %1403 = vmatprep.subr.mxu0 0.0
        %1404 = vmatpush1.msra.mxu0 0.0
        %1405 = vmatprep.subr.mxu0 0.0
        %1406 = vmatpush1.msra.mxu0 0.0
        %1407 = vmatprep.subr.mxu0 0.0
        %1408 = vmatpush1.msra.mxu0 0.0
        %1409 = vmatprep.subr.mxu0 0.0
        %1410 = vmatpush1.msra.mxu0 0.0
        %1411 = vmatprep.subr.mxu0 0.0
        %1412 = vmatpush1.msra.mxu0 0.0
        %1413 = vmatprep.subr.mxu0 0.0
        %1414 = vmatpush1.msra.mxu0 0.0
        %1415 = vmatprep.subr.mxu0 0.0
        %1416 = vmatpush1.msra.mxu0 0.0
        %1417 = vmatprep.subr.mxu0 0.0
        %1418 = vmatpush1.msra.mxu0 0.0
        %1419 = vmatprep.subr.mxu0 0.0
        %1420 = vmatpush1.msra.mxu0 %v888
        %1421 = vmatprep.subr.mxu0 0.0
        %1422 = vmatpush2.msra.mxu0 0.0
        %1423 = vmatprep.subr.mxu0 0.0
        %1424 = vmatpush2.msra.mxu0 0.0
        %1425 = vmatprep.subr.mxu0 0.0
        %1426 = vmatpush2.msra.mxu0 0.0
        %1427 = vmatprep.subr.mxu0 0.0
        %1428 = vmatpush2.msra.mxu0 0.0
        %1429 = vmatprep.subr.mxu0 0.0
        %1430 = vmatpush2.msra.mxu0 0.0
        %1431 = vmatprep.subr.mxu0 0.0
        %1432 = vmatpush2.msra.mxu0 0.0
        %1433 = vmatprep.subr.mxu0 0.0
        %1434 = vmatpush2.msra.mxu0 0.0
        %1435 = vmatprep.subr.mxu0 0.0
        %1436 = vmatpush2.msra.mxu0 0.0
        %1437 = vmatprep.subr.mxu0 0.0
        %1438 = vmatpush2.msra.mxu0 0.0
        %1439 = vmatprep.subr.mxu0 0.0
        %1440 = vmatpush2.msra.mxu0 0.0
        %1441 = vmatprep.subr.mxu0 0.0
        %1442 = vmatpush2.msra.mxu0 0.0
        %1443 = vmatprep.subr.mxu0 0.0
        %1444 = vmatpush2.msra.mxu0 0.0
        %1445 = vmatprep.subr.mxu0 0.0
        %1446 = vmatpush2.msra.mxu0 0.0
        %1447 = vmatprep.subr.mxu0 0.0
        %1448 = vmatpush2.msra.mxu0 0.0
        %1449 = vmatprep.subr.mxu0 0.0
        %1450 = vmatpush2.msra.mxu0 0.0
        %1451 = vmatprep.subr.mxu0 0.0
        %1452 = vmatpush2.msra.mxu0 0.0
        %1453 = vmatprep.mubr.f32.mxu0 0.0
        %1454 = vmatmul.mubr.f32.gmra.mxu0 %v1387
        %v1455 = vpop.f32.mrf.mxu0
        %v1456 = vadd.f32 %v1383, %v1455
        %v1457 = vpop.f32.mrf.mxu0
        %1458 = vdwg.mxu0
        %s1459 = scalar_lea.vmem %s4, 64
        %v1460 = vld [vmem:[%s1459] sm:$0xff]
        %v1461 = vld [vmem:[%s1459 + $0x8] sm:$0xff]
        %v1462 = vld [vmem:[%s1459 + $0x10] sm:$0xff]
        %v1463 = vld [vmem:[%s1459 + $0x18] sm:$0xff]
        %s1464 = scalar_lea.vmem %s5, 2
        %v1465 = vld [vmem:[%s1464] sm:$0x1]
        %v1467 = vlaneseq
        %v1468 = vshrl.u32 %v1467, 7
        %v1469 = vsub.s32 0, %v1468
        %v1470 = vrot.slane %v1465, %v1469
        %1472 = vmatprep.subr.mxu0 0.0
        %1473 = vmatpush1.msra.mxu0 0.0
        %1474 = vmatprep.subr.mxu0 0.0
        %1475 = vmatpush1.msra.mxu0 0.0
        %1476 = vmatprep.subr.mxu0 0.0
        %1477 = vmatpush1.msra.mxu0 0.0
        %1478 = vmatprep.subr.mxu0 0.0
        %1479 = vmatpush1.msra.mxu0 0.0
        %1480 = vmatprep.subr.mxu0 0.0
        %1481 = vmatpush1.msra.mxu0 0.0
        %1482 = vmatprep.subr.mxu0 0.0
        %1483 = vmatpush1.msra.mxu0 0.0
        %1484 = vmatprep.subr.mxu0 0.0
        %1485 = vmatpush1.msra.mxu0 0.0
        %1486 = vmatprep.subr.mxu0 0.0
        %1487 = vmatpush1.msra.mxu0 0.0
        %1488 = vmatprep.subr.mxu0 0.0
        %1489 = vmatpush1.msra.mxu0 0.0
        %1490 = vmatprep.subr.mxu0 0.0
        %1491 = vmatpush1.msra.mxu0 0.0
        %1492 = vmatprep.subr.mxu0 0.0
        %1493 = vmatpush1.msra.mxu0 0.0
        %1494 = vmatprep.subr.mxu0 0.0
        %1495 = vmatpush1.msra.mxu0 0.0
        %1496 = vmatprep.subr.mxu0 0.0
        %1497 = vmatpush1.msra.mxu0 %v1463
        %1498 = vmatprep.subr.mxu0 0.0
        %1499 = vmatpush1.msra.mxu0 %v1462
        %1500 = vmatprep.subr.mxu0 0.0
        %1501 = vmatpush1.msra.mxu0 %v1461
        %1502 = vmatprep.subr.mxu0 0.0
        %1503 = vmatpush1.msra.mxu0 %v1460
        %1504 = vmatprep.subr.mxu0 0.0
        %1505 = vmatpush2.msra.mxu0 0.0
        %1506 = vmatprep.subr.mxu0 0.0
        %1507 = vmatpush2.msra.mxu0 0.0
        %1508 = vmatprep.subr.mxu0 0.0
        %1509 = vmatpush2.msra.mxu0 0.0
        %1510 = vmatprep.subr.mxu0 0.0
        %1511 = vmatpush2.msra.mxu0 0.0
        %1512 = vmatprep.subr.mxu0 0.0
        %1513 = vmatpush2.msra.mxu0 0.0
        %1514 = vmatprep.subr.mxu0 0.0
        %1515 = vmatpush2.msra.mxu0 0.0
        %1516 = vmatprep.subr.mxu0 0.0
        %1517 = vmatpush2.msra.mxu0 0.0
        %1518 = vmatprep.subr.mxu0 0.0
        %1519 = vmatpush2.msra.mxu0 0.0
        %1520 = vmatprep.subr.mxu0 0.0
        %1521 = vmatpush2.msra.mxu0 0.0
        %1522 = vmatprep.subr.mxu0 0.0
        %1523 = vmatpush2.msra.mxu0 0.0
        %1524 = vmatprep.subr.mxu0 0.0
        %1525 = vmatpush2.msra.mxu0 0.0
        %1526 = vmatprep.subr.mxu0 0.0
        %1527 = vmatpush2.msra.mxu0 0.0
        %1528 = vmatprep.subr.mxu0 0.0
        %1529 = vmatpush2.msra.mxu0 0.0
        %1530 = vmatprep.subr.mxu0 0.0
        %1531 = vmatpush2.msra.mxu0 0.0
        %1532 = vmatprep.subr.mxu0 0.0
        %1533 = vmatpush2.msra.mxu0 0.0
        %1534 = vmatprep.subr.mxu0 0.0
        %1535 = vmatpush2.msra.mxu0 0.0
        %1536 = vmatprep.mubr.f32.mxu0 0.0
        %1537 = vmatmul.mubr.f32.gmra.mxu0 %v370
        %v1538 = vpop.f32.mrf.mxu0
        %v1539 = vadd.f32 %v1470, %v1538
        %v1540 = vpop.f32.mrf.mxu0
        %1541 = vdwg.mxu0
        %s1542 = scalar_lea.vmem %s4, 192
        %v1543 = vld [vmem:[%s1542] sm:$0xff]
        %v1544 = vld [vmem:[%s1542 + $0x8] sm:$0xff]
        %v1545 = vld [vmem:[%s1542 + $0x10] sm:$0xff]
        %v1546 = vld [vmem:[%s1542 + $0x18] sm:$0xff]
        %s1547 = scalar_lea.vmem %s5, 6
        %v1548 = vld [vmem:[%s1547] sm:$0x1]
        %v1550 = vlaneseq
        %v1551 = vshrl.u32 %v1550, 7
        %v1552 = vsub.s32 0, %v1551
        %v1553 = vrot.slane %v1548, %v1552
        %1555 = vmatprep.subr.mxu0 0.0
        %1556 = vmatpush1.msra.mxu0 0.0
        %1557 = vmatprep.subr.mxu0 0.0
        %1558 = vmatpush1.msra.mxu0 0.0
        %1559 = vmatprep.subr.mxu0 0.0
        %1560 = vmatpush1.msra.mxu0 0.0
        %1561 = vmatprep.subr.mxu0 0.0
        %1562 = vmatpush1.msra.mxu0 0.0
        %1563 = vmatprep.subr.mxu0 0.0
        %1564 = vmatpush1.msra.mxu0 0.0
        %1565 = vmatprep.subr.mxu0 0.0
        %1566 = vmatpush1.msra.mxu0 0.0
        %1567 = vmatprep.subr.mxu0 0.0
        %1568 = vmatpush1.msra.mxu0 0.0
        %1569 = vmatprep.subr.mxu0 0.0
        %1570 = vmatpush1.msra.mxu0 0.0
        %1571 = vmatprep.subr.mxu0 0.0
        %1572 = vmatpush1.msra.mxu0 0.0
        %1573 = vmatprep.subr.mxu0 0.0
        %1574 = vmatpush1.msra.mxu0 0.0
        %1575 = vmatprep.subr.mxu0 0.0
        %1576 = vmatpush1.msra.mxu0 0.0
        %1577 = vmatprep.subr.mxu0 0.0
        %1578 = vmatpush1.msra.mxu0 0.0
        %1579 = vmatprep.subr.mxu0 0.0
        %1580 = vmatpush1.msra.mxu0 %v1546
        %1581 = vmatprep.subr.mxu0 0.0
        %1582 = vmatpush1.msra.mxu0 %v1545
        %1583 = vmatprep.subr.mxu0 0.0
        %1584 = vmatpush1.msra.mxu0 %v1544
        %1585 = vmatprep.subr.mxu0 0.0
        %1586 = vmatpush1.msra.mxu0 %v1543
        %1587 = vmatprep.subr.mxu0 0.0
        %1588 = vmatpush2.msra.mxu0 0.0
        %1589 = vmatprep.subr.mxu0 0.0
        %1590 = vmatpush2.msra.mxu0 0.0
        %1591 = vmatprep.subr.mxu0 0.0
        %1592 = vmatpush2.msra.mxu0 0.0
        %1593 = vmatprep.subr.mxu0 0.0
        %1594 = vmatpush2.msra.mxu0 0.0
        %1595 = vmatprep.subr.mxu0 0.0
        %1596 = vmatpush2.msra.mxu0 0.0
        %1597 = vmatprep.subr.mxu0 0.0
        %1598 = vmatpush2.msra.mxu0 0.0
        %1599 = vmatprep.subr.mxu0 0.0
        %1600 = vmatpush2.msra.mxu0 0.0
        %1601 = vmatprep.subr.mxu0 0.0
        %1602 = vmatpush2.msra.mxu0 0.0
        %1603 = vmatprep.subr.mxu0 0.0
        %1604 = vmatpush2.msra.mxu0 0.0
        %1605 = vmatprep.subr.mxu0 0.0
        %1606 = vmatpush2.msra.mxu0 0.0
        %1607 = vmatprep.subr.mxu0 0.0
        %1608 = vmatpush2.msra.mxu0 0.0
        %1609 = vmatprep.subr.mxu0 0.0
        %1610 = vmatpush2.msra.mxu0 0.0
        %1611 = vmatprep.subr.mxu0 0.0
        %1612 = vmatpush2.msra.mxu0 0.0
        %1613 = vmatprep.subr.mxu0 0.0
        %1614 = vmatpush2.msra.mxu0 0.0
        %1615 = vmatprep.subr.mxu0 0.0
        %1616 = vmatpush2.msra.mxu0 0.0
        %1617 = vmatprep.subr.mxu0 0.0
        %1618 = vmatpush2.msra.mxu0 0.0
        %1619 = vmatprep.mubr.f32.mxu0 0.0
        %1620 = vmatmul.mubr.f32.gmra.mxu0 %v503
        %v1621 = vpop.f32.mrf.mxu0
        %v1622 = vadd.f32 %v1553, %v1621
        %v1623 = vpop.f32.mrf.mxu0
        %1624 = vmatprep.mubr.f32.mxu0 0.0
        %1625 = vmatmul.mubr.f32.gmra.mxu0 %v505
        %v1626 = vpop.f32.mrf.mxu0
        %v1627 = vadd.f32 %v1553, %v1626
        %v1628 = vpop.f32.mrf.mxu0
        %1629 = vdwg.mxu0
        %s1630 = scalar_lea.vmem %s4, 320
        %v1631 = vld [vmem:[%s1630] sm:$0xff]
        %v1632 = vld [vmem:[%s1630 + $0x8] sm:$0xff]
        %v1633 = vld [vmem:[%s1630 + $0x10] sm:$0xff]
        %v1634 = vld [vmem:[%s1630 + $0x18] sm:$0xff]
        %s1635 = scalar_lea.vmem %s5, 10
        %v1636 = vld [vmem:[%s1635] sm:$0x1]
        %v1638 = vlaneseq
        %v1639 = vshrl.u32 %v1638, 7
        %v1640 = vsub.s32 0, %v1639
        %v1641 = vrot.slane %v1636, %v1640
        %1643 = vmatprep.subr.mxu0 0.0
        %1644 = vmatpush1.msra.mxu0 0.0
        %1645 = vmatprep.subr.mxu0 0.0
        %1646 = vmatpush1.msra.mxu0 0.0
        %1647 = vmatprep.subr.mxu0 0.0
        %1648 = vmatpush1.msra.mxu0 0.0
        %1649 = vmatprep.subr.mxu0 0.0
        %1650 = vmatpush1.msra.mxu0 0.0
        %1651 = vmatprep.subr.mxu0 0.0
        %1652 = vmatpush1.msra.mxu0 0.0
        %1653 = vmatprep.subr.mxu0 0.0
        %1654 = vmatpush1.msra.mxu0 0.0
        %1655 = vmatprep.subr.mxu0 0.0
        %1656 = vmatpush1.msra.mxu0 0.0
        %1657 = vmatprep.subr.mxu0 0.0
        %1658 = vmatpush1.msra.mxu0 0.0
        %1659 = vmatprep.subr.mxu0 0.0
        %1660 = vmatpush1.msra.mxu0 0.0
        %1661 = vmatprep.subr.mxu0 0.0
        %1662 = vmatpush1.msra.mxu0 0.0
        %1663 = vmatprep.subr.mxu0 0.0
        %1664 = vmatpush1.msra.mxu0 0.0
        %1665 = vmatprep.subr.mxu0 0.0
        %1666 = vmatpush1.msra.mxu0 0.0
        %1667 = vmatprep.subr.mxu0 0.0
        %1668 = vmatpush1.msra.mxu0 %v1634
        %1669 = vmatprep.subr.mxu0 0.0
        %1670 = vmatpush1.msra.mxu0 %v1633
        %1671 = vmatprep.subr.mxu0 0.0
        %1672 = vmatpush1.msra.mxu0 %v1632
        %1673 = vmatprep.subr.mxu0 0.0
        %1674 = vmatpush1.msra.mxu0 %v1631
        %1675 = vmatprep.subr.mxu0 0.0
        %1676 = vmatpush2.msra.mxu0 0.0
        %1677 = vmatprep.subr.mxu0 0.0
        %1678 = vmatpush2.msra.mxu0 0.0
        %1679 = vmatprep.subr.mxu0 0.0
        %1680 = vmatpush2.msra.mxu0 0.0
        %1681 = vmatprep.subr.mxu0 0.0
        %1682 = vmatpush2.msra.mxu0 0.0
        %1683 = vmatprep.subr.mxu0 0.0
        %1684 = vmatpush2.msra.mxu0 0.0
        %1685 = vmatprep.subr.mxu0 0.0
        %1686 = vmatpush2.msra.mxu0 0.0
        %1687 = vmatprep.subr.mxu0 0.0
        %1688 = vmatpush2.msra.mxu0 0.0
        %1689 = vmatprep.subr.mxu0 0.0
        %1690 = vmatpush2.msra.mxu0 0.0
        %1691 = vmatprep.subr.mxu0 0.0
        %1692 = vmatpush2.msra.mxu0 0.0
        %1693 = vmatprep.subr.mxu0 0.0
        %1694 = vmatpush2.msra.mxu0 0.0
        %1695 = vmatprep.subr.mxu0 0.0
        %1696 = vmatpush2.msra.mxu0 0.0
        %1697 = vmatprep.subr.mxu0 0.0
        %1698 = vmatpush2.msra.mxu0 0.0
        %1699 = vmatprep.subr.mxu0 0.0
        %1700 = vmatpush2.msra.mxu0 0.0
        %1701 = vmatprep.subr.mxu0 0.0
        %1702 = vmatpush2.msra.mxu0 0.0
        %1703 = vmatprep.subr.mxu0 0.0
        %1704 = vmatpush2.msra.mxu0 0.0
        %1705 = vmatprep.subr.mxu0 0.0
        %1706 = vmatpush2.msra.mxu0 0.0
        %1707 = vmatprep.mubr.f32.mxu0 0.0
        %1708 = vmatmul.mubr.f32.gmra.mxu0 %v639
        %v1709 = vpop.f32.mrf.mxu0
        %v1710 = vadd.f32 %v1641, %v1709
        %v1711 = vpop.f32.mrf.mxu0
        %1712 = vmatprep.mubr.f32.mxu0 0.0
        %1713 = vmatmul.mubr.f32.gmra.mxu0 %v641
        %v1714 = vpop.f32.mrf.mxu0
        %v1715 = vadd.f32 %v1641, %v1714
        %v1716 = vpop.f32.mrf.mxu0
        %1717 = vdwg.mxu0
        %v1719 = vsel %vm722, %v1539, 0
        %v1722 = vsel %vm722, %v1622, 0
        %v1725 = vsel %vm722, %v1627, 0
        %1727 = vmatprep.subr.mxu0 0.0
        %1728 = vmatpush1.xpose.msra.mxu0 0.0
        %1729 = vmatprep.subr.mxu0 0.0
        %1730 = vmatpush1.xpose.msra.mxu0 0.0
        %1731 = vmatprep.subr.mxu0 0.0
        %1732 = vmatpush1.xpose.msra.mxu0 0.0
        %1733 = vmatprep.subr.mxu0 0.0
        %1734 = vmatpush1.xpose.msra.mxu0 0.0
        %1735 = vmatprep.subr.mxu0 0.0
        %1736 = vmatpush1.xpose.msra.mxu0 0.0
        %1737 = vmatprep.subr.mxu0 0.0
        %1738 = vmatpush1.xpose.msra.mxu0 0.0
        %1739 = vmatprep.subr.mxu0 0.0
        %1740 = vmatpush1.xpose.msra.mxu0 0.0
        %1741 = vmatprep.subr.mxu0 0.0
        %1742 = vmatpush1.xpose.msra.mxu0 0.0
        %1743 = vmatprep.subr.mxu0 0.0
        %1744 = vmatpush1.xpose.msra.mxu0 0.0
        %1745 = vmatprep.subr.mxu0 0.0
        %1746 = vmatpush1.xpose.msra.mxu0 0.0
        %1747 = vmatprep.subr.mxu0 0.0
        %1748 = vmatpush1.xpose.msra.mxu0 0.0
        %1749 = vmatprep.subr.mxu0 0.0
        %1750 = vmatpush1.xpose.msra.mxu0 0.0
        %1751 = vmatprep.subr.mxu0 0.0
        %1752 = vmatpush1.xpose.msra.mxu0 0.0
        %1753 = vmatprep.subr.mxu0 0.0
        %1754 = vmatpush1.xpose.msra.mxu0 0.0
        %1755 = vmatprep.subr.mxu0 0.0
        %1756 = vmatpush1.xpose.msra.mxu0 %v1725
        %1757 = vmatprep.subr.mxu0 0.0
        %1758 = vmatpush1.xpose.msra.mxu0 %v1722
        %1759 = vmatprep.subr.mxu0 0.0
        %1760 = vmatpush2.xpose.msra.mxu0 0.0
        %1761 = vmatprep.subr.mxu0 0.0
        %1762 = vmatpush2.xpose.msra.mxu0 0.0
        %1763 = vmatprep.subr.mxu0 0.0
        %1764 = vmatpush2.xpose.msra.mxu0 0.0
        %1765 = vmatprep.subr.mxu0 0.0
        %1766 = vmatpush2.xpose.msra.mxu0 0.0
        %1767 = vmatprep.subr.mxu0 0.0
        %1768 = vmatpush2.xpose.msra.mxu0 0.0
        %1769 = vmatprep.subr.mxu0 0.0
        %1770 = vmatpush2.xpose.msra.mxu0 0.0
        %1771 = vmatprep.subr.mxu0 0.0
        %1772 = vmatpush2.xpose.msra.mxu0 0.0
        %1773 = vmatprep.subr.mxu0 0.0
        %1774 = vmatpush2.xpose.msra.mxu0 0.0
        %1775 = vmatprep.subr.mxu0 0.0
        %1776 = vmatpush2.xpose.msra.mxu0 0.0
        %1777 = vmatprep.subr.mxu0 0.0
        %1778 = vmatpush2.xpose.msra.mxu0 0.0
        %1779 = vmatprep.subr.mxu0 0.0
        %1780 = vmatpush2.xpose.msra.mxu0 0.0
        %1781 = vmatprep.subr.mxu0 0.0
        %1782 = vmatpush2.xpose.msra.mxu0 0.0
        %1783 = vmatprep.subr.mxu0 0.0
        %1784 = vmatpush2.xpose.msra.mxu0 0.0
        %1785 = vmatprep.subr.mxu0 0.0
        %1786 = vmatpush2.xpose.msra.mxu0 0.0
        %1787 = vmatprep.subr.mxu0 0.0
        %1788 = vmatpush2.xpose.msra.mxu0 0.0
        %1789 = vmatprep.subr.mxu0 0.0
        %1790 = vmatpush2.xpose.msra.mxu0 0.0
        %1791 = vmatprep.mubr.f32.mxu0 0.0
        %1792 = vmatmul.mubr.f32.gmra.mxu0 %v1719
        %v1793 = vpop.f32.mrf.mxu0
        %v1794 = vadd.f32 %v721, %v1793
        %v1795 = vpop.f32.mrf.mxu0
        %1796 = vdwg.mxu0
        %v1797 = vsel %vm802, %v1794, -inf
        %1798 = vmax.xlane.f32.xlu0 %v1797
        %v1799 = vpop.xlane.xlu0 %1798
        %v1800 = vsub.f32 %v1794, %v1799
        %v1801 = vmul.f32 %v1800, 1.442695
        %v1802 = vpow.pop %v1801
        %v1803 = vsel %vm802, %v1802, 0.0
        %1804 = vadd.xlane.f32.xlu0 %v1803
        %v1805 = vpop.xlane.xlu0 %1804
        %v1806 = vrcp.pop %v1805
        %v1807 = vmul.f32 %v1802, %v1806
        %v1809 = vsel %vm814, %v1807, 0
        %1811 = vmatprep.subr.mxu0 0.0
        %1812 = vmatpush1.msra.mxu0 0.0
        %1813 = vmatprep.subr.mxu0 0.0
        %1814 = vmatpush1.msra.mxu0 0.0
        %1815 = vmatprep.subr.mxu0 0.0
        %1816 = vmatpush1.msra.mxu0 0.0
        %1817 = vmatprep.subr.mxu0 0.0
        %1818 = vmatpush1.msra.mxu0 0.0
        %1819 = vmatprep.subr.mxu0 0.0
        %1820 = vmatpush1.msra.mxu0 0.0
        %1821 = vmatprep.subr.mxu0 0.0
        %1822 = vmatpush1.msra.mxu0 0.0
        %1823 = vmatprep.subr.mxu0 0.0
        %1824 = vmatpush1.msra.mxu0 0.0
        %1825 = vmatprep.subr.mxu0 0.0
        %1826 = vmatpush1.msra.mxu0 0.0
        %1827 = vmatprep.subr.mxu0 0.0
        %1828 = vmatpush1.msra.mxu0 0.0
        %1829 = vmatprep.subr.mxu0 0.0
        %1830 = vmatpush1.msra.mxu0 0.0
        %1831 = vmatprep.subr.mxu0 0.0
        %1832 = vmatpush1.msra.mxu0 0.0
        %1833 = vmatprep.subr.mxu0 0.0
        %1834 = vmatpush1.msra.mxu0 0.0
        %1835 = vmatprep.subr.mxu0 0.0
        %1836 = vmatpush1.msra.mxu0 0.0
        %1837 = vmatprep.subr.mxu0 0.0
        %1838 = vmatpush1.msra.mxu0 0.0
        %1839 = vmatprep.subr.mxu0 0.0
        %1840 = vmatpush1.msra.mxu0 %v1715
        %1841 = vmatprep.subr.mxu0 0.0
        %1842 = vmatpush1.msra.mxu0 %v1710
        %1843 = vmatprep.subr.mxu0 0.0
        %1844 = vmatpush2.msra.mxu0 0.0
        %1845 = vmatprep.subr.mxu0 0.0
        %1846 = vmatpush2.msra.mxu0 0.0
        %1847 = vmatprep.subr.mxu0 0.0
        %1848 = vmatpush2.msra.mxu0 0.0
        %1849 = vmatprep.subr.mxu0 0.0
        %1850 = vmatpush2.msra.mxu0 0.0
        %1851 = vmatprep.subr.mxu0 0.0
        %1852 = vmatpush2.msra.mxu0 0.0
        %1853 = vmatprep.subr.mxu0 0.0
        %1854 = vmatpush2.msra.mxu0 0.0
        %1855 = vmatprep.subr.mxu0 0.0
        %1856 = vmatpush2.msra.mxu0 0.0
        %1857 = vmatprep.subr.mxu0 0.0
        %1858 = vmatpush2.msra.mxu0 0.0
        %1859 = vmatprep.subr.mxu0 0.0
        %1860 = vmatpush2.msra.mxu0 0.0
        %1861 = vmatprep.subr.mxu0 0.0
        %1862 = vmatpush2.msra.mxu0 0.0
        %1863 = vmatprep.subr.mxu0 0.0
        %1864 = vmatpush2.msra.mxu0 0.0
        %1865 = vmatprep.subr.mxu0 0.0
        %1866 = vmatpush2.msra.mxu0 0.0
        %1867 = vmatprep.subr.mxu0 0.0
        %1868 = vmatpush2.msra.mxu0 0.0
        %1869 = vmatprep.subr.mxu0 0.0
        %1870 = vmatpush2.msra.mxu0 0.0
        %1871 = vmatprep.subr.mxu0 0.0
        %1872 = vmatpush2.msra.mxu0 0.0
        %1873 = vmatprep.subr.mxu0 0.0
        %1874 = vmatpush2.msra.mxu0 0.0
        %1875 = vmatprep.mubr.f32.mxu0 0.0
        %1876 = vmatmul.mubr.f32.gmra.mxu0 %v1809
        %v1877 = vpop.f32.mrf.mxu0
        %v1878 = vadd.f32 0.0, %v1877
        %v1879 = vpop.f32.mrf.mxu0
        %1880 = vdwg.mxu0
        %s1881 = scalar_lea.vmem %s6, 16
        %v1882 = vld [vmem:[%s1881] sm:$0xff]
        %v1884 = vsel %vm722, %v1878, 0
        %1886 = vmatprep.subr.mxu0 0.0
        %1887 = vmatpush1.msra.mxu0 0.0
        %1888 = vmatprep.subr.mxu0 0.0
        %1889 = vmatpush1.msra.mxu0 0.0
        %1890 = vmatprep.subr.mxu0 0.0
        %1891 = vmatpush1.msra.mxu0 0.0
        %1892 = vmatprep.subr.mxu0 0.0
        %1893 = vmatpush1.msra.mxu0 0.0
        %1894 = vmatprep.subr.mxu0 0.0
        %1895 = vmatpush1.msra.mxu0 0.0
        %1896 = vmatprep.subr.mxu0 0.0
        %1897 = vmatpush1.msra.mxu0 0.0
        %1898 = vmatprep.subr.mxu0 0.0
        %1899 = vmatpush1.msra.mxu0 0.0
        %1900 = vmatprep.subr.mxu0 0.0
        %1901 = vmatpush1.msra.mxu0 0.0
        %1902 = vmatprep.subr.mxu0 0.0
        %1903 = vmatpush1.msra.mxu0 0.0
        %1904 = vmatprep.subr.mxu0 0.0
        %1905 = vmatpush1.msra.mxu0 0.0
        %1906 = vmatprep.subr.mxu0 0.0
        %1907 = vmatpush1.msra.mxu0 0.0
        %1908 = vmatprep.subr.mxu0 0.0
        %1909 = vmatpush1.msra.mxu0 0.0
        %1910 = vmatprep.subr.mxu0 0.0
        %1911 = vmatpush1.msra.mxu0 0.0
        %1912 = vmatprep.subr.mxu0 0.0
        %1913 = vmatpush1.msra.mxu0 0.0
        %1914 = vmatprep.subr.mxu0 0.0
        %1915 = vmatpush1.msra.mxu0 0.0
        %1916 = vmatprep.subr.mxu0 0.0
        %1917 = vmatpush1.msra.mxu0 %v1882
        %1918 = vmatprep.subr.mxu0 0.0
        %1919 = vmatpush2.msra.mxu0 0.0
        %1920 = vmatprep.subr.mxu0 0.0
        %1921 = vmatpush2.msra.mxu0 0.0
        %1922 = vmatprep.subr.mxu0 0.0
        %1923 = vmatpush2.msra.mxu0 0.0
        %1924 = vmatprep.subr.mxu0 0.0
        %1925 = vmatpush2.msra.mxu0 0.0
        %1926 = vmatprep.subr.mxu0 0.0
        %1927 = vmatpush2.msra.mxu0 0.0
        %1928 = vmatprep.subr.mxu0 0.0
        %1929 = vmatpush2.msra.mxu0 0.0
        %1930 = vmatprep.subr.mxu0 0.0
        %1931 = vmatpush2.msra.mxu0 0.0
        %1932 = vmatprep.subr.mxu0 0.0
        %1933 = vmatpush2.msra.mxu0 0.0
        %1934 = vmatprep.subr.mxu0 0.0
        %1935 = vmatpush2.msra.mxu0 0.0
        %1936 = vmatprep.subr.mxu0 0.0
        %1937 = vmatpush2.msra.mxu0 0.0
        %1938 = vmatprep.subr.mxu0 0.0
        %1939 = vmatpush2.msra.mxu0 0.0
        %1940 = vmatprep.subr.mxu0 0.0
        %1941 = vmatpush2.msra.mxu0 0.0
        %1942 = vmatprep.subr.mxu0 0.0
        %1943 = vmatpush2.msra.mxu0 0.0
        %1944 = vmatprep.subr.mxu0 0.0
        %1945 = vmatpush2.msra.mxu0 0.0
        %1946 = vmatprep.subr.mxu0 0.0
        %1947 = vmatpush2.msra.mxu0 0.0
        %1948 = vmatprep.subr.mxu0 0.0
        %1949 = vmatpush2.msra.mxu0 0.0
        %1950 = vmatprep.mubr.f32.mxu0 0.0
        %1951 = vmatmul.mubr.f32.gmra.mxu0 %v1884
        %v1952 = vpop.f32.mrf.mxu0
        %v1953 = vadd.f32 0.0, %v1952
        %v1954 = vpop.f32.mrf.mxu0
        %1955 = vdwg.mxu0
        %v1956 = vadd.f32 %v1456, %v1953
        %s1957 = scalar_lea.vmem %s4, 96
        %v1958 = vld [vmem:[%s1957] sm:$0xff]
        %v1959 = vld [vmem:[%s1957 + $0x8] sm:$0xff]
        %v1960 = vld [vmem:[%s1957 + $0x10] sm:$0xff]
        %v1961 = vld [vmem:[%s1957 + $0x18] sm:$0xff]
        %s1962 = scalar_lea.vmem %s5, 3
        %v1963 = vld [vmem:[%s1962] sm:$0x1]
        %v1965 = vlaneseq
        %v1966 = vshrl.u32 %v1965, 7
        %v1967 = vsub.s32 0, %v1966
        %v1968 = vrot.slane %v1963, %v1967
        %1970 = vmatprep.subr.mxu0 0.0
        %1971 = vmatpush1.msra.mxu0 0.0
        %1972 = vmatprep.subr.mxu0 0.0
        %1973 = vmatpush1.msra.mxu0 0.0
        %1974 = vmatprep.subr.mxu0 0.0
        %1975 = vmatpush1.msra.mxu0 0.0
        %1976 = vmatprep.subr.mxu0 0.0
        %1977 = vmatpush1.msra.mxu0 0.0
        %1978 = vmatprep.subr.mxu0 0.0
        %1979 = vmatpush1.msra.mxu0 0.0
        %1980 = vmatprep.subr.mxu0 0.0
        %1981 = vmatpush1.msra.mxu0 0.0
        %1982 = vmatprep.subr.mxu0 0.0
        %1983 = vmatpush1.msra.mxu0 0.0
        %1984 = vmatprep.subr.mxu0 0.0
        %1985 = vmatpush1.msra.mxu0 0.0
        %1986 = vmatprep.subr.mxu0 0.0
        %1987 = vmatpush1.msra.mxu0 0.0
        %1988 = vmatprep.subr.mxu0 0.0
        %1989 = vmatpush1.msra.mxu0 0.0
        %1990 = vmatprep.subr.mxu0 0.0
        %1991 = vmatpush1.msra.mxu0 0.0
        %1992 = vmatprep.subr.mxu0 0.0
        %1993 = vmatpush1.msra.mxu0 0.0
        %1994 = vmatprep.subr.mxu0 0.0
        %1995 = vmatpush1.msra.mxu0 %v1961
        %1996 = vmatprep.subr.mxu0 0.0
        %1997 = vmatpush1.msra.mxu0 %v1960
        %1998 = vmatprep.subr.mxu0 0.0
        %1999 = vmatpush1.msra.mxu0 %v1959
        %2000 = vmatprep.subr.mxu0 0.0
        %2001 = vmatpush1.msra.mxu0 %v1958
        %2002 = vmatprep.subr.mxu0 0.0
        %2003 = vmatpush2.msra.mxu0 0.0
        %2004 = vmatprep.subr.mxu0 0.0
        %2005 = vmatpush2.msra.mxu0 0.0
        %2006 = vmatprep.subr.mxu0 0.0
        %2007 = vmatpush2.msra.mxu0 0.0
        %2008 = vmatprep.subr.mxu0 0.0
        %2009 = vmatpush2.msra.mxu0 0.0
        %2010 = vmatprep.subr.mxu0 0.0
        %2011 = vmatpush2.msra.mxu0 0.0
        %2012 = vmatprep.subr.mxu0 0.0
        %2013 = vmatpush2.msra.mxu0 0.0
        %2014 = vmatprep.subr.mxu0 0.0
        %2015 = vmatpush2.msra.mxu0 0.0
        %2016 = vmatprep.subr.mxu0 0.0
        %2017 = vmatpush2.msra.mxu0 0.0
        %2018 = vmatprep.subr.mxu0 0.0
        %2019 = vmatpush2.msra.mxu0 0.0
        %2020 = vmatprep.subr.mxu0 0.0
        %2021 = vmatpush2.msra.mxu0 0.0
        %2022 = vmatprep.subr.mxu0 0.0
        %2023 = vmatpush2.msra.mxu0 0.0
        %2024 = vmatprep.subr.mxu0 0.0
        %2025 = vmatpush2.msra.mxu0 0.0
        %2026 = vmatprep.subr.mxu0 0.0
        %2027 = vmatpush2.msra.mxu0 0.0
        %2028 = vmatprep.subr.mxu0 0.0
        %2029 = vmatpush2.msra.mxu0 0.0
        %2030 = vmatprep.subr.mxu0 0.0
        %2031 = vmatpush2.msra.mxu0 0.0
        %2032 = vmatprep.subr.mxu0 0.0
        %2033 = vmatpush2.msra.mxu0 0.0
        %2034 = vmatprep.mubr.f32.mxu0 0.0
        %2035 = vmatmul.mubr.f32.gmra.mxu0 %v370
        %v2036 = vpop.f32.mrf.mxu0
        %v2037 = vadd.f32 %v1968, %v2036
        %v2038 = vpop.f32.mrf.mxu0
        %2039 = vdwg.mxu0
        %s2040 = scalar_lea.vmem %s4, 224
        %v2041 = vld [vmem:[%s2040] sm:$0xff]
        %v2042 = vld [vmem:[%s2040 + $0x8] sm:$0xff]
        %v2043 = vld [vmem:[%s2040 + $0x10] sm:$0xff]
        %v2044 = vld [vmem:[%s2040 + $0x18] sm:$0xff]
        %s2045 = scalar_lea.vmem %s5, 7
        %v2046 = vld [vmem:[%s2045] sm:$0x1]
        %v2048 = vlaneseq
        %v2049 = vshrl.u32 %v2048, 7
        %v2050 = vsub.s32 0, %v2049
        %v2051 = vrot.slane %v2046, %v2050
        %2053 = vmatprep.subr.mxu0 0.0
        %2054 = vmatpush1.msra.mxu0 0.0
        %2055 = vmatprep.subr.mxu0 0.0
        %2056 = vmatpush1.msra.mxu0 0.0
        %2057 = vmatprep.subr.mxu0 0.0
        %2058 = vmatpush1.msra.mxu0 0.0
        %2059 = vmatprep.subr.mxu0 0.0
        %2060 = vmatpush1.msra.mxu0 0.0
        %2061 = vmatprep.subr.mxu0 0.0
        %2062 = vmatpush1.msra.mxu0 0.0
        %2063 = vmatprep.subr.mxu0 0.0
        %2064 = vmatpush1.msra.mxu0 0.0
        %2065 = vmatprep.subr.mxu0 0.0
        %2066 = vmatpush1.msra.mxu0 0.0
        %2067 = vmatprep.subr.mxu0 0.0
        %2068 = vmatpush1.msra.mxu0 0.0
        %2069 = vmatprep.subr.mxu0 0.0
        %2070 = vmatpush1.msra.mxu0 0.0
        %2071 = vmatprep.subr.mxu0 0.0
        %2072 = vmatpush1.msra.mxu0 0.0
        %2073 = vmatprep.subr.mxu0 0.0
        %2074 = vmatpush1.msra.mxu0 0.0
        %2075 = vmatprep.subr.mxu0 0.0
        %2076 = vmatpush1.msra.mxu0 0.0
        %2077 = vmatprep.subr.mxu0 0.0
        %2078 = vmatpush1.msra.mxu0 %v2044
        %2079 = vmatprep.subr.mxu0 0.0
        %2080 = vmatpush1.msra.mxu0 %v2043
        %2081 = vmatprep.subr.mxu0 0.0
        %2082 = vmatpush1.msra.mxu0 %v2042
        %2083 = vmatprep.subr.mxu0 0.0
        %2084 = vmatpush1.msra.mxu0 %v2041
        %2085 = vmatprep.subr.mxu0 0.0
        %2086 = vmatpush2.msra.mxu0 0.0
        %2087 = vmatprep.subr.mxu0 0.0
        %2088 = vmatpush2.msra.mxu0 0.0
        %2089 = vmatprep.subr.mxu0 0.0
        %2090 = vmatpush2.msra.mxu0 0.0
        %2091 = vmatprep.subr.mxu0 0.0
        %2092 = vmatpush2.msra.mxu0 0.0
        %2093 = vmatprep.subr.mxu0 0.0
        %2094 = vmatpush2.msra.mxu0 0.0
        %2095 = vmatprep.subr.mxu0 0.0
        %2096 = vmatpush2.msra.mxu0 0.0
        %2097 = vmatprep.subr.mxu0 0.0
        %2098 = vmatpush2.msra.mxu0 0.0
        %2099 = vmatprep.subr.mxu0 0.0
        %2100 = vmatpush2.msra.mxu0 0.0
        %2101 = vmatprep.subr.mxu0 0.0
        %2102 = vmatpush2.msra.mxu0 0.0
        %2103 = vmatprep.subr.mxu0 0.0
        %2104 = vmatpush2.msra.mxu0 0.0
        %2105 = vmatprep.subr.mxu0 0.0
        %2106 = vmatpush2.msra.mxu0 0.0
        %2107 = vmatprep.subr.mxu0 0.0
        %2108 = vmatpush2.msra.mxu0 0.0
        %2109 = vmatprep.subr.mxu0 0.0
        %2110 = vmatpush2.msra.mxu0 0.0
        %2111 = vmatprep.subr.mxu0 0.0
        %2112 = vmatpush2.msra.mxu0 0.0
        %2113 = vmatprep.subr.mxu0 0.0
        %2114 = vmatpush2.msra.mxu0 0.0
        %2115 = vmatprep.subr.mxu0 0.0
        %2116 = vmatpush2.msra.mxu0 0.0
        %2117 = vmatprep.mubr.f32.mxu0 0.0
        %2118 = vmatmul.mubr.f32.gmra.mxu0 %v503
        %v2119 = vpop.f32.mrf.mxu0
        %v2120 = vadd.f32 %v2051, %v2119
        %v2121 = vpop.f32.mrf.mxu0
        %2122 = vmatprep.mubr.f32.mxu0 0.0
        %2123 = vmatmul.mubr.f32.gmra.mxu0 %v505
        %v2124 = vpop.f32.mrf.mxu0
        %v2125 = vadd.f32 %v2051, %v2124
        %v2126 = vpop.f32.mrf.mxu0
        %2127 = vdwg.mxu0
        %s2128 = scalar_lea.vmem %s4, 352
        %v2129 = vld [vmem:[%s2128] sm:$0xff]
        %v2130 = vld [vmem:[%s2128 + $0x8] sm:$0xff]
        %v2131 = vld [vmem:[%s2128 + $0x10] sm:$0xff]
        %v2132 = vld [vmem:[%s2128 + $0x18] sm:$0xff]
        %s2133 = scalar_lea.vmem %s5, 11
        %v2134 = vld [vmem:[%s2133] sm:$0x1]
        %v2136 = vlaneseq
        %v2137 = vshrl.u32 %v2136, 7
        %v2138 = vsub.s32 0, %v2137
        %v2139 = vrot.slane %v2134, %v2138
        %2141 = vmatprep.subr.mxu0 0.0
        %2142 = vmatpush1.msra.mxu0 0.0
        %2143 = vmatprep.subr.mxu0 0.0
        %2144 = vmatpush1.msra.mxu0 0.0
        %2145 = vmatprep.subr.mxu0 0.0
        %2146 = vmatpush1.msra.mxu0 0.0
        %2147 = vmatprep.subr.mxu0 0.0
        %2148 = vmatpush1.msra.mxu0 0.0
        %2149 = vmatprep.subr.mxu0 0.0
        %2150 = vmatpush1.msra.mxu0 0.0
        %2151 = vmatprep.subr.mxu0 0.0
        %2152 = vmatpush1.msra.mxu0 0.0
        %2153 = vmatprep.subr.mxu0 0.0
        %2154 = vmatpush1.msra.mxu0 0.0
        %2155 = vmatprep.subr.mxu0 0.0
        %2156 = vmatpush1.msra.mxu0 0.0
        %2157 = vmatprep.subr.mxu0 0.0
        %2158 = vmatpush1.msra.mxu0 0.0
        %2159 = vmatprep.subr.mxu0 0.0
        %2160 = vmatpush1.msra.mxu0 0.0
        %2161 = vmatprep.subr.mxu0 0.0
        %2162 = vmatpush1.msra.mxu0 0.0
        %2163 = vmatprep.subr.mxu0 0.0
        %2164 = vmatpush1.msra.mxu0 0.0
        %2165 = vmatprep.subr.mxu0 0.0
        %2166 = vmatpush1.msra.mxu0 %v2132
        %2167 = vmatprep.subr.mxu0 0.0
        %2168 = vmatpush1.msra.mxu0 %v2131
        %2169 = vmatprep.subr.mxu0 0.0
        %2170 = vmatpush1.msra.mxu0 %v2130
        %2171 = vmatprep.subr.mxu0 0.0
        %2172 = vmatpush1.msra.mxu0 %v2129
        %2173 = vmatprep.subr.mxu0 0.0
        %2174 = vmatpush2.msra.mxu0 0.0
        %2175 = vmatprep.subr.mxu0 0.0
        %2176 = vmatpush2.msra.mxu0 0.0
        %2177 = vmatprep.subr.mxu0 0.0
        %2178 = vmatpush2.msra.mxu0 0.0
        %2179 = vmatprep.subr.mxu0 0.0
        %2180 = vmatpush2.msra.mxu0 0.0
        %2181 = vmatprep.subr.mxu0 0.0
        %2182 = vmatpush2.msra.mxu0 0.0
        %2183 = vmatprep.subr.mxu0 0.0
        %2184 = vmatpush2.msra.mxu0 0.0
        %2185 = vmatprep.subr.mxu0 0.0
        %2186 = vmatpush2.msra.mxu0 0.0
        %2187 = vmatprep.subr.mxu0 0.0
        %2188 = vmatpush2.msra.mxu0 0.0
        %2189 = vmatprep.subr.mxu0 0.0
        %2190 = vmatpush2.msra.mxu0 0.0
        %2191 = vmatprep.subr.mxu0 0.0
        %2192 = vmatpush2.msra.mxu0 0.0
        %2193 = vmatprep.subr.mxu0 0.0
        %2194 = vmatpush2.msra.mxu0 0.0
        %2195 = vmatprep.subr.mxu0 0.0
        %2196 = vmatpush2.msra.mxu0 0.0
        %2197 = vmatprep.subr.mxu0 0.0
        %2198 = vmatpush2.msra.mxu0 0.0
        %2199 = vmatprep.subr.mxu0 0.0
        %2200 = vmatpush2.msra.mxu0 0.0
        %2201 = vmatprep.subr.mxu0 0.0
        %2202 = vmatpush2.msra.mxu0 0.0
        %2203 = vmatprep.subr.mxu0 0.0
        %2204 = vmatpush2.msra.mxu0 0.0
        %2205 = vmatprep.mubr.f32.mxu0 0.0
        %2206 = vmatmul.mubr.f32.gmra.mxu0 %v639
        %v2207 = vpop.f32.mrf.mxu0
        %v2208 = vadd.f32 %v2139, %v2207
        %v2209 = vpop.f32.mrf.mxu0
        %2210 = vmatprep.mubr.f32.mxu0 0.0
        %2211 = vmatmul.mubr.f32.gmra.mxu0 %v641
        %v2212 = vpop.f32.mrf.mxu0
        %v2213 = vadd.f32 %v2139, %v2212
        %v2214 = vpop.f32.mrf.mxu0
        %2215 = vdwg.mxu0
        %v2217 = vsel %vm722, %v2037, 0
        %v2220 = vsel %vm722, %v2120, 0
        %v2223 = vsel %vm722, %v2125, 0
        %2225 = vmatprep.subr.mxu0 0.0
        %2226 = vmatpush1.xpose.msra.mxu0 0.0
        %2227 = vmatprep.subr.mxu0 0.0
        %2228 = vmatpush1.xpose.msra.mxu0 0.0
        %2229 = vmatprep.subr.mxu0 0.0
        %2230 = vmatpush1.xpose.msra.mxu0 0.0
        %2231 = vmatprep.subr.mxu0 0.0
        %2232 = vmatpush1.xpose.msra.mxu0 0.0
        %2233 = vmatprep.subr.mxu0 0.0
        %2234 = vmatpush1.xpose.msra.mxu0 0.0
        %2235 = vmatprep.subr.mxu0 0.0
        %2236 = vmatpush1.xpose.msra.mxu0 0.0
        %2237 = vmatprep.subr.mxu0 0.0
        %2238 = vmatpush1.xpose.msra.mxu0 0.0
        %2239 = vmatprep.subr.mxu0 0.0
        %2240 = vmatpush1.xpose.msra.mxu0 0.0
        %2241 = vmatprep.subr.mxu0 0.0
        %2242 = vmatpush1.xpose.msra.mxu0 0.0
        %2243 = vmatprep.subr.mxu0 0.0
        %2244 = vmatpush1.xpose.msra.mxu0 0.0
        %2245 = vmatprep.subr.mxu0 0.0
        %2246 = vmatpush1.xpose.msra.mxu0 0.0
        %2247 = vmatprep.subr.mxu0 0.0
        %2248 = vmatpush1.xpose.msra.mxu0 0.0
        %2249 = vmatprep.subr.mxu0 0.0
        %2250 = vmatpush1.xpose.msra.mxu0 0.0
        %2251 = vmatprep.subr.mxu0 0.0
        %2252 = vmatpush1.xpose.msra.mxu0 0.0
        %2253 = vmatprep.subr.mxu0 0.0
        %2254 = vmatpush1.xpose.msra.mxu0 %v2223
        %2255 = vmatprep.subr.mxu0 0.0
        %2256 = vmatpush1.xpose.msra.mxu0 %v2220
        %2257 = vmatprep.subr.mxu0 0.0
        %2258 = vmatpush2.xpose.msra.mxu0 0.0
        %2259 = vmatprep.subr.mxu0 0.0
        %2260 = vmatpush2.xpose.msra.mxu0 0.0
        %2261 = vmatprep.subr.mxu0 0.0
        %2262 = vmatpush2.xpose.msra.mxu0 0.0
        %2263 = vmatprep.subr.mxu0 0.0
        %2264 = vmatpush2.xpose.msra.mxu0 0.0
        %2265 = vmatprep.subr.mxu0 0.0
        %2266 = vmatpush2.xpose.msra.mxu0 0.0
        %2267 = vmatprep.subr.mxu0 0.0
        %2268 = vmatpush2.xpose.msra.mxu0 0.0
        %2269 = vmatprep.subr.mxu0 0.0
        %2270 = vmatpush2.xpose.msra.mxu0 0.0
        %2271 = vmatprep.subr.mxu0 0.0
        %2272 = vmatpush2.xpose.msra.mxu0 0.0
        %2273 = vmatprep.subr.mxu0 0.0
        %2274 = vmatpush2.xpose.msra.mxu0 0.0
        %2275 = vmatprep.subr.mxu0 0.0
        %2276 = vmatpush2.xpose.msra.mxu0 0.0
        %2277 = vmatprep.subr.mxu0 0.0
        %2278 = vmatpush2.xpose.msra.mxu0 0.0
        %2279 = vmatprep.subr.mxu0 0.0
        %2280 = vmatpush2.xpose.msra.mxu0 0.0
        %2281 = vmatprep.subr.mxu0 0.0
        %2282 = vmatpush2.xpose.msra.mxu0 0.0
        %2283 = vmatprep.subr.mxu0 0.0
        %2284 = vmatpush2.xpose.msra.mxu0 0.0
        %2285 = vmatprep.subr.mxu0 0.0
        %2286 = vmatpush2.xpose.msra.mxu0 0.0
        %2287 = vmatprep.subr.mxu0 0.0
        %2288 = vmatpush2.xpose.msra.mxu0 0.0
        %2289 = vmatprep.mubr.f32.mxu0 0.0
        %2290 = vmatmul.mubr.f32.gmra.mxu0 %v2217
        %v2291 = vpop.f32.mrf.mxu0
        %v2292 = vadd.f32 %v721, %v2291
        %v2293 = vpop.f32.mrf.mxu0
        %2294 = vdwg.mxu0
        %v2295 = vsel %vm802, %v2292, -inf
        %2296 = vmax.xlane.f32.xlu0 %v2295
        %v2297 = vpop.xlane.xlu0 %2296
        %v2298 = vsub.f32 %v2292, %v2297
        %v2299 = vmul.f32 %v2298, 1.442695
        %v2300 = vpow.pop %v2299
        %v2301 = vsel %vm802, %v2300, 0.0
        %2302 = vadd.xlane.f32.xlu0 %v2301
        %v2303 = vpop.xlane.xlu0 %2302
        %v2304 = vrcp.pop %v2303
        %v2305 = vmul.f32 %v2300, %v2304
        %v2307 = vsel %vm814, %v2305, 0
        %2309 = vmatprep.subr.mxu0 0.0
        %2310 = vmatpush1.msra.mxu0 0.0
        %2311 = vmatprep.subr.mxu0 0.0
        %2312 = vmatpush1.msra.mxu0 0.0
        %2313 = vmatprep.subr.mxu0 0.0
        %2314 = vmatpush1.msra.mxu0 0.0
        %2315 = vmatprep.subr.mxu0 0.0
        %2316 = vmatpush1.msra.mxu0 0.0
        %2317 = vmatprep.subr.mxu0 0.0
        %2318 = vmatpush1.msra.mxu0 0.0
        %2319 = vmatprep.subr.mxu0 0.0
        %2320 = vmatpush1.msra.mxu0 0.0
        %2321 = vmatprep.subr.mxu0 0.0
        %2322 = vmatpush1.msra.mxu0 0.0
        %2323 = vmatprep.subr.mxu0 0.0
        %2324 = vmatpush1.msra.mxu0 0.0
        %2325 = vmatprep.subr.mxu0 0.0
        %2326 = vmatpush1.msra.mxu0 0.0
        %2327 = vmatprep.subr.mxu0 0.0
        %2328 = vmatpush1.msra.mxu0 0.0
        %2329 = vmatprep.subr.mxu0 0.0
        %2330 = vmatpush1.msra.mxu0 0.0
        %2331 = vmatprep.subr.mxu0 0.0
        %2332 = vmatpush1.msra.mxu0 0.0
        %2333 = vmatprep.subr.mxu0 0.0
        %2334 = vmatpush1.msra.mxu0 0.0
        %2335 = vmatprep.subr.mxu0 0.0
        %2336 = vmatpush1.msra.mxu0 0.0
        %2337 = vmatprep.subr.mxu0 0.0
        %2338 = vmatpush1.msra.mxu0 %v2213
        %2339 = vmatprep.subr.mxu0 0.0
        %2340 = vmatpush1.msra.mxu0 %v2208
        %2341 = vmatprep.subr.mxu0 0.0
        %2342 = vmatpush2.msra.mxu0 0.0
        %2343 = vmatprep.subr.mxu0 0.0
        %2344 = vmatpush2.msra.mxu0 0.0
        %2345 = vmatprep.subr.mxu0 0.0
        %2346 = vmatpush2.msra.mxu0 0.0
        %2347 = vmatprep.subr.mxu0 0.0
        %2348 = vmatpush2.msra.mxu0 0.0
        %2349 = vmatprep.subr.mxu0 0.0
        %2350 = vmatpush2.msra.mxu0 0.0
        %2351 = vmatprep.subr.mxu0 0.0
        %2352 = vmatpush2.msra.mxu0 0.0
        %2353 = vmatprep.subr.mxu0 0.0
        %2354 = vmatpush2.msra.mxu0 0.0
        %2355 = vmatprep.subr.mxu0 0.0
        %2356 = vmatpush2.msra.mxu0 0.0
        %2357 = vmatprep.subr.mxu0 0.0
        %2358 = vmatpush2.msra.mxu0 0.0
        %2359 = vmatprep.subr.mxu0 0.0
        %2360 = vmatpush2.msra.mxu0 0.0
        %2361 = vmatprep.subr.mxu0 0.0
        %2362 = vmatpush2.msra.mxu0 0.0
        %2363 = vmatprep.subr.mxu0 0.0
        %2364 = vmatpush2.msra.mxu0 0.0
        %2365 = vmatprep.subr.mxu0 0.0
        %2366 = vmatpush2.msra.mxu0 0.0
        %2367 = vmatprep.subr.mxu0 0.0
        %2368 = vmatpush2.msra.mxu0 0.0
        %2369 = vmatprep.subr.mxu0 0.0
        %2370 = vmatpush2.msra.mxu0 0.0
        %2371 = vmatprep.subr.mxu0 0.0
        %2372 = vmatpush2.msra.mxu0 0.0
        %2373 = vmatprep.mubr.f32.mxu0 0.0
        %2374 = vmatmul.mubr.f32.gmra.mxu0 %v2307
        %v2375 = vpop.f32.mrf.mxu0
        %v2376 = vadd.f32 0.0, %v2375
        %v2377 = vpop.f32.mrf.mxu0
        %2378 = vdwg.mxu0
        %s2379 = scalar_lea.vmem %s6, 24
        %v2380 = vld [vmem:[%s2379] sm:$0xff]
        %v2382 = vsel %vm722, %v2376, 0
        %2384 = vmatprep.subr.mxu0 0.0
        %2385 = vmatpush1.msra.mxu0 0.0
        %2386 = vmatprep.subr.mxu0 0.0
        %2387 = vmatpush1.msra.mxu0 0.0
        %2388 = vmatprep.subr.mxu0 0.0
        %2389 = vmatpush1.msra.mxu0 0.0
        %2390 = vmatprep.subr.mxu0 0.0
        %2391 = vmatpush1.msra.mxu0 0.0
        %2392 = vmatprep.subr.mxu0 0.0
        %2393 = vmatpush1.msra.mxu0 0.0
        %2394 = vmatprep.subr.mxu0 0.0
        %2395 = vmatpush1.msra.mxu0 0.0
        %2396 = vmatprep.subr.mxu0 0.0
        %2397 = vmatpush1.msra.mxu0 0.0
        %2398 = vmatprep.subr.mxu0 0.0
        %2399 = vmatpush1.msra.mxu0 0.0
        %2400 = vmatprep.subr.mxu0 0.0
        %2401 = vmatpush1.msra.mxu0 0.0
        %2402 = vmatprep.subr.mxu0 0.0
        %2403 = vmatpush1.msra.mxu0 0.0
        %2404 = vmatprep.subr.mxu0 0.0
        %2405 = vmatpush1.msra.mxu0 0.0
        %2406 = vmatprep.subr.mxu0 0.0
        %2407 = vmatpush1.msra.mxu0 0.0
        %2408 = vmatprep.subr.mxu0 0.0
        %2409 = vmatpush1.msra.mxu0 0.0
        %2410 = vmatprep.subr.mxu0 0.0
        %2411 = vmatpush1.msra.mxu0 0.0
        %2412 = vmatprep.subr.mxu0 0.0
        %2413 = vmatpush1.msra.mxu0 0.0
        %2414 = vmatprep.subr.mxu0 0.0
        %2415 = vmatpush1.msra.mxu0 %v2380
        %2416 = vmatprep.subr.mxu0 0.0
        %2417 = vmatpush2.msra.mxu0 0.0
        %2418 = vmatprep.subr.mxu0 0.0
        %2419 = vmatpush2.msra.mxu0 0.0
        %2420 = vmatprep.subr.mxu0 0.0
        %2421 = vmatpush2.msra.mxu0 0.0
        %2422 = vmatprep.subr.mxu0 0.0
        %2423 = vmatpush2.msra.mxu0 0.0
        %2424 = vmatprep.subr.mxu0 0.0
        %2425 = vmatpush2.msra.mxu0 0.0
        %2426 = vmatprep.subr.mxu0 0.0
        %2427 = vmatpush2.msra.mxu0 0.0
        %2428 = vmatprep.subr.mxu0 0.0
        %2429 = vmatpush2.msra.mxu0 0.0
        %2430 = vmatprep.subr.mxu0 0.0
        %2431 = vmatpush2.msra.mxu0 0.0
        %2432 = vmatprep.subr.mxu0 0.0
        %2433 = vmatpush2.msra.mxu0 0.0
        %2434 = vmatprep.subr.mxu0 0.0
        %2435 = vmatpush2.msra.mxu0 0.0
        %2436 = vmatprep.subr.mxu0 0.0
        %2437 = vmatpush2.msra.mxu0 0.0
        %2438 = vmatprep.subr.mxu0 0.0
        %2439 = vmatpush2.msra.mxu0 0.0
        %2440 = vmatprep.subr.mxu0 0.0
        %2441 = vmatpush2.msra.mxu0 0.0
        %2442 = vmatprep.subr.mxu0 0.0
        %2443 = vmatpush2.msra.mxu0 0.0
        %2444 = vmatprep.subr.mxu0 0.0
        %2445 = vmatpush2.msra.mxu0 0.0
        %2446 = vmatprep.subr.mxu0 0.0
        %2447 = vmatpush2.msra.mxu0 0.0
        %2448 = vmatprep.mubr.f32.mxu0 0.0
        %2449 = vmatmul.mubr.f32.gmra.mxu0 %v2382
        %v2450 = vpop.f32.mrf.mxu0
        %v2451 = vadd.f32 0.0, %v2450
        %v2452 = vpop.f32.mrf.mxu0
        %2453 = vdwg.mxu0
        %v2454 = vadd.f32 %v1956, %v2451
        %v2456 = vlaneseq
        %v2457 = vshrl.u32 %v2456, 7
        %v2458 = vsub.s32 0, %v2457
        %v2459 = vrot.slane %v344, %v2458
        %v2461 = vadd.f32 %v2454, %v2459
        %v2462 = vrot.slane %v307, 1
        %v2463 = vsel %vm361, %v308, %v2462
        %v2464 = vrot.slane %v309, 7
        %v2465 = vsel %vm364, %v2464, %v2463
        %v2466 = vrot.slane %v310, 6
        %v2467 = vsel %vm367, %v2466, %v2465
        %v2468 = vsel %vm369, %v2467, 0
        %2470 = vmatprep.subr.mxu0 0.0
        %2471 = vmatpush1.msra.mxu0 0.0
        %2472 = vmatprep.subr.mxu0 0.0
        %2473 = vmatpush1.msra.mxu0 0.0
        %2474 = vmatprep.subr.mxu0 0.0
        %2475 = vmatpush1.msra.mxu0 0.0
        %2476 = vmatprep.subr.mxu0 0.0
        %2477 = vmatpush1.msra.mxu0 0.0
        %2478 = vmatprep.subr.mxu0 0.0
        %2479 = vmatpush1.msra.mxu0 0.0
        %2480 = vmatprep.subr.mxu0 0.0
        %2481 = vmatpush1.msra.mxu0 0.0
        %2482 = vmatprep.subr.mxu0 0.0
        %2483 = vmatpush1.msra.mxu0 0.0
        %2484 = vmatprep.subr.mxu0 0.0
        %2485 = vmatpush1.msra.mxu0 0.0
        %2486 = vmatprep.subr.mxu0 0.0
        %2487 = vmatpush1.msra.mxu0 0.0
        %2488 = vmatprep.subr.mxu0 0.0
        %2489 = vmatpush1.msra.mxu0 0.0
        %2490 = vmatprep.subr.mxu0 0.0
        %2491 = vmatpush1.msra.mxu0 0.0
        %2492 = vmatprep.subr.mxu0 0.0
        %2493 = vmatpush1.msra.mxu0 0.0
        %2494 = vmatprep.subr.mxu0 0.0
        %2495 = vmatpush1.msra.mxu0 %v348
        %2496 = vmatprep.subr.mxu0 0.0
        %2497 = vmatpush1.msra.mxu0 %v347
        %2498 = vmatprep.subr.mxu0 0.0
        %2499 = vmatpush1.msra.mxu0 %v346
        %2500 = vmatprep.subr.mxu0 0.0
        %2501 = vmatpush1.msra.mxu0 %v345
        %2502 = vmatprep.subr.mxu0 0.0
        %2503 = vmatpush2.msra.mxu0 0.0
        %2504 = vmatprep.subr.mxu0 0.0
        %2505 = vmatpush2.msra.mxu0 0.0
        %2506 = vmatprep.subr.mxu0 0.0
        %2507 = vmatpush2.msra.mxu0 0.0
        %2508 = vmatprep.subr.mxu0 0.0
        %2509 = vmatpush2.msra.mxu0 0.0
        %2510 = vmatprep.subr.mxu0 0.0
        %2511 = vmatpush2.msra.mxu0 0.0
        %2512 = vmatprep.subr.mxu0 0.0
        %2513 = vmatpush2.msra.mxu0 0.0
        %2514 = vmatprep.subr.mxu0 0.0
        %2515 = vmatpush2.msra.mxu0 0.0
        %2516 = vmatprep.subr.mxu0 0.0
        %2517 = vmatpush2.msra.mxu0 0.0
        %2518 = vmatprep.subr.mxu0 0.0
        %2519 = vmatpush2.msra.mxu0 0.0
        %2520 = vmatprep.subr.mxu0 0.0
        %2521 = vmatpush2.msra.mxu0 0.0
        %2522 = vmatprep.subr.mxu0 0.0
        %2523 = vmatpush2.msra.mxu0 0.0
        %2524 = vmatprep.subr.mxu0 0.0
        %2525 = vmatpush2.msra.mxu0 0.0
        %2526 = vmatprep.subr.mxu0 0.0
        %2527 = vmatpush2.msra.mxu0 0.0
        %2528 = vmatprep.subr.mxu0 0.0
        %2529 = vmatpush2.msra.mxu0 0.0
        %2530 = vmatprep.subr.mxu0 0.0
        %2531 = vmatpush2.msra.mxu0 0.0
        %2532 = vmatprep.subr.mxu0 0.0
        %2533 = vmatpush2.msra.mxu0 0.0
        %2534 = vmatprep.mubr.f32.mxu0 0.0
        %2535 = vmatmul.mubr.f32.gmra.mxu0 %v2468
        %v2536 = vpop.f32.mrf.mxu0
        %v2537 = vadd.f32 %v354, %v2536
        %v2538 = vpop.f32.mrf.mxu0
        %2539 = vdwg.mxu0
        %v2540 = vrot.slane %v311, 1
        %v2541 = vsel %vm361, %v312, %v2540
        %v2542 = vrot.slane %v313, 7
        %v2543 = vsel %vm364, %v2542, %v2541
        %v2544 = vrot.slane %v314, 6
        %v2545 = vsel %vm367, %v2544, %v2543
        %v2546 = vrot.slane %v315, 5
        %v2547 = vsel %vm478, %v2546, %v2545
        %v2548 = vrot.slane %v316, 4
        %v2549 = vsel %vm481, %v2548, %v2547
        %v2550 = vrot.slane %v317, 3
        %v2551 = vsel %vm484, %v2550, %v2549
        %v2552 = vrot.slane %v318, 2
        %v2553 = vsel %vm487, %v2552, %v2551
        %v2554 = vrot.slane %v319, 1
        %v2555 = vsel %vm361, %v320, %v2554
        %v2556 = vrot.slane %v321, 7
        %v2557 = vsel %vm364, %v2556, %v2555
        %v2558 = vrot.slane %v322, 6
        %v2559 = vsel %vm367, %v2558, %v2557
        %v2560 = vrot.slane %v323, 5
        %v2561 = vsel %vm478, %v2560, %v2559
        %v2562 = vrot.slane %v324, 4
        %v2563 = vsel %vm481, %v2562, %v2561
        %v2564 = vrot.slane %v325, 3
        %v2565 = vsel %vm484, %v2564, %v2563
        %v2566 = vrot.slane %v326, 2
        %v2567 = vsel %vm487, %v2566, %v2565
        %v2568 = vsel %vm369, %v2553, 0
        %v2570 = vsel %vm369, %v2567, 0
        %2572 = vmatprep.subr.mxu0 0.0
        %2573 = vmatpush1.msra.mxu0 0.0
        %2574 = vmatprep.subr.mxu0 0.0
        %2575 = vmatpush1.msra.mxu0 0.0
        %2576 = vmatprep.subr.mxu0 0.0
        %2577 = vmatpush1.msra.mxu0 0.0
        %2578 = vmatprep.subr.mxu0 0.0
        %2579 = vmatpush1.msra.mxu0 0.0
        %2580 = vmatprep.subr.mxu0 0.0
        %2581 = vmatpush1.msra.mxu0 0.0
        %2582 = vmatprep.subr.mxu0 0.0
        %2583 = vmatpush1.msra.mxu0 0.0
        %2584 = vmatprep.subr.mxu0 0.0
        %2585 = vmatpush1.msra.mxu0 0.0
        %2586 = vmatprep.subr.mxu0 0.0
        %2587 = vmatpush1.msra.mxu0 0.0
        %2588 = vmatprep.subr.mxu0 0.0
        %2589 = vmatpush1.msra.mxu0 0.0
        %2590 = vmatprep.subr.mxu0 0.0
        %2591 = vmatpush1.msra.mxu0 0.0
        %2592 = vmatprep.subr.mxu0 0.0
        %2593 = vmatpush1.msra.mxu0 0.0
        %2594 = vmatprep.subr.mxu0 0.0
        %2595 = vmatpush1.msra.mxu0 0.0
        %2596 = vmatprep.subr.mxu0 0.0
        %2597 = vmatpush1.msra.mxu0 %v446
        %2598 = vmatprep.subr.mxu0 0.0
        %2599 = vmatpush1.msra.mxu0 %v445
        %2600 = vmatprep.subr.mxu0 0.0
        %2601 = vmatpush1.msra.mxu0 %v444
        %2602 = vmatprep.subr.mxu0 0.0
        %2603 = vmatpush1.msra.mxu0 %v443
        %2604 = vmatprep.subr.mxu0 0.0
        %2605 = vmatpush2.msra.mxu0 0.0
        %2606 = vmatprep.subr.mxu0 0.0
        %2607 = vmatpush2.msra.mxu0 0.0
        %2608 = vmatprep.subr.mxu0 0.0
        %2609 = vmatpush2.msra.mxu0 0.0
        %2610 = vmatprep.subr.mxu0 0.0
        %2611 = vmatpush2.msra.mxu0 0.0
        %2612 = vmatprep.subr.mxu0 0.0
        %2613 = vmatpush2.msra.mxu0 0.0
        %2614 = vmatprep.subr.mxu0 0.0
        %2615 = vmatpush2.msra.mxu0 0.0
        %2616 = vmatprep.subr.mxu0 0.0
        %2617 = vmatpush2.msra.mxu0 0.0
        %2618 = vmatprep.subr.mxu0 0.0
        %2619 = vmatpush2.msra.mxu0 0.0
        %2620 = vmatprep.subr.mxu0 0.0
        %2621 = vmatpush2.msra.mxu0 0.0
        %2622 = vmatprep.subr.mxu0 0.0
        %2623 = vmatpush2.msra.mxu0 0.0
        %2624 = vmatprep.subr.mxu0 0.0
        %2625 = vmatpush2.msra.mxu0 0.0
        %2626 = vmatprep.subr.mxu0 0.0
        %2627 = vmatpush2.msra.mxu0 0.0
        %2628 = vmatprep.subr.mxu0 0.0
        %2629 = vmatpush2.msra.mxu0 0.0
        %2630 = vmatprep.subr.mxu0 0.0
        %2631 = vmatpush2.msra.mxu0 0.0
        %2632 = vmatprep.subr.mxu0 0.0
        %2633 = vmatpush2.msra.mxu0 0.0
        %2634 = vmatprep.subr.mxu0 0.0
        %2635 = vmatpush2.msra.mxu0 0.0
        %2636 = vmatprep.mubr.f32.mxu0 0.0
        %2637 = vmatmul.mubr.f32.gmra.mxu0 %v2568
        %v2638 = vpop.f32.mrf.mxu0
        %v2639 = vadd.f32 %v453, %v2638
        %v2640 = vpop.f32.mrf.mxu0
        %2641 = vmatprep.mubr.f32.mxu0 0.0
        %2642 = vmatmul.mubr.f32.gmra.mxu0 %v2570
        %v2643 = vpop.f32.mrf.mxu0
        %v2644 = vadd.f32 %v453, %v2643
        %v2645 = vpop.f32.mrf.mxu0
        %2646 = vdwg.mxu0
        %v2647 = vrot.slane %v327, 1
        %v2648 = vsel %vm361, %v328, %v2647
        %v2649 = vrot.slane %v329, 7
        %v2650 = vsel %vm364, %v2649, %v2648
        %v2651 = vrot.slane %v330, 6
        %v2652 = vsel %vm367, %v2651, %v2650
        %v2653 = vrot.slane %v331, 5
        %v2654 = vsel %vm478, %v2653, %v2652
        %v2655 = vrot.slane %v332, 4
        %v2656 = vsel %vm481, %v2655, %v2654
        %v2657 = vrot.slane %v333, 3
        %v2658 = vsel %vm484, %v2657, %v2656
        %v2659 = vrot.slane %v334, 2
        %v2660 = vsel %vm487, %v2659, %v2658
        %v2661 = vrot.slane %v335, 1
        %v2662 = vsel %vm361, %v336, %v2661
        %v2663 = vrot.slane %v337, 7
        %v2664 = vsel %vm364, %v2663, %v2662
        %v2665 = vrot.slane %v338, 6
        %v2666 = vsel %vm367, %v2665, %v2664
        %v2667 = vrot.slane %v339, 5
        %v2668 = vsel %vm478, %v2667, %v2666
        %v2669 = vrot.slane %v340, 4
        %v2670 = vsel %vm481, %v2669, %v2668
        %v2671 = vrot.slane %v341, 3
        %v2672 = vsel %vm484, %v2671, %v2670
        %v2673 = vrot.slane %v342, 2
        %v2674 = vsel %vm487, %v2673, %v2672
        %v2675 = vsel %vm369, %v2660, 0
        %v2677 = vsel %vm369, %v2674, 0
        %2679 = vmatprep.subr.mxu0 0.0
        %2680 = vmatpush1.msra.mxu0 0.0
        %2681 = vmatprep.subr.mxu0 0.0
        %2682 = vmatpush1.msra.mxu0 0.0
        %2683 = vmatprep.subr.mxu0 0.0
        %2684 = vmatpush1.msra.mxu0 0.0
        %2685 = vmatprep.subr.mxu0 0.0
        %2686 = vmatpush1.msra.mxu0 0.0
        %2687 = vmatprep.subr.mxu0 0.0
        %2688 = vmatpush1.msra.mxu0 0.0
        %2689 = vmatprep.subr.mxu0 0.0
        %2690 = vmatpush1.msra.mxu0 0.0
        %2691 = vmatprep.subr.mxu0 0.0
        %2692 = vmatpush1.msra.mxu0 0.0
        %2693 = vmatprep.subr.mxu0 0.0
        %2694 = vmatpush1.msra.mxu0 0.0
        %2695 = vmatprep.subr.mxu0 0.0
        %2696 = vmatpush1.msra.mxu0 0.0
        %2697 = vmatprep.subr.mxu0 0.0
        %2698 = vmatpush1.msra.mxu0 0.0
        %2699 = vmatprep.subr.mxu0 0.0
        %2700 = vmatpush1.msra.mxu0 0.0
        %2701 = vmatprep.subr.mxu0 0.0
        %2702 = vmatpush1.msra.mxu0 0.0
        %2703 = vmatprep.subr.mxu0 0.0
        %2704 = vmatpush1.msra.mxu0 %v586
        %2705 = vmatprep.subr.mxu0 0.0
        %2706 = vmatpush1.msra.mxu0 %v585
        %2707 = vmatprep.subr.mxu0 0.0
        %2708 = vmatpush1.msra.mxu0 %v584
        %2709 = vmatprep.subr.mxu0 0.0
        %2710 = vmatpush1.msra.mxu0 %v583
        %2711 = vmatprep.subr.mxu0 0.0
        %2712 = vmatpush2.msra.mxu0 0.0
        %2713 = vmatprep.subr.mxu0 0.0
        %2714 = vmatpush2.msra.mxu0 0.0
        %2715 = vmatprep.subr.mxu0 0.0
        %2716 = vmatpush2.msra.mxu0 0.0
        %2717 = vmatprep.subr.mxu0 0.0
        %2718 = vmatpush2.msra.mxu0 0.0
        %2719 = vmatprep.subr.mxu0 0.0
        %2720 = vmatpush2.msra.mxu0 0.0
        %2721 = vmatprep.subr.mxu0 0.0
        %2722 = vmatpush2.msra.mxu0 0.0
        %2723 = vmatprep.subr.mxu0 0.0
        %2724 = vmatpush2.msra.mxu0 0.0
        %2725 = vmatprep.subr.mxu0 0.0
        %2726 = vmatpush2.msra.mxu0 0.0
        %2727 = vmatprep.subr.mxu0 0.0
        %2728 = vmatpush2.msra.mxu0 0.0
        %2729 = vmatprep.subr.mxu0 0.0
        %2730 = vmatpush2.msra.mxu0 0.0
        %2731 = vmatprep.subr.mxu0 0.0
        %2732 = vmatpush2.msra.mxu0 0.0
        %2733 = vmatprep.subr.mxu0 0.0
        %2734 = vmatpush2.msra.mxu0 0.0
        %2735 = vmatprep.subr.mxu0 0.0
        %2736 = vmatpush2.msra.mxu0 0.0
        %2737 = vmatprep.subr.mxu0 0.0
        %2738 = vmatpush2.msra.mxu0 0.0
        %2739 = vmatprep.subr.mxu0 0.0
        %2740 = vmatpush2.msra.mxu0 0.0
        %2741 = vmatprep.subr.mxu0 0.0
        %2742 = vmatpush2.msra.mxu0 0.0
        %2743 = vmatprep.mubr.f32.mxu0 0.0
        %2744 = vmatmul.mubr.f32.gmra.mxu0 %v2675
        %v2745 = vpop.f32.mrf.mxu0
        %v2746 = vadd.f32 %v593, %v2745
        %v2747 = vpop.f32.mrf.mxu0
        %2748 = vmatprep.mubr.f32.mxu0 0.0
        %2749 = vmatmul.mubr.f32.gmra.mxu0 %v2677
        %v2750 = vpop.f32.mrf.mxu0
        %v2751 = vadd.f32 %v593, %v2750
        %v2752 = vpop.f32.mrf.mxu0
        %2753 = vdwg.mxu0
        %v2754 = vlaneseq
        %v2755 = vshrl.u32 %v2754, 7
        %v2756 = vsub.s32 1, %v2755
        %v2757 = vrot.slane %v343, %v2756
        %v2759 = vsel %vm722, %v2537, 0
        %v2762 = vsel %vm722, %v2639, 0
        %v2765 = vsel %vm722, %v2644, 0
        %2767 = vmatprep.subr.mxu0 0.0
        %2768 = vmatpush1.xpose.msra.mxu0 0.0
        %2769 = vmatprep.subr.mxu0 0.0
        %2770 = vmatpush1.xpose.msra.mxu0 0.0
        %2771 = vmatprep.subr.mxu0 0.0
        %2772 = vmatpush1.xpose.msra.mxu0 0.0
        %2773 = vmatprep.subr.mxu0 0.0
        %2774 = vmatpush1.xpose.msra.mxu0 0.0
        %2775 = vmatprep.subr.mxu0 0.0
        %2776 = vmatpush1.xpose.msra.mxu0 0.0
        %2777 = vmatprep.subr.mxu0 0.0
        %2778 = vmatpush1.xpose.msra.mxu0 0.0
        %2779 = vmatprep.subr.mxu0 0.0
        %2780 = vmatpush1.xpose.msra.mxu0 0.0
        %2781 = vmatprep.subr.mxu0 0.0
        %2782 = vmatpush1.xpose.msra.mxu0 0.0
        %2783 = vmatprep.subr.mxu0 0.0
        %2784 = vmatpush1.xpose.msra.mxu0 0.0
        %2785 = vmatprep.subr.mxu0 0.0
        %2786 = vmatpush1.xpose.msra.mxu0 0.0
        %2787 = vmatprep.subr.mxu0 0.0
        %2788 = vmatpush1.xpose.msra.mxu0 0.0
        %2789 = vmatprep.subr.mxu0 0.0
        %2790 = vmatpush1.xpose.msra.mxu0 0.0
        %2791 = vmatprep.subr.mxu0 0.0
        %2792 = vmatpush1.xpose.msra.mxu0 0.0
        %2793 = vmatprep.subr.mxu0 0.0
        %2794 = vmatpush1.xpose.msra.mxu0 0.0
        %2795 = vmatprep.subr.mxu0 0.0
        %2796 = vmatpush1.xpose.msra.mxu0 %v2765
        %2797 = vmatprep.subr.mxu0 0.0
        %2798 = vmatpush1.xpose.msra.mxu0 %v2762
        %2799 = vmatprep.subr.mxu0 0.0
        %2800 = vmatpush2.xpose.msra.mxu0 0.0
        %2801 = vmatprep.subr.mxu0 0.0
        %2802 = vmatpush2.xpose.msra.mxu0 0.0
        %2803 = vmatprep.subr.mxu0 0.0
        %2804 = vmatpush2.xpose.msra.mxu0 0.0
        %2805 = vmatprep.subr.mxu0 0.0
        %2806 = vmatpush2.xpose.msra.mxu0 0.0
        %2807 = vmatprep.subr.mxu0 0.0
        %2808 = vmatpush2.xpose.msra.mxu0 0.0
        %2809 = vmatprep.subr.mxu0 0.0
        %2810 = vmatpush2.xpose.msra.mxu0 0.0
        %2811 = vmatprep.subr.mxu0 0.0
        %2812 = vmatpush2.xpose.msra.mxu0 0.0
        %2813 = vmatprep.subr.mxu0 0.0
        %2814 = vmatpush2.xpose.msra.mxu0 0.0
        %2815 = vmatprep.subr.mxu0 0.0
        %2816 = vmatpush2.xpose.msra.mxu0 0.0
        %2817 = vmatprep.subr.mxu0 0.0
        %2818 = vmatpush2.xpose.msra.mxu0 0.0
        %2819 = vmatprep.subr.mxu0 0.0
        %2820 = vmatpush2.xpose.msra.mxu0 0.0
        %2821 = vmatprep.subr.mxu0 0.0
        %2822 = vmatpush2.xpose.msra.mxu0 0.0
        %2823 = vmatprep.subr.mxu0 0.0
        %2824 = vmatpush2.xpose.msra.mxu0 0.0
        %2825 = vmatprep.subr.mxu0 0.0
        %2826 = vmatpush2.xpose.msra.mxu0 0.0
        %2827 = vmatprep.subr.mxu0 0.0
        %2828 = vmatpush2.xpose.msra.mxu0 0.0
        %2829 = vmatprep.subr.mxu0 0.0
        %2830 = vmatpush2.xpose.msra.mxu0 0.0
        %2831 = vmatprep.mubr.f32.mxu0 0.0
        %2832 = vmatmul.mubr.f32.gmra.mxu0 %v2759
        %v2833 = vpop.f32.mrf.mxu0
        %v2834 = vadd.f32 %v2757, %v2833
        %v2835 = vpop.f32.mrf.mxu0
        %2836 = vdwg.mxu0
        %v2837 = vsel %vm802, %v2834, -inf
        %2838 = vmax.xlane.f32.xlu0 %v2837
        %v2839 = vpop.xlane.xlu0 %2838
        %v2840 = vsub.f32 %v2834, %v2839
        %v2841 = vmul.f32 %v2840, 1.442695
        %v2842 = vpow.pop %v2841
        %v2843 = vsel %vm802, %v2842, 0.0
        %2844 = vadd.xlane.f32.xlu0 %v2843
        %v2845 = vpop.xlane.xlu0 %2844
        %v2846 = vrcp.pop %v2845
        %v2847 = vmul.f32 %v2842, %v2846
        %v2849 = vsel %vm814, %v2847, 0
        %2851 = vmatprep.subr.mxu0 0.0
        %2852 = vmatpush1.msra.mxu0 0.0
        %2853 = vmatprep.subr.mxu0 0.0
        %2854 = vmatpush1.msra.mxu0 0.0
        %2855 = vmatprep.subr.mxu0 0.0
        %2856 = vmatpush1.msra.mxu0 0.0
        %2857 = vmatprep.subr.mxu0 0.0
        %2858 = vmatpush1.msra.mxu0 0.0
        %2859 = vmatprep.subr.mxu0 0.0
        %2860 = vmatpush1.msra.mxu0 0.0
        %2861 = vmatprep.subr.mxu0 0.0
        %2862 = vmatpush1.msra.mxu0 0.0
        %2863 = vmatprep.subr.mxu0 0.0
        %2864 = vmatpush1.msra.mxu0 0.0
        %2865 = vmatprep.subr.mxu0 0.0
        %2866 = vmatpush1.msra.mxu0 0.0
        %2867 = vmatprep.subr.mxu0 0.0
        %2868 = vmatpush1.msra.mxu0 0.0
        %2869 = vmatprep.subr.mxu0 0.0
        %2870 = vmatpush1.msra.mxu0 0.0
        %2871 = vmatprep.subr.mxu0 0.0
        %2872 = vmatpush1.msra.mxu0 0.0
        %2873 = vmatprep.subr.mxu0 0.0
        %2874 = vmatpush1.msra.mxu0 0.0
        %2875 = vmatprep.subr.mxu0 0.0
        %2876 = vmatpush1.msra.mxu0 0.0
        %2877 = vmatprep.subr.mxu0 0.0
        %2878 = vmatpush1.msra.mxu0 0.0
        %2879 = vmatprep.subr.mxu0 0.0
        %2880 = vmatpush1.msra.mxu0 %v2751
        %2881 = vmatprep.subr.mxu0 0.0
        %2882 = vmatpush1.msra.mxu0 %v2746
        %2883 = vmatprep.subr.mxu0 0.0
        %2884 = vmatpush2.msra.mxu0 0.0
        %2885 = vmatprep.subr.mxu0 0.0
        %2886 = vmatpush2.msra.mxu0 0.0
        %2887 = vmatprep.subr.mxu0 0.0
        %2888 = vmatpush2.msra.mxu0 0.0
        %2889 = vmatprep.subr.mxu0 0.0
        %2890 = vmatpush2.msra.mxu0 0.0
        %2891 = vmatprep.subr.mxu0 0.0
        %2892 = vmatpush2.msra.mxu0 0.0
        %2893 = vmatprep.subr.mxu0 0.0
        %2894 = vmatpush2.msra.mxu0 0.0
        %2895 = vmatprep.subr.mxu0 0.0
        %2896 = vmatpush2.msra.mxu0 0.0
        %2897 = vmatprep.subr.mxu0 0.0
        %2898 = vmatpush2.msra.mxu0 0.0
        %2899 = vmatprep.subr.mxu0 0.0
        %2900 = vmatpush2.msra.mxu0 0.0
        %2901 = vmatprep.subr.mxu0 0.0
        %2902 = vmatpush2.msra.mxu0 0.0
        %2903 = vmatprep.subr.mxu0 0.0
        %2904 = vmatpush2.msra.mxu0 0.0
        %2905 = vmatprep.subr.mxu0 0.0
        %2906 = vmatpush2.msra.mxu0 0.0
        %2907 = vmatprep.subr.mxu0 0.0
        %2908 = vmatpush2.msra.mxu0 0.0
        %2909 = vmatprep.subr.mxu0 0.0
        %2910 = vmatpush2.msra.mxu0 0.0
        %2911 = vmatprep.subr.mxu0 0.0
        %2912 = vmatpush2.msra.mxu0 0.0
        %2913 = vmatprep.subr.mxu0 0.0
        %2914 = vmatpush2.msra.mxu0 0.0
        %2915 = vmatprep.mubr.f32.mxu0 0.0
        %2916 = vmatmul.mubr.f32.gmra.mxu0 %v2849
        %v2917 = vpop.f32.mrf.mxu0
        %v2918 = vadd.f32 0.0, %v2917
        %v2919 = vpop.f32.mrf.mxu0
        %2920 = vdwg.mxu0
        %2921 = vmatprep.subr.mxu0 0.0
        %2922 = vmatpush1.msra.mxu0 0.0
        %2923 = vmatprep.subr.mxu0 0.0
        %2924 = vmatpush1.msra.mxu0 0.0
        %2925 = vmatprep.subr.mxu0 0.0
        %2926 = vmatpush1.msra.mxu0 0.0
        %2927 = vmatprep.subr.mxu0 0.0
        %2928 = vmatpush1.msra.mxu0 0.0
        %2929 = vmatprep.subr.mxu0 0.0
        %2930 = vmatpush1.msra.mxu0 0.0
        %2931 = vmatprep.subr.mxu0 0.0
        %2932 = vmatpush1.msra.mxu0 0.0
        %2933 = vmatprep.subr.mxu0 0.0
        %2934 = vmatpush1.msra.mxu0 0.0
        %2935 = vmatprep.subr.mxu0 0.0
        %2936 = vmatpush1.msra.mxu0 0.0
        %2937 = vmatprep.subr.mxu0 0.0
        %2938 = vmatpush1.msra.mxu0 0.0
        %2939 = vmatprep.subr.mxu0 0.0
        %2940 = vmatpush1.msra.mxu0 0.0
        %2941 = vmatprep.subr.mxu0 0.0
        %2942 = vmatpush1.msra.mxu0 0.0
        %2943 = vmatprep.subr.mxu0 0.0
        %2944 = vmatpush1.msra.mxu0 0.0
        %2945 = vmatprep.subr.mxu0 0.0
        %2946 = vmatpush1.msra.mxu0 %v893
        %2947 = vmatprep.subr.mxu0 0.0
        %2948 = vmatpush1.msra.mxu0 %v892
        %2949 = vmatprep.subr.mxu0 0.0
        %2950 = vmatpush1.msra.mxu0 %v891
        %2951 = vmatprep.subr.mxu0 0.0
        %2952 = vmatpush1.msra.mxu0 %v890
        %2953 = vmatprep.subr.mxu0 0.0
        %2954 = vmatpush2.msra.mxu0 0.0
        %2955 = vmatprep.subr.mxu0 0.0
        %2956 = vmatpush2.msra.mxu0 0.0
        %2957 = vmatprep.subr.mxu0 0.0
        %2958 = vmatpush2.msra.mxu0 0.0
        %2959 = vmatprep.subr.mxu0 0.0
        %2960 = vmatpush2.msra.mxu0 0.0
        %2961 = vmatprep.subr.mxu0 0.0
        %2962 = vmatpush2.msra.mxu0 0.0
        %2963 = vmatprep.subr.mxu0 0.0
        %2964 = vmatpush2.msra.mxu0 0.0
        %2965 = vmatprep.subr.mxu0 0.0
        %2966 = vmatpush2.msra.mxu0 0.0
        %2967 = vmatprep.subr.mxu0 0.0
        %2968 = vmatpush2.msra.mxu0 0.0
        %2969 = vmatprep.subr.mxu0 0.0
        %2970 = vmatpush2.msra.mxu0 0.0
        %2971 = vmatprep.subr.mxu0 0.0
        %2972 = vmatpush2.msra.mxu0 0.0
        %2973 = vmatprep.subr.mxu0 0.0
        %2974 = vmatpush2.msra.mxu0 0.0
        %2975 = vmatprep.subr.mxu0 0.0
        %2976 = vmatpush2.msra.mxu0 0.0
        %2977 = vmatprep.subr.mxu0 0.0
        %2978 = vmatpush2.msra.mxu0 0.0
        %2979 = vmatprep.subr.mxu0 0.0
        %2980 = vmatpush2.msra.mxu0 0.0
        %2981 = vmatprep.subr.mxu0 0.0
        %2982 = vmatpush2.msra.mxu0 0.0
        %2983 = vmatprep.subr.mxu0 0.0
        %2984 = vmatpush2.msra.mxu0 0.0
        %2985 = vmatprep.mubr.f32.mxu0 0.0
        %2986 = vmatmul.mubr.f32.gmra.mxu0 %v2468
        %v2987 = vpop.f32.mrf.mxu0
        %v2988 = vadd.f32 %v900, %v2987
        %v2989 = vpop.f32.mrf.mxu0
        %2990 = vdwg.mxu0
        %2991 = vmatprep.subr.mxu0 0.0
        %2992 = vmatpush1.msra.mxu0 0.0
        %2993 = vmatprep.subr.mxu0 0.0
        %2994 = vmatpush1.msra.mxu0 0.0
        %2995 = vmatprep.subr.mxu0 0.0
        %2996 = vmatpush1.msra.mxu0 0.0
        %2997 = vmatprep.subr.mxu0 0.0
        %2998 = vmatpush1.msra.mxu0 0.0
        %2999 = vmatprep.subr.mxu0 0.0
        %3000 = vmatpush1.msra.mxu0 0.0
        %3001 = vmatprep.subr.mxu0 0.0
        %3002 = vmatpush1.msra.mxu0 0.0
        %3003 = vmatprep.subr.mxu0 0.0
        %3004 = vmatpush1.msra.mxu0 0.0
        %3005 = vmatprep.subr.mxu0 0.0
        %3006 = vmatpush1.msra.mxu0 0.0
        %3007 = vmatprep.subr.mxu0 0.0
        %3008 = vmatpush1.msra.mxu0 0.0
        %3009 = vmatprep.subr.mxu0 0.0
        %3010 = vmatpush1.msra.mxu0 0.0
        %3011 = vmatprep.subr.mxu0 0.0
        %3012 = vmatpush1.msra.mxu0 0.0
        %3013 = vmatprep.subr.mxu0 0.0
        %3014 = vmatpush1.msra.mxu0 0.0
        %3015 = vmatprep.subr.mxu0 0.0
        %3016 = vmatpush1.msra.mxu0 %v976
        %3017 = vmatprep.subr.mxu0 0.0
        %3018 = vmatpush1.msra.mxu0 %v975
        %3019 = vmatprep.subr.mxu0 0.0
        %3020 = vmatpush1.msra.mxu0 %v974
        %3021 = vmatprep.subr.mxu0 0.0
        %3022 = vmatpush1.msra.mxu0 %v973
        %3023 = vmatprep.subr.mxu0 0.0
        %3024 = vmatpush2.msra.mxu0 0.0
        %3025 = vmatprep.subr.mxu0 0.0
        %3026 = vmatpush2.msra.mxu0 0.0
        %3027 = vmatprep.subr.mxu0 0.0
        %3028 = vmatpush2.msra.mxu0 0.0
        %3029 = vmatprep.subr.mxu0 0.0
        %3030 = vmatpush2.msra.mxu0 0.0
        %3031 = vmatprep.subr.mxu0 0.0
        %3032 = vmatpush2.msra.mxu0 0.0
        %3033 = vmatprep.subr.mxu0 0.0
        %3034 = vmatpush2.msra.mxu0 0.0
        %3035 = vmatprep.subr.mxu0 0.0
        %3036 = vmatpush2.msra.mxu0 0.0
        %3037 = vmatprep.subr.mxu0 0.0
        %3038 = vmatpush2.msra.mxu0 0.0
        %3039 = vmatprep.subr.mxu0 0.0
        %3040 = vmatpush2.msra.mxu0 0.0
        %3041 = vmatprep.subr.mxu0 0.0
        %3042 = vmatpush2.msra.mxu0 0.0
        %3043 = vmatprep.subr.mxu0 0.0
        %3044 = vmatpush2.msra.mxu0 0.0
        %3045 = vmatprep.subr.mxu0 0.0
        %3046 = vmatpush2.msra.mxu0 0.0
        %3047 = vmatprep.subr.mxu0 0.0
        %3048 = vmatpush2.msra.mxu0 0.0
        %3049 = vmatprep.subr.mxu0 0.0
        %3050 = vmatpush2.msra.mxu0 0.0
        %3051 = vmatprep.subr.mxu0 0.0
        %3052 = vmatpush2.msra.mxu0 0.0
        %3053 = vmatprep.subr.mxu0 0.0
        %3054 = vmatpush2.msra.mxu0 0.0
        %3055 = vmatprep.mubr.f32.mxu0 0.0
        %3056 = vmatmul.mubr.f32.gmra.mxu0 %v2568
        %v3057 = vpop.f32.mrf.mxu0
        %v3058 = vadd.f32 %v983, %v3057
        %v3059 = vpop.f32.mrf.mxu0
        %3060 = vmatprep.mubr.f32.mxu0 0.0
        %3061 = vmatmul.mubr.f32.gmra.mxu0 %v2570
        %v3062 = vpop.f32.mrf.mxu0
        %v3063 = vadd.f32 %v983, %v3062
        %v3064 = vpop.f32.mrf.mxu0
        %3065 = vdwg.mxu0
        %3066 = vmatprep.subr.mxu0 0.0
        %3067 = vmatpush1.msra.mxu0 0.0
        %3068 = vmatprep.subr.mxu0 0.0
        %3069 = vmatpush1.msra.mxu0 0.0
        %3070 = vmatprep.subr.mxu0 0.0
        %3071 = vmatpush1.msra.mxu0 0.0
        %3072 = vmatprep.subr.mxu0 0.0
        %3073 = vmatpush1.msra.mxu0 0.0
        %3074 = vmatprep.subr.mxu0 0.0
        %3075 = vmatpush1.msra.mxu0 0.0
        %3076 = vmatprep.subr.mxu0 0.0
        %3077 = vmatpush1.msra.mxu0 0.0
        %3078 = vmatprep.subr.mxu0 0.0
        %3079 = vmatpush1.msra.mxu0 0.0
        %3080 = vmatprep.subr.mxu0 0.0
        %3081 = vmatpush1.msra.mxu0 0.0
        %3082 = vmatprep.subr.mxu0 0.0
        %3083 = vmatpush1.msra.mxu0 0.0
        %3084 = vmatprep.subr.mxu0 0.0
        %3085 = vmatpush1.msra.mxu0 0.0
        %3086 = vmatprep.subr.mxu0 0.0
        %3087 = vmatpush1.msra.mxu0 0.0
        %3088 = vmatprep.subr.mxu0 0.0
        %3089 = vmatpush1.msra.mxu0 0.0
        %3090 = vmatprep.subr.mxu0 0.0
        %3091 = vmatpush1.msra.mxu0 %v1064
        %3092 = vmatprep.subr.mxu0 0.0
        %3093 = vmatpush1.msra.mxu0 %v1063
        %3094 = vmatprep.subr.mxu0 0.0
        %3095 = vmatpush1.msra.mxu0 %v1062
        %3096 = vmatprep.subr.mxu0 0.0
        %3097 = vmatpush1.msra.mxu0 %v1061
        %3098 = vmatprep.subr.mxu0 0.0
        %3099 = vmatpush2.msra.mxu0 0.0
        %3100 = vmatprep.subr.mxu0 0.0
        %3101 = vmatpush2.msra.mxu0 0.0
        %3102 = vmatprep.subr.mxu0 0.0
        %3103 = vmatpush2.msra.mxu0 0.0
        %3104 = vmatprep.subr.mxu0 0.0
        %3105 = vmatpush2.msra.mxu0 0.0
        %3106 = vmatprep.subr.mxu0 0.0
        %3107 = vmatpush2.msra.mxu0 0.0
        %3108 = vmatprep.subr.mxu0 0.0
        %3109 = vmatpush2.msra.mxu0 0.0
        %3110 = vmatprep.subr.mxu0 0.0
        %3111 = vmatpush2.msra.mxu0 0.0
        %3112 = vmatprep.subr.mxu0 0.0
        %3113 = vmatpush2.msra.mxu0 0.0
        %3114 = vmatprep.subr.mxu0 0.0
        %3115 = vmatpush2.msra.mxu0 0.0
        %3116 = vmatprep.subr.mxu0 0.0
        %3117 = vmatpush2.msra.mxu0 0.0
        %3118 = vmatprep.subr.mxu0 0.0
        %3119 = vmatpush2.msra.mxu0 0.0
        %3120 = vmatprep.subr.mxu0 0.0
        %3121 = vmatpush2.msra.mxu0 0.0
        %3122 = vmatprep.subr.mxu0 0.0
        %3123 = vmatpush2.msra.mxu0 0.0
        %3124 = vmatprep.subr.mxu0 0.0
        %3125 = vmatpush2.msra.mxu0 0.0
        %3126 = vmatprep.subr.mxu0 0.0
        %3127 = vmatpush2.msra.mxu0 0.0
        %3128 = vmatprep.subr.mxu0 0.0
        %3129 = vmatpush2.msra.mxu0 0.0
        %3130 = vmatprep.mubr.f32.mxu0 0.0
        %3131 = vmatmul.mubr.f32.gmra.mxu0 %v2675
        %v3132 = vpop.f32.mrf.mxu0
        %v3133 = vadd.f32 %v1071, %v3132
        %v3134 = vpop.f32.mrf.mxu0
        %3135 = vmatprep.mubr.f32.mxu0 0.0
        %3136 = vmatmul.mubr.f32.gmra.mxu0 %v2677
        %v3137 = vpop.f32.mrf.mxu0
        %v3138 = vadd.f32 %v1071, %v3137
        %v3139 = vpop.f32.mrf.mxu0
        %3140 = vdwg.mxu0
        %v3142 = vsel %vm722, %v2988, 0
        %v3145 = vsel %vm722, %v3058, 0
        %v3148 = vsel %vm722, %v3063, 0
        %3150 = vmatprep.subr.mxu0 0.0
        %3151 = vmatpush1.xpose.msra.mxu0 0.0
        %3152 = vmatprep.subr.mxu0 0.0
        %3153 = vmatpush1.xpose.msra.mxu0 0.0
        %3154 = vmatprep.subr.mxu0 0.0
        %3155 = vmatpush1.xpose.msra.mxu0 0.0
        %3156 = vmatprep.subr.mxu0 0.0
        %3157 = vmatpush1.xpose.msra.mxu0 0.0
        %3158 = vmatprep.subr.mxu0 0.0
        %3159 = vmatpush1.xpose.msra.mxu0 0.0
        %3160 = vmatprep.subr.mxu0 0.0
        %3161 = vmatpush1.xpose.msra.mxu0 0.0
        %3162 = vmatprep.subr.mxu0 0.0
        %3163 = vmatpush1.xpose.msra.mxu0 0.0
        %3164 = vmatprep.subr.mxu0 0.0
        %3165 = vmatpush1.xpose.msra.mxu0 0.0
        %3166 = vmatprep.subr.mxu0 0.0
        %3167 = vmatpush1.xpose.msra.mxu0 0.0
        %3168 = vmatprep.subr.mxu0 0.0
        %3169 = vmatpush1.xpose.msra.mxu0 0.0
        %3170 = vmatprep.subr.mxu0 0.0
        %3171 = vmatpush1.xpose.msra.mxu0 0.0
        %3172 = vmatprep.subr.mxu0 0.0
        %3173 = vmatpush1.xpose.msra.mxu0 0.0
        %3174 = vmatprep.subr.mxu0 0.0
        %3175 = vmatpush1.xpose.msra.mxu0 0.0
        %3176 = vmatprep.subr.mxu0 0.0
        %3177 = vmatpush1.xpose.msra.mxu0 0.0
        %3178 = vmatprep.subr.mxu0 0.0
        %3179 = vmatpush1.xpose.msra.mxu0 %v3148
        %3180 = vmatprep.subr.mxu0 0.0
        %3181 = vmatpush1.xpose.msra.mxu0 %v3145
        %3182 = vmatprep.subr.mxu0 0.0
        %3183 = vmatpush2.xpose.msra.mxu0 0.0
        %3184 = vmatprep.subr.mxu0 0.0
        %3185 = vmatpush2.xpose.msra.mxu0 0.0
        %3186 = vmatprep.subr.mxu0 0.0
        %3187 = vmatpush2.xpose.msra.mxu0 0.0
        %3188 = vmatprep.subr.mxu0 0.0
        %3189 = vmatpush2.xpose.msra.mxu0 0.0
        %3190 = vmatprep.subr.mxu0 0.0
        %3191 = vmatpush2.xpose.msra.mxu0 0.0
        %3192 = vmatprep.subr.mxu0 0.0
        %3193 = vmatpush2.xpose.msra.mxu0 0.0
        %3194 = vmatprep.subr.mxu0 0.0
        %3195 = vmatpush2.xpose.msra.mxu0 0.0
        %3196 = vmatprep.subr.mxu0 0.0
        %3197 = vmatpush2.xpose.msra.mxu0 0.0
        %3198 = vmatprep.subr.mxu0 0.0
        %3199 = vmatpush2.xpose.msra.mxu0 0.0
        %3200 = vmatprep.subr.mxu0 0.0
        %3201 = vmatpush2.xpose.msra.mxu0 0.0
        %3202 = vmatprep.subr.mxu0 0.0
        %3203 = vmatpush2.xpose.msra.mxu0 0.0
        %3204 = vmatprep.subr.mxu0 0.0
        %3205 = vmatpush2.xpose.msra.mxu0 0.0
        %3206 = vmatprep.subr.mxu0 0.0
        %3207 = vmatpush2.xpose.msra.mxu0 0.0
        %3208 = vmatprep.subr.mxu0 0.0
        %3209 = vmatpush2.xpose.msra.mxu0 0.0
        %3210 = vmatprep.subr.mxu0 0.0
        %3211 = vmatpush2.xpose.msra.mxu0 0.0
        %3212 = vmatprep.subr.mxu0 0.0
        %3213 = vmatpush2.xpose.msra.mxu0 0.0
        %3214 = vmatprep.mubr.f32.mxu0 0.0
        %3215 = vmatmul.mubr.f32.gmra.mxu0 %v3142
        %v3216 = vpop.f32.mrf.mxu0
        %v3217 = vadd.f32 %v2757, %v3216
        %v3218 = vpop.f32.mrf.mxu0
        %3219 = vdwg.mxu0
        %v3220 = vsel %vm802, %v3217, -inf
        %3221 = vmax.xlane.f32.xlu0 %v3220
        %v3222 = vpop.xlane.xlu0 %3221
        %v3223 = vsub.f32 %v3217, %v3222
        %v3224 = vmul.f32 %v3223, 1.442695
        %v3225 = vpow.pop %v3224
        %v3226 = vsel %vm802, %v3225, 0.0
        %3227 = vadd.xlane.f32.xlu0 %v3226
        %v3228 = vpop.xlane.xlu0 %3227
        %v3229 = vrcp.pop %v3228
        %v3230 = vmul.f32 %v3225, %v3229
        %v3232 = vsel %vm814, %v3230, 0
        %3234 = vmatprep.subr.mxu0 0.0
        %3235 = vmatpush1.msra.mxu0 0.0
        %3236 = vmatprep.subr.mxu0 0.0
        %3237 = vmatpush1.msra.mxu0 0.0
        %3238 = vmatprep.subr.mxu0 0.0
        %3239 = vmatpush1.msra.mxu0 0.0
        %3240 = vmatprep.subr.mxu0 0.0
        %3241 = vmatpush1.msra.mxu0 0.0
        %3242 = vmatprep.subr.mxu0 0.0
        %3243 = vmatpush1.msra.mxu0 0.0
        %3244 = vmatprep.subr.mxu0 0.0
        %3245 = vmatpush1.msra.mxu0 0.0
        %3246 = vmatprep.subr.mxu0 0.0
        %3247 = vmatpush1.msra.mxu0 0.0
        %3248 = vmatprep.subr.mxu0 0.0
        %3249 = vmatpush1.msra.mxu0 0.0
        %3250 = vmatprep.subr.mxu0 0.0
        %3251 = vmatpush1.msra.mxu0 0.0
        %3252 = vmatprep.subr.mxu0 0.0
        %3253 = vmatpush1.msra.mxu0 0.0
        %3254 = vmatprep.subr.mxu0 0.0
        %3255 = vmatpush1.msra.mxu0 0.0
        %3256 = vmatprep.subr.mxu0 0.0
        %3257 = vmatpush1.msra.mxu0 0.0
        %3258 = vmatprep.subr.mxu0 0.0
        %3259 = vmatpush1.msra.mxu0 0.0
        %3260 = vmatprep.subr.mxu0 0.0
        %3261 = vmatpush1.msra.mxu0 0.0
        %3262 = vmatprep.subr.mxu0 0.0
        %3263 = vmatpush1.msra.mxu0 %v3138
        %3264 = vmatprep.subr.mxu0 0.0
        %3265 = vmatpush1.msra.mxu0 %v3133
        %3266 = vmatprep.subr.mxu0 0.0
        %3267 = vmatpush2.msra.mxu0 0.0
        %3268 = vmatprep.subr.mxu0 0.0
        %3269 = vmatpush2.msra.mxu0 0.0
        %3270 = vmatprep.subr.mxu0 0.0
        %3271 = vmatpush2.msra.mxu0 0.0
        %3272 = vmatprep.subr.mxu0 0.0
        %3273 = vmatpush2.msra.mxu0 0.0
        %3274 = vmatprep.subr.mxu0 0.0
        %3275 = vmatpush2.msra.mxu0 0.0
        %3276 = vmatprep.subr.mxu0 0.0
        %3277 = vmatpush2.msra.mxu0 0.0
        %3278 = vmatprep.subr.mxu0 0.0
        %3279 = vmatpush2.msra.mxu0 0.0
        %3280 = vmatprep.subr.mxu0 0.0
        %3281 = vmatpush2.msra.mxu0 0.0
        %3282 = vmatprep.subr.mxu0 0.0
        %3283 = vmatpush2.msra.mxu0 0.0
        %3284 = vmatprep.subr.mxu0 0.0
        %3285 = vmatpush2.msra.mxu0 0.0
        %3286 = vmatprep.subr.mxu0 0.0
        %3287 = vmatpush2.msra.mxu0 0.0
        %3288 = vmatprep.subr.mxu0 0.0
        %3289 = vmatpush2.msra.mxu0 0.0
        %3290 = vmatprep.subr.mxu0 0.0
        %3291 = vmatpush2.msra.mxu0 0.0
        %3292 = vmatprep.subr.mxu0 0.0
        %3293 = vmatpush2.msra.mxu0 0.0
        %3294 = vmatprep.subr.mxu0 0.0
        %3295 = vmatpush2.msra.mxu0 0.0
        %3296 = vmatprep.subr.mxu0 0.0
        %3297 = vmatpush2.msra.mxu0 0.0
        %3298 = vmatprep.mubr.f32.mxu0 0.0
        %3299 = vmatmul.mubr.f32.gmra.mxu0 %v3232
        %v3300 = vpop.f32.mrf.mxu0
        %v3301 = vadd.f32 0.0, %v3300
        %v3302 = vpop.f32.mrf.mxu0
        %3303 = vdwg.mxu0
        %v3305 = vsel %vm722, %v3301, 0
        %3307 = vmatprep.subr.mxu0 0.0
        %3308 = vmatpush1.msra.mxu0 0.0
        %3309 = vmatprep.subr.mxu0 0.0
        %3310 = vmatpush1.msra.mxu0 0.0
        %3311 = vmatprep.subr.mxu0 0.0
        %3312 = vmatpush1.msra.mxu0 0.0
        %3313 = vmatprep.subr.mxu0 0.0
        %3314 = vmatpush1.msra.mxu0 0.0
        %3315 = vmatprep.subr.mxu0 0.0
        %3316 = vmatpush1.msra.mxu0 0.0
        %3317 = vmatprep.subr.mxu0 0.0
        %3318 = vmatpush1.msra.mxu0 0.0
        %3319 = vmatprep.subr.mxu0 0.0
        %3320 = vmatpush1.msra.mxu0 0.0
        %3321 = vmatprep.subr.mxu0 0.0
        %3322 = vmatpush1.msra.mxu0 0.0
        %3323 = vmatprep.subr.mxu0 0.0
        %3324 = vmatpush1.msra.mxu0 0.0
        %3325 = vmatprep.subr.mxu0 0.0
        %3326 = vmatpush1.msra.mxu0 0.0
        %3327 = vmatprep.subr.mxu0 0.0
        %3328 = vmatpush1.msra.mxu0 0.0
        %3329 = vmatprep.subr.mxu0 0.0
        %3330 = vmatpush1.msra.mxu0 0.0
        %3331 = vmatprep.subr.mxu0 0.0
        %3332 = vmatpush1.msra.mxu0 0.0
        %3333 = vmatprep.subr.mxu0 0.0
        %3334 = vmatpush1.msra.mxu0 0.0
        %3335 = vmatprep.subr.mxu0 0.0
        %3336 = vmatpush1.msra.mxu0 0.0
        %3337 = vmatprep.subr.mxu0 0.0
        %3338 = vmatpush1.msra.mxu0 %v1312
        %3339 = vmatprep.subr.mxu0 0.0
        %3340 = vmatpush2.msra.mxu0 0.0
        %3341 = vmatprep.subr.mxu0 0.0
        %3342 = vmatpush2.msra.mxu0 0.0
        %3343 = vmatprep.subr.mxu0 0.0
        %3344 = vmatpush2.msra.mxu0 0.0
        %3345 = vmatprep.subr.mxu0 0.0
        %3346 = vmatpush2.msra.mxu0 0.0
        %3347 = vmatprep.subr.mxu0 0.0
        %3348 = vmatpush2.msra.mxu0 0.0
        %3349 = vmatprep.subr.mxu0 0.0
        %3350 = vmatpush2.msra.mxu0 0.0
        %3351 = vmatprep.subr.mxu0 0.0
        %3352 = vmatpush2.msra.mxu0 0.0
        %3353 = vmatprep.subr.mxu0 0.0
        %3354 = vmatpush2.msra.mxu0 0.0
        %3355 = vmatprep.subr.mxu0 0.0
        %3356 = vmatpush2.msra.mxu0 0.0
        %3357 = vmatprep.subr.mxu0 0.0
        %3358 = vmatpush2.msra.mxu0 0.0
        %3359 = vmatprep.subr.mxu0 0.0
        %3360 = vmatpush2.msra.mxu0 0.0
        %3361 = vmatprep.subr.mxu0 0.0
        %3362 = vmatpush2.msra.mxu0 0.0
        %3363 = vmatprep.subr.mxu0 0.0
        %3364 = vmatpush2.msra.mxu0 0.0
        %3365 = vmatprep.subr.mxu0 0.0
        %3366 = vmatpush2.msra.mxu0 0.0
        %3367 = vmatprep.subr.mxu0 0.0
        %3368 = vmatpush2.msra.mxu0 0.0
        %3369 = vmatprep.subr.mxu0 0.0
        %3370 = vmatpush2.msra.mxu0 0.0
        %3371 = vmatprep.mubr.f32.mxu0 0.0
        %3372 = vmatmul.mubr.f32.gmra.mxu0 %v3305
        %v3373 = vpop.f32.mrf.mxu0
        %v3374 = vadd.f32 0.0, %v3373
        %v3375 = vpop.f32.mrf.mxu0
        %3376 = vdwg.mxu0
        %v3378 = vsel %vm722, %v2918, 0
        %3380 = vmatprep.subr.mxu0 0.0
        %3381 = vmatpush1.msra.mxu0 0.0
        %3382 = vmatprep.subr.mxu0 0.0
        %3383 = vmatpush1.msra.mxu0 0.0
        %3384 = vmatprep.subr.mxu0 0.0
        %3385 = vmatpush1.msra.mxu0 0.0
        %3386 = vmatprep.subr.mxu0 0.0
        %3387 = vmatpush1.msra.mxu0 0.0
        %3388 = vmatprep.subr.mxu0 0.0
        %3389 = vmatpush1.msra.mxu0 0.0
        %3390 = vmatprep.subr.mxu0 0.0
        %3391 = vmatpush1.msra.mxu0 0.0
        %3392 = vmatprep.subr.mxu0 0.0
        %3393 = vmatpush1.msra.mxu0 0.0
        %3394 = vmatprep.subr.mxu0 0.0
        %3395 = vmatpush1.msra.mxu0 0.0
        %3396 = vmatprep.subr.mxu0 0.0
        %3397 = vmatpush1.msra.mxu0 0.0
        %3398 = vmatprep.subr.mxu0 0.0
        %3399 = vmatpush1.msra.mxu0 0.0
        %3400 = vmatprep.subr.mxu0 0.0
        %3401 = vmatpush1.msra.mxu0 0.0
        %3402 = vmatprep.subr.mxu0 0.0
        %3403 = vmatpush1.msra.mxu0 0.0
        %3404 = vmatprep.subr.mxu0 0.0
        %3405 = vmatpush1.msra.mxu0 0.0
        %3406 = vmatprep.subr.mxu0 0.0
        %3407 = vmatpush1.msra.mxu0 0.0
        %3408 = vmatprep.subr.mxu0 0.0
        %3409 = vmatpush1.msra.mxu0 0.0
        %3410 = vmatprep.subr.mxu0 0.0
        %3411 = vmatpush1.msra.mxu0 %v888
        %3412 = vmatprep.subr.mxu0 0.0
        %3413 = vmatpush2.msra.mxu0 0.0
        %3414 = vmatprep.subr.mxu0 0.0
        %3415 = vmatpush2.msra.mxu0 0.0
        %3416 = vmatprep.subr.mxu0 0.0
        %3417 = vmatpush2.msra.mxu0 0.0
        %3418 = vmatprep.subr.mxu0 0.0
        %3419 = vmatpush2.msra.mxu0 0.0
        %3420 = vmatprep.subr.mxu0 0.0
        %3421 = vmatpush2.msra.mxu0 0.0
        %3422 = vmatprep.subr.mxu0 0.0
        %3423 = vmatpush2.msra.mxu0 0.0
        %3424 = vmatprep.subr.mxu0 0.0
        %3425 = vmatpush2.msra.mxu0 0.0
        %3426 = vmatprep.subr.mxu0 0.0
        %3427 = vmatpush2.msra.mxu0 0.0
        %3428 = vmatprep.subr.mxu0 0.0
        %3429 = vmatpush2.msra.mxu0 0.0
        %3430 = vmatprep.subr.mxu0 0.0
        %3431 = vmatpush2.msra.mxu0 0.0
        %3432 = vmatprep.subr.mxu0 0.0
        %3433 = vmatpush2.msra.mxu0 0.0
        %3434 = vmatprep.subr.mxu0 0.0
        %3435 = vmatpush2.msra.mxu0 0.0
        %3436 = vmatprep.subr.mxu0 0.0
        %3437 = vmatpush2.msra.mxu0 0.0
        %3438 = vmatprep.subr.mxu0 0.0
        %3439 = vmatpush2.msra.mxu0 0.0
        %3440 = vmatprep.subr.mxu0 0.0
        %3441 = vmatpush2.msra.mxu0 0.0
        %3442 = vmatprep.subr.mxu0 0.0
        %3443 = vmatpush2.msra.mxu0 0.0
        %3444 = vmatprep.mubr.f32.mxu0 0.0
        %3445 = vmatmul.mubr.f32.gmra.mxu0 %v3378
        %v3446 = vpop.f32.mrf.mxu0
        %v3447 = vadd.f32 %v3374, %v3446
        %v3448 = vpop.f32.mrf.mxu0
        %3449 = vdwg.mxu0
        %3450 = vmatprep.subr.mxu0 0.0
        %3451 = vmatpush1.msra.mxu0 0.0
        %3452 = vmatprep.subr.mxu0 0.0
        %3453 = vmatpush1.msra.mxu0 0.0
        %3454 = vmatprep.subr.mxu0 0.0
        %3455 = vmatpush1.msra.mxu0 0.0
        %3456 = vmatprep.subr.mxu0 0.0
        %3457 = vmatpush1.msra.mxu0 0.0
        %3458 = vmatprep.subr.mxu0 0.0
        %3459 = vmatpush1.msra.mxu0 0.0
        %3460 = vmatprep.subr.mxu0 0.0
        %3461 = vmatpush1.msra.mxu0 0.0
        %3462 = vmatprep.subr.mxu0 0.0
        %3463 = vmatpush1.msra.mxu0 0.0
        %3464 = vmatprep.subr.mxu0 0.0
        %3465 = vmatpush1.msra.mxu0 0.0
        %3466 = vmatprep.subr.mxu0 0.0
        %3467 = vmatpush1.msra.mxu0 0.0
        %3468 = vmatprep.subr.mxu0 0.0
        %3469 = vmatpush1.msra.mxu0 0.0
        %3470 = vmatprep.subr.mxu0 0.0
        %3471 = vmatpush1.msra.mxu0 0.0
        %3472 = vmatprep.subr.mxu0 0.0
        %3473 = vmatpush1.msra.mxu0 0.0
        %3474 = vmatprep.subr.mxu0 0.0
        %3475 = vmatpush1.msra.mxu0 %v1463
        %3476 = vmatprep.subr.mxu0 0.0
        %3477 = vmatpush1.msra.mxu0 %v1462
        %3478 = vmatprep.subr.mxu0 0.0
        %3479 = vmatpush1.msra.mxu0 %v1461
        %3480 = vmatprep.subr.mxu0 0.0
        %3481 = vmatpush1.msra.mxu0 %v1460
        %3482 = vmatprep.subr.mxu0 0.0
        %3483 = vmatpush2.msra.mxu0 0.0
        %3484 = vmatprep.subr.mxu0 0.0
        %3485 = vmatpush2.msra.mxu0 0.0
        %3486 = vmatprep.subr.mxu0 0.0
        %3487 = vmatpush2.msra.mxu0 0.0
        %3488 = vmatprep.subr.mxu0 0.0
        %3489 = vmatpush2.msra.mxu0 0.0
        %3490 = vmatprep.subr.mxu0 0.0
        %3491 = vmatpush2.msra.mxu0 0.0
        %3492 = vmatprep.subr.mxu0 0.0
        %3493 = vmatpush2.msra.mxu0 0.0
        %3494 = vmatprep.subr.mxu0 0.0
        %3495 = vmatpush2.msra.mxu0 0.0
        %3496 = vmatprep.subr.mxu0 0.0
        %3497 = vmatpush2.msra.mxu0 0.0
        %3498 = vmatprep.subr.mxu0 0.0
        %3499 = vmatpush2.msra.mxu0 0.0
        %3500 = vmatprep.subr.mxu0 0.0
        %3501 = vmatpush2.msra.mxu0 0.0
        %3502 = vmatprep.subr.mxu0 0.0
        %3503 = vmatpush2.msra.mxu0 0.0
        %3504 = vmatprep.subr.mxu0 0.0
        %3505 = vmatpush2.msra.mxu0 0.0
        %3506 = vmatprep.subr.mxu0 0.0
        %3507 = vmatpush2.msra.mxu0 0.0
        %3508 = vmatprep.subr.mxu0 0.0
        %3509 = vmatpush2.msra.mxu0 0.0
        %3510 = vmatprep.subr.mxu0 0.0
        %3511 = vmatpush2.msra.mxu0 0.0
        %3512 = vmatprep.subr.mxu0 0.0
        %3513 = vmatpush2.msra.mxu0 0.0
        %3514 = vmatprep.mubr.f32.mxu0 0.0
        %3515 = vmatmul.mubr.f32.gmra.mxu0 %v2468
        %v3516 = vpop.f32.mrf.mxu0
        %v3517 = vadd.f32 %v1470, %v3516
        %v3518 = vpop.f32.mrf.mxu0
        %3519 = vdwg.mxu0
        %3520 = vmatprep.subr.mxu0 0.0
        %3521 = vmatpush1.msra.mxu0 0.0
        %3522 = vmatprep.subr.mxu0 0.0
        %3523 = vmatpush1.msra.mxu0 0.0
        %3524 = vmatprep.subr.mxu0 0.0
        %3525 = vmatpush1.msra.mxu0 0.0
        %3526 = vmatprep.subr.mxu0 0.0
        %3527 = vmatpush1.msra.mxu0 0.0
        %3528 = vmatprep.subr.mxu0 0.0
        %3529 = vmatpush1.msra.mxu0 0.0
        %3530 = vmatprep.subr.mxu0 0.0
        %3531 = vmatpush1.msra.mxu0 0.0
        %3532 = vmatprep.subr.mxu0 0.0
        %3533 = vmatpush1.msra.mxu0 0.0
        %3534 = vmatprep.subr.mxu0 0.0
        %3535 = vmatpush1.msra.mxu0 0.0
        %3536 = vmatprep.subr.mxu0 0.0
        %3537 = vmatpush1.msra.mxu0 0.0
        %3538 = vmatprep.subr.mxu0 0.0
        %3539 = vmatpush1.msra.mxu0 0.0
        %3540 = vmatprep.subr.mxu0 0.0
        %3541 = vmatpush1.msra.mxu0 0.0
        %3542 = vmatprep.subr.mxu0 0.0
        %3543 = vmatpush1.msra.mxu0 0.0
        %3544 = vmatprep.subr.mxu0 0.0
        %3545 = vmatpush1.msra.mxu0 %v1546
        %3546 = vmatprep.subr.mxu0 0.0
        %3547 = vmatpush1.msra.mxu0 %v1545
        %3548 = vmatprep.subr.mxu0 0.0
        %3549 = vmatpush1.msra.mxu0 %v1544
        %3550 = vmatprep.subr.mxu0 0.0
        %3551 = vmatpush1.msra.mxu0 %v1543
        %3552 = vmatprep.subr.mxu0 0.0
        %3553 = vmatpush2.msra.mxu0 0.0
        %3554 = vmatprep.subr.mxu0 0.0
        %3555 = vmatpush2.msra.mxu0 0.0
        %3556 = vmatprep.subr.mxu0 0.0
        %3557 = vmatpush2.msra.mxu0 0.0
        %3558 = vmatprep.subr.mxu0 0.0
        %3559 = vmatpush2.msra.mxu0 0.0
        %3560 = vmatprep.subr.mxu0 0.0
        %3561 = vmatpush2.msra.mxu0 0.0
        %3562 = vmatprep.subr.mxu0 0.0
        %3563 = vmatpush2.msra.mxu0 0.0
        %3564 = vmatprep.subr.mxu0 0.0
        %3565 = vmatpush2.msra.mxu0 0.0
        %3566 = vmatprep.subr.mxu0 0.0
        %3567 = vmatpush2.msra.mxu0 0.0
        %3568 = vmatprep.subr.mxu0 0.0
        %3569 = vmatpush2.msra.mxu0 0.0
        %3570 = vmatprep.subr.mxu0 0.0
        %3571 = vmatpush2.msra.mxu0 0.0
        %3572 = vmatprep.subr.mxu0 0.0
        %3573 = vmatpush2.msra.mxu0 0.0
        %3574 = vmatprep.subr.mxu0 0.0
        %3575 = vmatpush2.msra.mxu0 0.0
        %3576 = vmatprep.subr.mxu0 0.0
        %3577 = vmatpush2.msra.mxu0 0.0
        %3578 = vmatprep.subr.mxu0 0.0
        %3579 = vmatpush2.msra.mxu0 0.0
        %3580 = vmatprep.subr.mxu0 0.0
        %3581 = vmatpush2.msra.mxu0 0.0
        %3582 = vmatprep.subr.mxu0 0.0
        %3583 = vmatpush2.msra.mxu0 0.0
        %3584 = vmatprep.mubr.f32.mxu0 0.0
        %3585 = vmatmul.mubr.f32.gmra.mxu0 %v2568
        %v3586 = vpop.f32.mrf.mxu0
        %v3587 = vadd.f32 %v1553, %v3586
        %v3588 = vpop.f32.mrf.mxu0
        %3589 = vmatprep.mubr.f32.mxu0 0.0
        %3590 = vmatmul.mubr.f32.gmra.mxu0 %v2570
        %v3591 = vpop.f32.mrf.mxu0
        %v3592 = vadd.f32 %v1553, %v3591
        %v3593 = vpop.f32.mrf.mxu0
        %3594 = vdwg.mxu0
        %3595 = vmatprep.subr.mxu0 0.0
        %3596 = vmatpush1.msra.mxu0 0.0
        %3597 = vmatprep.subr.mxu0 0.0
        %3598 = vmatpush1.msra.mxu0 0.0
        %3599 = vmatprep.subr.mxu0 0.0
        %3600 = vmatpush1.msra.mxu0 0.0
        %3601 = vmatprep.subr.mxu0 0.0
        %3602 = vmatpush1.msra.mxu0 0.0
        %3603 = vmatprep.subr.mxu0 0.0
        %3604 = vmatpush1.msra.mxu0 0.0
        %3605 = vmatprep.subr.mxu0 0.0
        %3606 = vmatpush1.msra.mxu0 0.0
        %3607 = vmatprep.subr.mxu0 0.0
        %3608 = vmatpush1.msra.mxu0 0.0
        %3609 = vmatprep.subr.mxu0 0.0
        %3610 = vmatpush1.msra.mxu0 0.0
        %3611 = vmatprep.subr.mxu0 0.0
        %3612 = vmatpush1.msra.mxu0 0.0
        %3613 = vmatprep.subr.mxu0 0.0
        %3614 = vmatpush1.msra.mxu0 0.0
        %3615 = vmatprep.subr.mxu0 0.0
        %3616 = vmatpush1.msra.mxu0 0.0
        %3617 = vmatprep.subr.mxu0 0.0
        %3618 = vmatpush1.msra.mxu0 0.0
        %3619 = vmatprep.subr.mxu0 0.0
        %3620 = vmatpush1.msra.mxu0 %v1634
        %3621 = vmatprep.subr.mxu0 0.0
        %3622 = vmatpush1.msra.mxu0 %v1633
        %3623 = vmatprep.subr.mxu0 0.0
        %3624 = vmatpush1.msra.mxu0 %v1632
        %3625 = vmatprep.subr.mxu0 0.0
        %3626 = vmatpush1.msra.mxu0 %v1631
        %3627 = vmatprep.subr.mxu0 0.0
        %3628 = vmatpush2.msra.mxu0 0.0
        %3629 = vmatprep.subr.mxu0 0.0
        %3630 = vmatpush2.msra.mxu0 0.0
        %3631 = vmatprep.subr.mxu0 0.0
        %3632 = vmatpush2.msra.mxu0 0.0
        %3633 = vmatprep.subr.mxu0 0.0
        %3634 = vmatpush2.msra.mxu0 0.0
        %3635 = vmatprep.subr.mxu0 0.0
        %3636 = vmatpush2.msra.mxu0 0.0
        %3637 = vmatprep.subr.mxu0 0.0
        %3638 = vmatpush2.msra.mxu0 0.0
        %3639 = vmatprep.subr.mxu0 0.0
        %3640 = vmatpush2.msra.mxu0 0.0
        %3641 = vmatprep.subr.mxu0 0.0
        %3642 = vmatpush2.msra.mxu0 0.0
        %3643 = vmatprep.subr.mxu0 0.0
        %3644 = vmatpush2.msra.mxu0 0.0
        %3645 = vmatprep.subr.mxu0 0.0
        %3646 = vmatpush2.msra.mxu0 0.0
        %3647 = vmatprep.subr.mxu0 0.0
        %3648 = vmatpush2.msra.mxu0 0.0
        %3649 = vmatprep.subr.mxu0 0.0
        %3650 = vmatpush2.msra.mxu0 0.0
        %3651 = vmatprep.subr.mxu0 0.0
        %3652 = vmatpush2.msra.mxu0 0.0
        %3653 = vmatprep.subr.mxu0 0.0
        %3654 = vmatpush2.msra.mxu0 0.0
        %3655 = vmatprep.subr.mxu0 0.0
        %3656 = vmatpush2.msra.mxu0 0.0
        %3657 = vmatprep.subr.mxu0 0.0
        %3658 = vmatpush2.msra.mxu0 0.0
        %3659 = vmatprep.mubr.f32.mxu0 0.0
        %3660 = vmatmul.mubr.f32.gmra.mxu0 %v2675
        %v3661 = vpop.f32.mrf.mxu0
        %v3662 = vadd.f32 %v1641, %v3661
        %v3663 = vpop.f32.mrf.mxu0
        %3664 = vmatprep.mubr.f32.mxu0 0.0
        %3665 = vmatmul.mubr.f32.gmra.mxu0 %v2677
        %v3666 = vpop.f32.mrf.mxu0
        %v3667 = vadd.f32 %v1641, %v3666
        %v3668 = vpop.f32.mrf.mxu0
        %3669 = vdwg.mxu0
        %v3671 = vsel %vm722, %v3517, 0
        %v3674 = vsel %vm722, %v3587, 0
        %v3677 = vsel %vm722, %v3592, 0
        %3679 = vmatprep.subr.mxu0 0.0
        %3680 = vmatpush1.xpose.msra.mxu0 0.0
        %3681 = vmatprep.subr.mxu0 0.0
        %3682 = vmatpush1.xpose.msra.mxu0 0.0
        %3683 = vmatprep.subr.mxu0 0.0
        %3684 = vmatpush1.xpose.msra.mxu0 0.0
        %3685 = vmatprep.subr.mxu0 0.0
        %3686 = vmatpush1.xpose.msra.mxu0 0.0
        %3687 = vmatprep.subr.mxu0 0.0
        %3688 = vmatpush1.xpose.msra.mxu0 0.0
        %3689 = vmatprep.subr.mxu0 0.0
        %3690 = vmatpush1.xpose.msra.mxu0 0.0
        %3691 = vmatprep.subr.mxu0 0.0
        %3692 = vmatpush1.xpose.msra.mxu0 0.0
        %3693 = vmatprep.subr.mxu0 0.0
        %3694 = vmatpush1.xpose.msra.mxu0 0.0
        %3695 = vmatprep.subr.mxu0 0.0
        %3696 = vmatpush1.xpose.msra.mxu0 0.0
        %3697 = vmatprep.subr.mxu0 0.0
        %3698 = vmatpush1.xpose.msra.mxu0 0.0
        %3699 = vmatprep.subr.mxu0 0.0
        %3700 = vmatpush1.xpose.msra.mxu0 0.0
        %3701 = vmatprep.subr.mxu0 0.0
        %3702 = vmatpush1.xpose.msra.mxu0 0.0
        %3703 = vmatprep.subr.mxu0 0.0
        %3704 = vmatpush1.xpose.msra.mxu0 0.0
        %3705 = vmatprep.subr.mxu0 0.0
        %3706 = vmatpush1.xpose.msra.mxu0 0.0
        %3707 = vmatprep.subr.mxu0 0.0
        %3708 = vmatpush1.xpose.msra.mxu0 %v3677
        %3709 = vmatprep.subr.mxu0 0.0
        %3710 = vmatpush1.xpose.msra.mxu0 %v3674
        %3711 = vmatprep.subr.mxu0 0.0
        %3712 = vmatpush2.xpose.msra.mxu0 0.0
        %3713 = vmatprep.subr.mxu0 0.0
        %3714 = vmatpush2.xpose.msra.mxu0 0.0
        %3715 = vmatprep.subr.mxu0 0.0
        %3716 = vmatpush2.xpose.msra.mxu0 0.0
        %3717 = vmatprep.subr.mxu0 0.0
        %3718 = vmatpush2.xpose.msra.mxu0 0.0
        %3719 = vmatprep.subr.mxu0 0.0
        %3720 = vmatpush2.xpose.msra.mxu0 0.0
        %3721 = vmatprep.subr.mxu0 0.0
        %3722 = vmatpush2.xpose.msra.mxu0 0.0
        %3723 = vmatprep.subr.mxu0 0.0
        %3724 = vmatpush2.xpose.msra.mxu0 0.0
        %3725 = vmatprep.subr.mxu0 0.0
        %3726 = vmatpush2.xpose.msra.mxu0 0.0
        %3727 = vmatprep.subr.mxu0 0.0
        %3728 = vmatpush2.xpose.msra.mxu0 0.0
        %3729 = vmatprep.subr.mxu0 0.0
        %3730 = vmatpush2.xpose.msra.mxu0 0.0
        %3731 = vmatprep.subr.mxu0 0.0
        %3732 = vmatpush2.xpose.msra.mxu0 0.0
        %3733 = vmatprep.subr.mxu0 0.0
        %3734 = vmatpush2.xpose.msra.mxu0 0.0
        %3735 = vmatprep.subr.mxu0 0.0
        %3736 = vmatpush2.xpose.msra.mxu0 0.0
        %3737 = vmatprep.subr.mxu0 0.0
        %3738 = vmatpush2.xpose.msra.mxu0 0.0
        %3739 = vmatprep.subr.mxu0 0.0
        %3740 = vmatpush2.xpose.msra.mxu0 0.0
        %3741 = vmatprep.subr.mxu0 0.0
        %3742 = vmatpush2.xpose.msra.mxu0 0.0
        %3743 = vmatprep.mubr.f32.mxu0 0.0
        %3744 = vmatmul.mubr.f32.gmra.mxu0 %v3671
        %v3745 = vpop.f32.mrf.mxu0
        %v3746 = vadd.f32 %v2757, %v3745
        %v3747 = vpop.f32.mrf.mxu0
        %3748 = vdwg.mxu0
        %v3749 = vsel %vm802, %v3746, -inf
        %3750 = vmax.xlane.f32.xlu0 %v3749
        %v3751 = vpop.xlane.xlu0 %3750
        %v3752 = vsub.f32 %v3746, %v3751
        %v3753 = vmul.f32 %v3752, 1.442695
        %v3754 = vpow.pop %v3753
        %v3755 = vsel %vm802, %v3754, 0.0
        %3756 = vadd.xlane.f32.xlu0 %v3755
        %v3757 = vpop.xlane.xlu0 %3756
        %v3758 = vrcp.pop %v3757
        %v3759 = vmul.f32 %v3754, %v3758
        %v3761 = vsel %vm814, %v3759, 0
        %3763 = vmatprep.subr.mxu0 0.0
        %3764 = vmatpush1.msra.mxu0 0.0
        %3765 = vmatprep.subr.mxu0 0.0
        %3766 = vmatpush1.msra.mxu0 0.0
        %3767 = vmatprep.subr.mxu0 0.0
        %3768 = vmatpush1.msra.mxu0 0.0
        %3769 = vmatprep.subr.mxu0 0.0
        %3770 = vmatpush1.msra.mxu0 0.0
        %3771 = vmatprep.subr.mxu0 0.0
        %3772 = vmatpush1.msra.mxu0 0.0
        %3773 = vmatprep.subr.mxu0 0.0
        %3774 = vmatpush1.msra.mxu0 0.0
        %3775 = vmatprep.subr.mxu0 0.0
        %3776 = vmatpush1.msra.mxu0 0.0
        %3777 = vmatprep.subr.mxu0 0.0
        %3778 = vmatpush1.msra.mxu0 0.0
        %3779 = vmatprep.subr.mxu0 0.0
        %3780 = vmatpush1.msra.mxu0 0.0
        %3781 = vmatprep.subr.mxu0 0.0
        %3782 = vmatpush1.msra.mxu0 0.0
        %3783 = vmatprep.subr.mxu0 0.0
        %3784 = vmatpush1.msra.mxu0 0.0
        %3785 = vmatprep.subr.mxu0 0.0
        %3786 = vmatpush1.msra.mxu0 0.0
        %3787 = vmatprep.subr.mxu0 0.0
        %3788 = vmatpush1.msra.mxu0 0.0
        %3789 = vmatprep.subr.mxu0 0.0
        %3790 = vmatpush1.msra.mxu0 0.0
        %3791 = vmatprep.subr.mxu0 0.0
        %3792 = vmatpush1.msra.mxu0 %v3667
        %3793 = vmatprep.subr.mxu0 0.0
        %3794 = vmatpush1.msra.mxu0 %v3662
        %3795 = vmatprep.subr.mxu0 0.0
        %3796 = vmatpush2.msra.mxu0 0.0
        %3797 = vmatprep.subr.mxu0 0.0
        %3798 = vmatpush2.msra.mxu0 0.0
        %3799 = vmatprep.subr.mxu0 0.0
        %3800 = vmatpush2.msra.mxu0 0.0
        %3801 = vmatprep.subr.mxu0 0.0
        %3802 = vmatpush2.msra.mxu0 0.0
        %3803 = vmatprep.subr.mxu0 0.0
        %3804 = vmatpush2.msra.mxu0 0.0
        %3805 = vmatprep.subr.mxu0 0.0
        %3806 = vmatpush2.msra.mxu0 0.0
        %3807 = vmatprep.subr.mxu0 0.0
        %3808 = vmatpush2.msra.mxu0 0.0
        %3809 = vmatprep.subr.mxu0 0.0
        %3810 = vmatpush2.msra.mxu0 0.0
        %3811 = vmatprep.subr.mxu0 0.0
        %3812 = vmatpush2.msra.mxu0 0.0
        %3813 = vmatprep.subr.mxu0 0.0
        %3814 = vmatpush2.msra.mxu0 0.0
        %3815 = vmatprep.subr.mxu0 0.0
        %3816 = vmatpush2.msra.mxu0 0.0
        %3817 = vmatprep.subr.mxu0 0.0
        %3818 = vmatpush2.msra.mxu0 0.0
        %3819 = vmatprep.subr.mxu0 0.0
        %3820 = vmatpush2.msra.mxu0 0.0
        %3821 = vmatprep.subr.mxu0 0.0
        %3822 = vmatpush2.msra.mxu0 0.0
        %3823 = vmatprep.subr.mxu0 0.0
        %3824 = vmatpush2.msra.mxu0 0.0
        %3825 = vmatprep.subr.mxu0 0.0
        %3826 = vmatpush2.msra.mxu0 0.0
        %3827 = vmatprep.mubr.f32.mxu0 0.0
        %3828 = vmatmul.mubr.f32.gmra.mxu0 %v3761
        %v3829 = vpop.f32.mrf.mxu0
        %v3830 = vadd.f32 0.0, %v3829
        %v3831 = vpop.f32.mrf.mxu0
        %3832 = vdwg.mxu0
        %v3834 = vsel %vm722, %v3830, 0
        %3836 = vmatprep.subr.mxu0 0.0
        %3837 = vmatpush1.msra.mxu0 0.0
        %3838 = vmatprep.subr.mxu0 0.0
        %3839 = vmatpush1.msra.mxu0 0.0
        %3840 = vmatprep.subr.mxu0 0.0
        %3841 = vmatpush1.msra.mxu0 0.0
        %3842 = vmatprep.subr.mxu0 0.0
        %3843 = vmatpush1.msra.mxu0 0.0
        %3844 = vmatprep.subr.mxu0 0.0
        %3845 = vmatpush1.msra.mxu0 0.0
        %3846 = vmatprep.subr.mxu0 0.0
        %3847 = vmatpush1.msra.mxu0 0.0
        %3848 = vmatprep.subr.mxu0 0.0
        %3849 = vmatpush1.msra.mxu0 0.0
        %3850 = vmatprep.subr.mxu0 0.0
        %3851 = vmatpush1.msra.mxu0 0.0
        %3852 = vmatprep.subr.mxu0 0.0
        %3853 = vmatpush1.msra.mxu0 0.0
        %3854 = vmatprep.subr.mxu0 0.0
        %3855 = vmatpush1.msra.mxu0 0.0
        %3856 = vmatprep.subr.mxu0 0.0
        %3857 = vmatpush1.msra.mxu0 0.0
        %3858 = vmatprep.subr.mxu0 0.0
        %3859 = vmatpush1.msra.mxu0 0.0
        %3860 = vmatprep.subr.mxu0 0.0
        %3861 = vmatpush1.msra.mxu0 0.0
        %3862 = vmatprep.subr.mxu0 0.0
        %3863 = vmatpush1.msra.mxu0 0.0
        %3864 = vmatprep.subr.mxu0 0.0
        %3865 = vmatpush1.msra.mxu0 0.0
        %3866 = vmatprep.subr.mxu0 0.0
        %3867 = vmatpush1.msra.mxu0 %v1882
        %3868 = vmatprep.subr.mxu0 0.0
        %3869 = vmatpush2.msra.mxu0 0.0
        %3870 = vmatprep.subr.mxu0 0.0
        %3871 = vmatpush2.msra.mxu0 0.0
        %3872 = vmatprep.subr.mxu0 0.0
        %3873 = vmatpush2.msra.mxu0 0.0
        %3874 = vmatprep.subr.mxu0 0.0
        %3875 = vmatpush2.msra.mxu0 0.0
        %3876 = vmatprep.subr.mxu0 0.0
        %3877 = vmatpush2.msra.mxu0 0.0
        %3878 = vmatprep.subr.mxu0 0.0
        %3879 = vmatpush2.msra.mxu0 0.0
        %3880 = vmatprep.subr.mxu0 0.0
        %3881 = vmatpush2.msra.mxu0 0.0
        %3882 = vmatprep.subr.mxu0 0.0
        %3883 = vmatpush2.msra.mxu0 0.0
        %3884 = vmatprep.subr.mxu0 0.0
        %3885 = vmatpush2.msra.mxu0 0.0
        %3886 = vmatprep.subr.mxu0 0.0
        %3887 = vmatpush2.msra.mxu0 0.0
        %3888 = vmatprep.subr.mxu0 0.0
        %3889 = vmatpush2.msra.mxu0 0.0
        %3890 = vmatprep.subr.mxu0 0.0
        %3891 = vmatpush2.msra.mxu0 0.0
        %3892 = vmatprep.subr.mxu0 0.0
        %3893 = vmatpush2.msra.mxu0 0.0
        %3894 = vmatprep.subr.mxu0 0.0
        %3895 = vmatpush2.msra.mxu0 0.0
        %3896 = vmatprep.subr.mxu0 0.0
        %3897 = vmatpush2.msra.mxu0 0.0
        %3898 = vmatprep.subr.mxu0 0.0
        %3899 = vmatpush2.msra.mxu0 0.0
        %3900 = vmatprep.mubr.f32.mxu0 0.0
        %3901 = vmatmul.mubr.f32.gmra.mxu0 %v3834
        %v3902 = vpop.f32.mrf.mxu0
        %v3903 = vadd.f32 0.0, %v3902
        %v3904 = vpop.f32.mrf.mxu0
        %3905 = vdwg.mxu0
        %v3906 = vadd.f32 %v3447, %v3903
        %3907 = vmatprep.subr.mxu0 0.0
        %3908 = vmatpush1.msra.mxu0 0.0
        %3909 = vmatprep.subr.mxu0 0.0
        %3910 = vmatpush1.msra.mxu0 0.0
        %3911 = vmatprep.subr.mxu0 0.0
        %3912 = vmatpush1.msra.mxu0 0.0
        %3913 = vmatprep.subr.mxu0 0.0
        %3914 = vmatpush1.msra.mxu0 0.0
        %3915 = vmatprep.subr.mxu0 0.0
        %3916 = vmatpush1.msra.mxu0 0.0
        %3917 = vmatprep.subr.mxu0 0.0
        %3918 = vmatpush1.msra.mxu0 0.0
        %3919 = vmatprep.subr.mxu0 0.0
        %3920 = vmatpush1.msra.mxu0 0.0
        %3921 = vmatprep.subr.mxu0 0.0
        %3922 = vmatpush1.msra.mxu0 0.0
        %3923 = vmatprep.subr.mxu0 0.0
        %3924 = vmatpush1.msra.mxu0 0.0
        %3925 = vmatprep.subr.mxu0 0.0
        %3926 = vmatpush1.msra.mxu0 0.0
        %3927 = vmatprep.subr.mxu0 0.0
        %3928 = vmatpush1.msra.mxu0 0.0
        %3929 = vmatprep.subr.mxu0 0.0
        %3930 = vmatpush1.msra.mxu0 0.0
        %3931 = vmatprep.subr.mxu0 0.0
        %3932 = vmatpush1.msra.mxu0 %v1961
        %3933 = vmatprep.subr.mxu0 0.0
        %3934 = vmatpush1.msra.mxu0 %v1960
        %3935 = vmatprep.subr.mxu0 0.0
        %3936 = vmatpush1.msra.mxu0 %v1959
        %3937 = vmatprep.subr.mxu0 0.0
        %3938 = vmatpush1.msra.mxu0 %v1958
        %3939 = vmatprep.subr.mxu0 0.0
        %3940 = vmatpush2.msra.mxu0 0.0
        %3941 = vmatprep.subr.mxu0 0.0
        %3942 = vmatpush2.msra.mxu0 0.0
        %3943 = vmatprep.subr.mxu0 0.0
        %3944 = vmatpush2.msra.mxu0 0.0
        %3945 = vmatprep.subr.mxu0 0.0
        %3946 = vmatpush2.msra.mxu0 0.0
        %3947 = vmatprep.subr.mxu0 0.0
        %3948 = vmatpush2.msra.mxu0 0.0
        %3949 = vmatprep.subr.mxu0 0.0
        %3950 = vmatpush2.msra.mxu0 0.0
        %3951 = vmatprep.subr.mxu0 0.0
        %3952 = vmatpush2.msra.mxu0 0.0
        %3953 = vmatprep.subr.mxu0 0.0
        %3954 = vmatpush2.msra.mxu0 0.0
        %3955 = vmatprep.subr.mxu0 0.0
        %3956 = vmatpush2.msra.mxu0 0.0
        %3957 = vmatprep.subr.mxu0 0.0
        %3958 = vmatpush2.msra.mxu0 0.0
        %3959 = vmatprep.subr.mxu0 0.0
        %3960 = vmatpush2.msra.mxu0 0.0
        %3961 = vmatprep.subr.mxu0 0.0
        %3962 = vmatpush2.msra.mxu0 0.0
        %3963 = vmatprep.subr.mxu0 0.0
        %3964 = vmatpush2.msra.mxu0 0.0
        %3965 = vmatprep.subr.mxu0 0.0
        %3966 = vmatpush2.msra.mxu0 0.0
        %3967 = vmatprep.subr.mxu0 0.0
        %3968 = vmatpush2.msra.mxu0 0.0
        %3969 = vmatprep.subr.mxu0 0.0
        %3970 = vmatpush2.msra.mxu0 0.0
        %3971 = vmatprep.mubr.f32.mxu0 0.0
        %3972 = vmatmul.mubr.f32.gmra.mxu0 %v2468
        %v3973 = vpop.f32.mrf.mxu0
        %v3974 = vadd.f32 %v1968, %v3973
        %v3975 = vpop.f32.mrf.mxu0
        %3976 = vdwg.mxu0
        %3977 = vmatprep.subr.mxu0 0.0
        %3978 = vmatpush1.msra.mxu0 0.0
        %3979 = vmatprep.subr.mxu0 0.0
        %3980 = vmatpush1.msra.mxu0 0.0
        %3981 = vmatprep.subr.mxu0 0.0
        %3982 = vmatpush1.msra.mxu0 0.0
        %3983 = vmatprep.subr.mxu0 0.0
        %3984 = vmatpush1.msra.mxu0 0.0
        %3985 = vmatprep.subr.mxu0 0.0
        %3986 = vmatpush1.msra.mxu0 0.0
        %3987 = vmatprep.subr.mxu0 0.0
        %3988 = vmatpush1.msra.mxu0 0.0
        %3989 = vmatprep.subr.mxu0 0.0
        %3990 = vmatpush1.msra.mxu0 0.0
        %3991 = vmatprep.subr.mxu0 0.0
        %3992 = vmatpush1.msra.mxu0 0.0
        %3993 = vmatprep.subr.mxu0 0.0
        %3994 = vmatpush1.msra.mxu0 0.0
        %3995 = vmatprep.subr.mxu0 0.0
        %3996 = vmatpush1.msra.mxu0 0.0
        %3997 = vmatprep.subr.mxu0 0.0
        %3998 = vmatpush1.msra.mxu0 0.0
        %3999 = vmatprep.subr.mxu0 0.0
        %4000 = vmatpush1.msra.mxu0 0.0
        %4001 = vmatprep.subr.mxu0 0.0
        %4002 = vmatpush1.msra.mxu0 %v2044
        %4003 = vmatprep.subr.mxu0 0.0
        %4004 = vmatpush1.msra.mxu0 %v2043
        %4005 = vmatprep.subr.mxu0 0.0
        %4006 = vmatpush1.msra.mxu0 %v2042
        %4007 = vmatprep.subr.mxu0 0.0
        %4008 = vmatpush1.msra.mxu0 %v2041
        %4009 = vmatprep.subr.mxu0 0.0
        %4010 = vmatpush2.msra.mxu0 0.0
        %4011 = vmatprep.subr.mxu0 0.0
        %4012 = vmatpush2.msra.mxu0 0.0
        %4013 = vmatprep.subr.mxu0 0.0
        %4014 = vmatpush2.msra.mxu0 0.0
        %4015 = vmatprep.subr.mxu0 0.0
        %4016 = vmatpush2.msra.mxu0 0.0
        %4017 = vmatprep.subr.mxu0 0.0
        %4018 = vmatpush2.msra.mxu0 0.0
        %4019 = vmatprep.subr.mxu0 0.0
        %4020 = vmatpush2.msra.mxu0 0.0
        %4021 = vmatprep.subr.mxu0 0.0
        %4022 = vmatpush2.msra.mxu0 0.0
        %4023 = vmatprep.subr.mxu0 0.0
        %4024 = vmatpush2.msra.mxu0 0.0
        %4025 = vmatprep.subr.mxu0 0.0
        %4026 = vmatpush2.msra.mxu0 0.0
        %4027 = vmatprep.subr.mxu0 0.0
        %4028 = vmatpush2.msra.mxu0 0.0
        %4029 = vmatprep.subr.mxu0 0.0
        %4030 = vmatpush2.msra.mxu0 0.0
        %4031 = vmatprep.subr.mxu0 0.0
        %4032 = vmatpush2.msra.mxu0 0.0
        %4033 = vmatprep.subr.mxu0 0.0
        %4034 = vmatpush2.msra.mxu0 0.0
        %4035 = vmatprep.subr.mxu0 0.0
        %4036 = vmatpush2.msra.mxu0 0.0
        %4037 = vmatprep.subr.mxu0 0.0
        %4038 = vmatpush2.msra.mxu0 0.0
        %4039 = vmatprep.subr.mxu0 0.0
        %4040 = vmatpush2.msra.mxu0 0.0
        %4041 = vmatprep.mubr.f32.mxu0 0.0
        %4042 = vmatmul.mubr.f32.gmra.mxu0 %v2568
        %v4043 = vpop.f32.mrf.mxu0
        %v4044 = vadd.f32 %v2051, %v4043
        %v4045 = vpop.f32.mrf.mxu0
        %4046 = vmatprep.mubr.f32.mxu0 0.0
        %4047 = vmatmul.mubr.f32.gmra.mxu0 %v2570
        %v4048 = vpop.f32.mrf.mxu0
        %v4049 = vadd.f32 %v2051, %v4048
        %v4050 = vpop.f32.mrf.mxu0
        %4051 = vdwg.mxu0
        %4052 = vmatprep.subr.mxu0 0.0
        %4053 = vmatpush1.msra.mxu0 0.0
        %4054 = vmatprep.subr.mxu0 0.0
        %4055 = vmatpush1.msra.mxu0 0.0
        %4056 = vmatprep.subr.mxu0 0.0
        %4057 = vmatpush1.msra.mxu0 0.0
        %4058 = vmatprep.subr.mxu0 0.0
        %4059 = vmatpush1.msra.mxu0 0.0
        %4060 = vmatprep.subr.mxu0 0.0
        %4061 = vmatpush1.msra.mxu0 0.0
        %4062 = vmatprep.subr.mxu0 0.0
        %4063 = vmatpush1.msra.mxu0 0.0
        %4064 = vmatprep.subr.mxu0 0.0
        %4065 = vmatpush1.msra.mxu0 0.0
        %4066 = vmatprep.subr.mxu0 0.0
        %4067 = vmatpush1.msra.mxu0 0.0
        %4068 = vmatprep.subr.mxu0 0.0
        %4069 = vmatpush1.msra.mxu0 0.0
        %4070 = vmatprep.subr.mxu0 0.0
        %4071 = vmatpush1.msra.mxu0 0.0
        %4072 = vmatprep.subr.mxu0 0.0
        %4073 = vmatpush1.msra.mxu0 0.0
        %4074 = vmatprep.subr.mxu0 0.0
        %4075 = vmatpush1.msra.mxu0 0.0
        %4076 = vmatprep.subr.mxu0 0.0
        %4077 = vmatpush1.msra.mxu0 %v2132
        %4078 = vmatprep.subr.mxu0 0.0
        %4079 = vmatpush1.msra.mxu0 %v2131
        %4080 = vmatprep.subr.mxu0 0.0
        %4081 = vmatpush1.msra.mxu0 %v2130
        %4082 = vmatprep.subr.mxu0 0.0
        %4083 = vmatpush1.msra.mxu0 %v2129
        %4084 = vmatprep.subr.mxu0 0.0
        %4085 = vmatpush2.msra.mxu0 0.0
        %4086 = vmatprep.subr.mxu0 0.0
        %4087 = vmatpush2.msra.mxu0 0.0
        %4088 = vmatprep.subr.mxu0 0.0
        %4089 = vmatpush2.msra.mxu0 0.0
        %4090 = vmatprep.subr.mxu0 0.0
        %4091 = vmatpush2.msra.mxu0 0.0
        %4092 = vmatprep.subr.mxu0 0.0
        %4093 = vmatpush2.msra.mxu0 0.0
        %4094 = vmatprep.subr.mxu0 0.0
        %4095 = vmatpush2.msra.mxu0 0.0
        %4096 = vmatprep.subr.mxu0 0.0
        %4097 = vmatpush2.msra.mxu0 0.0
        %4098 = vmatprep.subr.mxu0 0.0
        %4099 = vmatpush2.msra.mxu0 0.0
        %4100 = vmatprep.subr.mxu0 0.0
        %4101 = vmatpush2.msra.mxu0 0.0
        %4102 = vmatprep.subr.mxu0 0.0
        %4103 = vmatpush2.msra.mxu0 0.0
        %4104 = vmatprep.subr.mxu0 0.0
        %4105 = vmatpush2.msra.mxu0 0.0
        %4106 = vmatprep.subr.mxu0 0.0
        %4107 = vmatpush2.msra.mxu0 0.0
        %4108 = vmatprep.subr.mxu0 0.0
        %4109 = vmatpush2.msra.mxu0 0.0
        %4110 = vmatprep.subr.mxu0 0.0
        %4111 = vmatpush2.msra.mxu0 0.0
        %4112 = vmatprep.subr.mxu0 0.0
        %4113 = vmatpush2.msra.mxu0 0.0
        %4114 = vmatprep.subr.mxu0 0.0
        %4115 = vmatpush2.msra.mxu0 0.0
        %4116 = vmatprep.mubr.f32.mxu0 0.0
        %4117 = vmatmul.mubr.f32.gmra.mxu0 %v2675
        %v4118 = vpop.f32.mrf.mxu0
        %v4119 = vadd.f32 %v2139, %v4118
        %v4120 = vpop.f32.mrf.mxu0
        %4121 = vmatprep.mubr.f32.mxu0 0.0
        %4122 = vmatmul.mubr.f32.gmra.mxu0 %v2677
        %v4123 = vpop.f32.mrf.mxu0
        %v4124 = vadd.f32 %v2139, %v4123
        %v4125 = vpop.f32.mrf.mxu0
        %4126 = vdwg.mxu0
        %v4128 = vsel %vm722, %v3974, 0
        %v4131 = vsel %vm722, %v4044, 0
        %v4134 = vsel %vm722, %v4049, 0
        %4136 = vmatprep.subr.mxu0 0.0
        %4137 = vmatpush1.xpose.msra.mxu0 0.0
        %4138 = vmatprep.subr.mxu0 0.0
        %4139 = vmatpush1.xpose.msra.mxu0 0.0
        %4140 = vmatprep.subr.mxu0 0.0
        %4141 = vmatpush1.xpose.msra.mxu0 0.0
        %4142 = vmatprep.subr.mxu0 0.0
        %4143 = vmatpush1.xpose.msra.mxu0 0.0
        %4144 = vmatprep.subr.mxu0 0.0
        %4145 = vmatpush1.xpose.msra.mxu0 0.0
        %4146 = vmatprep.subr.mxu0 0.0
        %4147 = vmatpush1.xpose.msra.mxu0 0.0
        %4148 = vmatprep.subr.mxu0 0.0
        %4149 = vmatpush1.xpose.msra.mxu0 0.0
        %4150 = vmatprep.subr.mxu0 0.0
        %4151 = vmatpush1.xpose.msra.mxu0 0.0
        %4152 = vmatprep.subr.mxu0 0.0
        %4153 = vmatpush1.xpose.msra.mxu0 0.0
        %4154 = vmatprep.subr.mxu0 0.0
        %4155 = vmatpush1.xpose.msra.mxu0 0.0
        %4156 = vmatprep.subr.mxu0 0.0
        %4157 = vmatpush1.xpose.msra.mxu0 0.0
        %4158 = vmatprep.subr.mxu0 0.0
        %4159 = vmatpush1.xpose.msra.mxu0 0.0
        %4160 = vmatprep.subr.mxu0 0.0
        %4161 = vmatpush1.xpose.msra.mxu0 0.0
        %4162 = vmatprep.subr.mxu0 0.0
        %4163 = vmatpush1.xpose.msra.mxu0 0.0
        %4164 = vmatprep.subr.mxu0 0.0
        %4165 = vmatpush1.xpose.msra.mxu0 %v4134
        %4166 = vmatprep.subr.mxu0 0.0
        %4167 = vmatpush1.xpose.msra.mxu0 %v4131
        %4168 = vmatprep.subr.mxu0 0.0
        %4169 = vmatpush2.xpose.msra.mxu0 0.0
        %4170 = vmatprep.subr.mxu0 0.0
        %4171 = vmatpush2.xpose.msra.mxu0 0.0
        %4172 = vmatprep.subr.mxu0 0.0
        %4173 = vmatpush2.xpose.msra.mxu0 0.0
        %4174 = vmatprep.subr.mxu0 0.0
        %4175 = vmatpush2.xpose.msra.mxu0 0.0
        %4176 = vmatprep.subr.mxu0 0.0
        %4177 = vmatpush2.xpose.msra.mxu0 0.0
        %4178 = vmatprep.subr.mxu0 0.0
        %4179 = vmatpush2.xpose.msra.mxu0 0.0
        %4180 = vmatprep.subr.mxu0 0.0
        %4181 = vmatpush2.xpose.msra.mxu0 0.0
        %4182 = vmatprep.subr.mxu0 0.0
        %4183 = vmatpush2.xpose.msra.mxu0 0.0
        %4184 = vmatprep.subr.mxu0 0.0
        %4185 = vmatpush2.xpose.msra.mxu0 0.0
        %4186 = vmatprep.subr.mxu0 0.0
        %4187 = vmatpush2.xpose.msra.mxu0 0.0
        %4188 = vmatprep.subr.mxu0 0.0
        %4189 = vmatpush2.xpose.msra.mxu0 0.0
        %4190 = vmatprep.subr.mxu0 0.0
        %4191 = vmatpush2.xpose.msra.mxu0 0.0
        %4192 = vmatprep.subr.mxu0 0.0
        %4193 = vmatpush2.xpose.msra.mxu0 0.0
        %4194 = vmatprep.subr.mxu0 0.0
        %4195 = vmatpush2.xpose.msra.mxu0 0.0
        %4196 = vmatprep.subr.mxu0 0.0
        %4197 = vmatpush2.xpose.msra.mxu0 0.0
        %4198 = vmatprep.subr.mxu0 0.0
        %4199 = vmatpush2.xpose.msra.mxu0 0.0
        %4200 = vmatprep.mubr.f32.mxu0 0.0
        %4201 = vmatmul.mubr.f32.gmra.mxu0 %v4128
        %v4202 = vpop.f32.mrf.mxu0
        %v4203 = vadd.f32 %v2757, %v4202
        %v4204 = vpop.f32.mrf.mxu0
        %4205 = vdwg.mxu0
        %v4206 = vsel %vm802, %v4203, -inf
        %4207 = vmax.xlane.f32.xlu0 %v4206
        %v4208 = vpop.xlane.xlu0 %4207
        %v4209 = vsub.f32 %v4203, %v4208
        %v4210 = vmul.f32 %v4209, 1.442695
        %v4211 = vpow.pop %v4210
        %v4212 = vsel %vm802, %v4211, 0.0
        %4213 = vadd.xlane.f32.xlu0 %v4212
        %v4214 = vpop.xlane.xlu0 %4213
        %v4215 = vrcp.pop %v4214
        %v4216 = vmul.f32 %v4211, %v4215
        %v4218 = vsel %vm814, %v4216, 0
        %4220 = vmatprep.subr.mxu0 0.0
        %4221 = vmatpush1.msra.mxu0 0.0
        %4222 = vmatprep.subr.mxu0 0.0
        %4223 = vmatpush1.msra.mxu0 0.0
        %4224 = vmatprep.subr.mxu0 0.0
        %4225 = vmatpush1.msra.mxu0 0.0
        %4226 = vmatprep.subr.mxu0 0.0
        %4227 = vmatpush1.msra.mxu0 0.0
        %4228 = vmatprep.subr.mxu0 0.0
        %4229 = vmatpush1.msra.mxu0 0.0
        %4230 = vmatprep.subr.mxu0 0.0
        %4231 = vmatpush1.msra.mxu0 0.0
        %4232 = vmatprep.subr.mxu0 0.0
        %4233 = vmatpush1.msra.mxu0 0.0
        %4234 = vmatprep.subr.mxu0 0.0
        %4235 = vmatpush1.msra.mxu0 0.0
        %4236 = vmatprep.subr.mxu0 0.0
        %4237 = vmatpush1.msra.mxu0 0.0
        %4238 = vmatprep.subr.mxu0 0.0
        %4239 = vmatpush1.msra.mxu0 0.0
        %4240 = vmatprep.subr.mxu0 0.0
        %4241 = vmatpush1.msra.mxu0 0.0
        %4242 = vmatprep.subr.mxu0 0.0
        %4243 = vmatpush1.msra.mxu0 0.0
        %4244 = vmatprep.subr.mxu0 0.0
        %4245 = vmatpush1.msra.mxu0 0.0
        %4246 = vmatprep.subr.mxu0 0.0
        %4247 = vmatpush1.msra.mxu0 0.0
        %4248 = vmatprep.subr.mxu0 0.0
        %4249 = vmatpush1.msra.mxu0 %v4124
        %4250 = vmatprep.subr.mxu0 0.0
        %4251 = vmatpush1.msra.mxu0 %v4119
        %4252 = vmatprep.subr.mxu0 0.0
        %4253 = vmatpush2.msra.mxu0 0.0
        %4254 = vmatprep.subr.mxu0 0.0
        %4255 = vmatpush2.msra.mxu0 0.0
        %4256 = vmatprep.subr.mxu0 0.0
        %4257 = vmatpush2.msra.mxu0 0.0
        %4258 = vmatprep.subr.mxu0 0.0
        %4259 = vmatpush2.msra.mxu0 0.0
        %4260 = vmatprep.subr.mxu0 0.0
        %4261 = vmatpush2.msra.mxu0 0.0
        %4262 = vmatprep.subr.mxu0 0.0
        %4263 = vmatpush2.msra.mxu0 0.0
        %4264 = vmatprep.subr.mxu0 0.0
        %4265 = vmatpush2.msra.mxu0 0.0
        %4266 = vmatprep.subr.mxu0 0.0
        %4267 = vmatpush2.msra.mxu0 0.0
        %4268 = vmatprep.subr.mxu0 0.0
        %4269 = vmatpush2.msra.mxu0 0.0
        %4270 = vmatprep.subr.mxu0 0.0
        %4271 = vmatpush2.msra.mxu0 0.0
        %4272 = vmatprep.subr.mxu0 0.0
        %4273 = vmatpush2.msra.mxu0 0.0
        %4274 = vmatprep.subr.mxu0 0.0
        %4275 = vmatpush2.msra.mxu0 0.0
        %4276 = vmatprep.subr.mxu0 0.0
        %4277 = vmatpush2.msra.mxu0 0.0
        %4278 = vmatprep.subr.mxu0 0.0
        %4279 = vmatpush2.msra.mxu0 0.0
        %4280 = vmatprep.subr.mxu0 0.0
        %4281 = vmatpush2.msra.mxu0 0.0
        %4282 = vmatprep.subr.mxu0 0.0
        %4283 = vmatpush2.msra.mxu0 0.0
        %4284 = vmatprep.mubr.f32.mxu0 0.0
        %4285 = vmatmul.mubr.f32.gmra.mxu0 %v4218
        %v4286 = vpop.f32.mrf.mxu0
        %v4287 = vadd.f32 0.0, %v4286
        %v4288 = vpop.f32.mrf.mxu0
        %4289 = vdwg.mxu0
        %v4291 = vsel %vm722, %v4287, 0
        %4293 = vmatprep.subr.mxu0 0.0
        %4294 = vmatpush1.msra.mxu0 0.0
        %4295 = vmatprep.subr.mxu0 0.0
        %4296 = vmatpush1.msra.mxu0 0.0
        %4297 = vmatprep.subr.mxu0 0.0
        %4298 = vmatpush1.msra.mxu0 0.0
        %4299 = vmatprep.subr.mxu0 0.0
        %4300 = vmatpush1.msra.mxu0 0.0
        %4301 = vmatprep.subr.mxu0 0.0
        %4302 = vmatpush1.msra.mxu0 0.0
        %4303 = vmatprep.subr.mxu0 0.0
        %4304 = vmatpush1.msra.mxu0 0.0
        %4305 = vmatprep.subr.mxu0 0.0
        %4306 = vmatpush1.msra.mxu0 0.0
        %4307 = vmatprep.subr.mxu0 0.0
        %4308 = vmatpush1.msra.mxu0 0.0
        %4309 = vmatprep.subr.mxu0 0.0
        %4310 = vmatpush1.msra.mxu0 0.0
        %4311 = vmatprep.subr.mxu0 0.0
        %4312 = vmatpush1.msra.mxu0 0.0
        %4313 = vmatprep.subr.mxu0 0.0
        %4314 = vmatpush1.msra.mxu0 0.0
        %4315 = vmatprep.subr.mxu0 0.0
        %4316 = vmatpush1.msra.mxu0 0.0
        %4317 = vmatprep.subr.mxu0 0.0
        %4318 = vmatpush1.msra.mxu0 0.0
        %4319 = vmatprep.subr.mxu0 0.0
        %4320 = vmatpush1.msra.mxu0 0.0
        %4321 = vmatprep.subr.mxu0 0.0
        %4322 = vmatpush1.msra.mxu0 0.0
        %4323 = vmatprep.subr.mxu0 0.0
        %4324 = vmatpush1.msra.mxu0 %v2380
        %4325 = vmatprep.subr.mxu0 0.0
        %4326 = vmatpush2.msra.mxu0 0.0
        %4327 = vmatprep.subr.mxu0 0.0
        %4328 = vmatpush2.msra.mxu0 0.0
        %4329 = vmatprep.subr.mxu0 0.0
        %4330 = vmatpush2.msra.mxu0 0.0
        %4331 = vmatprep.subr.mxu0 0.0
        %4332 = vmatpush2.msra.mxu0 0.0
        %4333 = vmatprep.subr.mxu0 0.0
        %4334 = vmatpush2.msra.mxu0 0.0
        %4335 = vmatprep.subr.mxu0 0.0
        %4336 = vmatpush2.msra.mxu0 0.0
        %4337 = vmatprep.subr.mxu0 0.0
        %4338 = vmatpush2.msra.mxu0 0.0
        %4339 = vmatprep.subr.mxu0 0.0
        %4340 = vmatpush2.msra.mxu0 0.0
        %4341 = vmatprep.subr.mxu0 0.0
        %4342 = vmatpush2.msra.mxu0 0.0
        %4343 = vmatprep.subr.mxu0 0.0
        %4344 = vmatpush2.msra.mxu0 0.0
        %4345 = vmatprep.subr.mxu0 0.0
        %4346 = vmatpush2.msra.mxu0 0.0
        %4347 = vmatprep.subr.mxu0 0.0
        %4348 = vmatpush2.msra.mxu0 0.0
        %4349 = vmatprep.subr.mxu0 0.0
        %4350 = vmatpush2.msra.mxu0 0.0
        %4351 = vmatprep.subr.mxu0 0.0
        %4352 = vmatpush2.msra.mxu0 0.0
        %4353 = vmatprep.subr.mxu0 0.0
        %4354 = vmatpush2.msra.mxu0 0.0
        %4355 = vmatprep.subr.mxu0 0.0
        %4356 = vmatpush2.msra.mxu0 0.0
        %4357 = vmatprep.mubr.f32.mxu0 0.0
        %4358 = vmatmul.mubr.f32.gmra.mxu0 %v4291
        %v4359 = vpop.f32.mrf.mxu0
        %v4360 = vadd.f32 0.0, %v4359
        %v4361 = vpop.f32.mrf.mxu0
        %4362 = vdwg.mxu0
        %v4363 = vadd.f32 %v3906, %v4360
        %v4364 = vadd.f32 %v4363, %v2459
        %v4367 = vunpack.c.l.s4 1966171168
        %v4368 = vunpack.c.0.s8 %v4367
        %v4369 = vlaneseq
        %v4370 = vshrl.u32 %v4369, 7
        %v4371 = vsub.s32 %v4368, %v4370
        %v4372 = vrot.slane %v2461, %v4371
        %v4373 = vcombine.high %v4372, %v4372
        %v4375 = vunpack.c.l.s4 1966171168
        %v4376 = vunpack.c.0.s8 %v4375
        %v4377 = vlaneseq
        %v4378 = vshrl.u32 %v4377, 7
        %v4379 = vsub.s32 %v4376, %v4378
        %v4380 = vrot.slane %v4372, %v4379
        %v4382 = vunpack.c.l.s4 1966171168
        %v4383 = vunpack.c.0.s8 %v4382
        %v4384 = vlaneseq
        %v4385 = vshrl.u32 %v4384, 7
        %v4386 = vsub.s32 %v4383, %v4385
        %v4387 = vrot.slane %v4373, %v4386
        %v4388 = vcombine.high %v4380, %v4380
        %v4389 = vcombine.high %v4387, %v4387
        %v4396 = vunpack.c.l.s4 1966171168
        %v4397 = vunpack.c.0.s8 %v4396
        %v4398 = vlaneseq
        %v4399 = vshrl.u32 %v4398, 7
        %v4400 = vsub.s32 %v4397, %v4399
        %v4401 = vrot.slane %v4364, %v4400
        %v4402 = vcombine.high %v4401, %v4401
        %v4404 = vunpack.c.l.s4 1966171168
        %v4405 = vunpack.c.0.s8 %v4404
        %v4406 = vlaneseq
        %v4407 = vshrl.u32 %v4406, 7
        %v4408 = vsub.s32 %v4405, %v4407
        %v4409 = vrot.slane %v4401, %v4408
        %v4411 = vunpack.c.l.s4 1966171168
        %v4412 = vunpack.c.0.s8 %v4411
        %v4413 = vlaneseq
        %v4414 = vshrl.u32 %v4413, 7
        %v4415 = vsub.s32 %v4412, %v4414
        %v4416 = vrot.slane %v4402, %v4415
        %v4417 = vcombine.high %v4409, %v4409
        %v4418 = vcombine.high %v4416, %v4416
        %v4419 = vlaneseq
        %v4420 = vshrl.u32 %v4419, 7
        %v4421 = vsub.s32 0, %v4420
        %v4422 = vrot.slane %v4409, %v4421
        %v4423 = vlaneseq
        %v4424 = vshrl.u32 %v4423, 7
        %v4425 = vsub.s32 0, %v4424
        %v4426 = vrot.slane %v4416, %v4425
        %v4427 = vlaneseq
        %v4428 = vshrl.u32 %v4427, 7
        %v4429 = vsub.s32 0, %v4428
        %v4430 = vrot.slane %v4417, %v4429
        %v4431 = vlaneseq
        %v4432 = vshrl.u32 %v4431, 7
        %v4433 = vsub.s32 0, %v4432
        %v4434 = vrot.slane %v4418, %v4433
        %vm4439 = vcmask 1040384
        %v4440 = vsel %vm4439, %v4380, %v4422
        %v4441 = vsel %vm4439, %v4387, %v4426
        %v4442 = vsel %vm4439, %v4388, %v4430
        %v4443 = vsel %vm4439, %v4389, %v4434
        %vm4444 = vcmask 254976
        %4445 = vst.msk [vmem:[%s299] sm:$0x3] %vm4444, %v4440
        %4446 = vst.msk [vmem:[%s299 + $0x2] sm:$0x3] %vm4444, %v4441
        %4447 = vst.msk [vmem:[%s299 + $0x4] sm:$0x3] %vm4444, %v4442
        %4448 = vst.msk [vmem:[%s299 + $0x6] sm:$0x3] %vm4444, %v4443
        %s4449 = sand.u32 %s203, 1
        %s4450 = scalar_lea.sflag [#allocation3], %s4449
        %s4451 = sand.u32 %s203, 1
        %s4452 = smul.addr %s4451, 8
        %s4453 = scalar_lea.vmem [#allocation2], %s4452
        // Predicated region
        $region53: #{tpu_custom_call.1} parent=51 // pred_check
          %p4454 = pneg %p213
        $region54: #{tpu_custom_call.1} parent=51 // pred_check_branch
          %4456 = sbr.rel (%p4454) target = $region56
        $region55: #{tpu_custom_call.1} parent=51 // pred_region
          %s4457 = smul.u32 4, %s22
          %s4459 = ssub.s32 128, 128
          %4460 = vsyncadd %s4450, %s4459
          %s4461 = smul.addr %s4457, 32
          %s4462 = scalar_lea.hbm %s8, %s4461
          %s4463 = sshll.u32 %s4453, 4
          %s4464 = int_to_ptr.vmem [resolvable:$true] %s4463
          %4469 = dma.vmem_to_hbm [thread:$0]  %s4464, 128, %s4462, %s4450, 32, 32, 2
        $region56: #{tpu_custom_call.1} parent=51 // pred_fallthru
          _
      $region52: #{tpu_custom_call.1} parent=5 // pred_fallthru
        _
      %p4470 = scmp.le.s32.totalorder 2, %s17
      // Predicated region
      $region57: #{tpu_custom_call.1} parent=5 // pred_check
        %p4471 = pneg %p4470
      $region58: #{tpu_custom_call.1} parent=5 // pred_check_branch
        %4473 = sbr.rel (%p4471) target = $region60
      $region59: #{tpu_custom_call.1} parent=5 // pred_region
        %s4474 = ssub.s32 %s17, 2
        // Predicated region
        $region61: #{tpu_custom_call.1} parent=59 // pred_check
          %p4475 = pneg %p219
        $region62: #{tpu_custom_call.1} parent=59 // pred_check_branch
          %4477 = sbr.rel (%p4475) target = $region64
        $region63: #{tpu_custom_call.1} parent=59 // pred_region
          %s4478 = sand.u32 %s204, 1
          %s4479 = scalar_lea.sflag [#allocation3], %s4478
          %s4480 = sand.u32 %s204, 1
          %s4481 = smul.addr %s4480, 8
          %s4482 = scalar_lea.vmem [#allocation2], %s4481
          %4483 = dma.done %s4479, 128
        $region64: #{tpu_custom_call.1} parent=59 // pred_fallthru
          _
      $region60: #{tpu_custom_call.1} parent=5 // pred_fallthru
        _
    $region6: #{tpu_custom_call.1} parent=1 // loop_footer
      %s21 = sadd.s32 1, %s17
    $region7: #{tpu_custom_call.1} parent=1 // loop_footer_branch
      %16 = sbr.rel target = $region3
    $region8: #{tpu_custom_call.1} parent=1 // loop_exit
      _
    %4484 = vsyncpa [#allocation3], 1
    %s4485 = scalar_lea.sflag [#allocation3], 1
    %4486 = vsyncpa %s4485, 1

</llo_original>
